<compile_context>
chip_gen: v7x
topology: tpu7x:2x2x1
jax: 0.10.0
libtpu: 0.0.40
codegen_flags: <defaults>
</compile_context>

<pallas_src>
import functools

import jax
import jax.numpy as jnp
from jax.experimental import pallas as pl
from jax.experimental.pallas import tpu as pltpu


# ----------------------------------------------------------------------------
# Fused forward kernel
# ----------------------------------------------------------------------------
def _layer_norm(y, gamma, beta, eps=1e-5):
    mu = jnp.mean(y, axis=-1, keepdims=True)
    var = jnp.mean(jnp.square(y - mu), axis=-1, keepdims=True)
    return (y - mu) * jax.lax.rsqrt(var + eps) * gamma + beta


def fused_forward_kernel(num_ref, emb_ref,
                         proj_wt_ref, proj_b_ref,
                         wq_ref, wk_ref, wv_ref, bq_ref, bk_ref, bv_ref,
                         wo_ref, bo_ref, g1_ref, be1_ref,
                         w1_ref, b1_ref, w2_ref, b2_ref, g2_ref, be2_ref,
                         out_wt_ref, out_b_ref, out_ref, *, num_heads):
    # num_ref : (bb, S, F)      emb_ref : (bb, S, D)
    # stacked per-layer weights: (L, ...) pre-transposed to (in, out)
    # out_ref : (bb, T)
    bb, S, F = num_ref.shape
    D = emb_ref.shape[-1]
    L = wq_ref.shape[0]
    H = num_heads
    hd = D // H
    N = bb * S
    scale = 1.0 / float(hd) ** 0.5

    # ---- numerical projection + product-embedding add (fused, no own launch) ----
    numf = num_ref[...].reshape(N, F)
    x = (jnp.dot(numf, proj_wt_ref[...], preferred_element_type=jnp.float32)
         + proj_b_ref[...] + emb_ref[...].reshape(N, D))                  # (N, D)

    # ---- encoder layers (static unrolled loop; all weights VMEM-resident) ----
    for l in range(L):
        # separate Q/K/V projections on the batch-flattened activation
        q = jnp.dot(x, wq_ref[l], preferred_element_type=jnp.float32) + bq_ref[l]
        k = jnp.dot(x, wk_ref[l], preferred_element_type=jnp.float32) + bk_ref[l]
        v = jnp.dot(x, wv_ref[l], preferred_element_type=jnp.float32) + bv_ref[l]
        wo_l = wo_ref[l]                                                  # (D, D)

        # per-head attention; concat eliminated by accumulating through Wo rows
        attn = jnp.zeros((N, D), jnp.float32)
        for h in range(H):
            lo = h * hd
            qh = q[:, lo:lo + hd].reshape(bb, S, hd)
            kh = k[:, lo:lo + hd].reshape(bb, S, hd)
            vh = v[:, lo:lo + hd].reshape(bb, S, hd)
            s = jnp.einsum("bqd,bkd->bqk", qh, kh,
                           preferred_element_type=jnp.float32) * scale    # (bb,S,S)
            s = s - jnp.max(s, axis=-1, keepdims=True)
            p = jnp.exp(s)
            p = p * pl.reciprocal(jnp.sum(p, axis=-1, keepdims=True), approx=True)
            ctx = jnp.einsum("bqk,bkd->bqd", p, vh,
                             preferred_element_type=jnp.float32).reshape(N, hd)
            attn = attn + jnp.dot(ctx, wo_l[lo:lo + hd, :],
                                  preferred_element_type=jnp.float32)
        attn = attn + bo_ref[l]

        # residual + LayerNorm 1 (post-norm, PyTorch default)
        x = _layer_norm(x + attn, g1_ref[l], be1_ref[l])

        # feed-forward (ReLU)
        h1 = jnp.maximum(
            jnp.dot(x, w1_ref[l], preferred_element_type=jnp.float32) + b1_ref[l],
            0.0)
        h2 = jnp.dot(h1, w2_ref[l], preferred_element_type=jnp.float32) + b2_ref[l]

        # residual + LayerNorm 2
        x = _layer_norm(x + h2, g2_ref[l], be2_ref[l])

    # ---- permute + AdaptiveAvgPool1d(1) == mean over seq; dropout = identity ----
    pooled = jnp.mean(x.reshape(bb, S, D), axis=1)                        # (bb, D)
    out_ref[...] = (jnp.dot(pooled, out_wt_ref[...],
                            preferred_element_type=jnp.float32) + out_b_ref[...])


# ----------------------------------------------------------------------------
# pallas_call wrapper (single fused launch)
# ----------------------------------------------------------------------------
_WEIGHT_ORDER = ("proj_wt", "proj_b", "wq", "wk", "wv", "bq", "bk", "bv",
                 "wo", "bo", "g1", "be1", "w1", "b1", "w2", "b2", "g2", "be2",
                 "out_wt", "out_b")


def transformer_forward(prep, numerical_input, product_input, *, num_heads,
                        batch_block=None):
    B, S, F = numerical_input.shape
    D = prep["proj_wt"].shape[1]
    T = prep["out_wt"].shape[1]

    # TODO(synk): embedding gather stays in plain JAX glue (simple gather).
    emb = jnp.take(prep["embedding"], product_input, axis=0)              # (B, S, D)

    # Whole batch per grid step (grid=(1,)) at these tiny sizes; a smaller
    # batch_block re-enables a "parallel" batch axis for v7x's 2 TensorCores.
    bb = B if batch_block is None else batch_block
    grid = (pl.cdiv(B, bb),)

    def batch_spec(shape):
        nd = len(shape)
        return pl.BlockSpec((bb,) + tuple(shape[1:]),
                            lambda i, _nd=nd: (i,) + (0,) * (_nd - 1))

    def full_spec(arr):
        nd = arr.ndim
        return pl.BlockSpec(arr.shape, lambda i, _nd=nd: (0,) * _nd)

    weights = [prep[n] for n in _WEIGHT_ORDER]
    kern = functools.partial(fused_forward_kernel, num_heads=num_heads)

    return pl.pallas_call(
        kern,
        out_shape=jax.ShapeDtypeStruct((B, T), jnp.float32),
        grid=grid,
        in_specs=[batch_spec((B, S, F)), batch_spec((B, S, D))]
                 + [full_spec(w) for w in weights],
        out_specs=batch_spec((B, T)),
        compiler_params=pltpu.CompilerParams(dimension_semantics=("parallel",)),
    )(numerical_input, emb, *weights)


# ----------------------------------------------------------------------------
# Parameter construction (PyTorch layout) + host-side prep (transpose & stack)
# ----------------------------------------------------------------------------
def init_params(key, *, num_features, d_model, ff_dim, num_layers,
                num_products, target_size):
    def nrm(k, shape, scale=0.02):
        return (scale * jax.random.normal(k, shape)).astype(jnp.float32)

    keys = iter(jax.random.split(key, 8 + 8 * num_layers))
    params = {
        "embedding": nrm(next(keys), (num_products, d_model)),
        "proj_w": nrm(next(keys), (d_model, num_features)),   # (out, in) PyTorch
        "proj_b": nrm(next(keys), (d_model,)),
        "out_w": nrm(next(keys), (target_size, d_model)),
        "out_b": nrm(next(keys), (target_size,)),
        "layers": [],
    }
    for _ in range(num_layers):
        params["layers"].append({
            "in_proj_w": nrm(next(keys), (3 * d_model, d_model)),
            "in_proj_b": nrm(next(keys), (3 * d_model,)),
            "out_proj_w": nrm(next(keys), (d_model, d_model)),
            "out_proj_b": nrm(next(keys), (d_model,)),
            "ln1_g": jnp.ones((d_model,), jnp.float32),
            "ln1_b": jnp.zeros((d_model,), jnp.float32),
            "lin1_w": nrm(next(keys), (ff_dim, d_model)),
            "lin1_b": nrm(next(keys), (ff_dim,)),
            "lin2_w": nrm(next(keys), (d_model, ff_dim)),
            "lin2_b": nrm(next(keys), (d_model,)),
            "ln2_g": jnp.ones((d_model,), jnp.float32),
            "ln2_b": jnp.zeros((d_model,), jnp.float32),
        })
    return params


def prepare_params(params):
    """Pre-transpose weights to (in, out) and stack per-layer tensors along L."""
    D = params["proj_w"].shape[0]
    layers = params["layers"]

    def stack(fn):
        return jnp.stack([fn(lp) for lp in layers], axis=0)

    prep = {
        "embedding": params["embedding"],
        "proj_wt": params["proj_w"].T,                        # (F, D)
        "proj_b": params["proj_b"].reshape(1, -1),            # (1, D)
        "out_wt": params["out_w"].T,                          # (D, T)
        "out_b": params["out_b"].reshape(1, -1),              # (1, T)
        "wq": stack(lambda lp: lp["in_proj_w"][0 * D:1 * D].T),     # (L, D, D)
        "wk": stack(lambda lp: lp["in_proj_w"][1 * D:2 * D].T),
        "wv": stack(lambda lp: lp["in_proj_w"][2 * D:3 * D].T),
        "bq": stack(lambda lp: lp["in_proj_b"][0 * D:1 * D].reshape(1, D)),
        "bk": stack(lambda lp: lp["in_proj_b"][1 * D:2 * D].reshape(1, D)),
        "bv": stack(lambda lp: lp["in_proj_b"][2 * D:3 * D].reshape(1, D)),
        "wo": stack(lambda lp: lp["out_proj_w"].T),                 # (L, D, D)
        "bo": stack(lambda lp: lp["out_proj_b"].reshape(1, D)),
        "g1": stack(lambda lp: lp["ln1_g"].reshape(1, D)),
        "be1": stack(lambda lp: lp["ln1_b"].reshape(1, D)),
        "w1": stack(lambda lp: lp["lin1_w"].T),                     # (L, D, FF)
        "b1": stack(lambda lp: lp["lin1_b"].reshape(1, -1)),        # (L, 1, FF)
        "w2": stack(lambda lp: lp["lin2_w"].T),                     # (L, FF, D)
        "b2": stack(lambda lp: lp["lin2_b"].reshape(1, D)),
        "g2": stack(lambda lp: lp["ln2_g"].reshape(1, D)),
        "be2": stack(lambda lp: lp["ln2_b"].reshape(1, D)),
    }
    return prep


# ----------------------------------------------------------------------------
if __name__ == "__main__":
    # Small hyper-params consistent with the module's __init__.
    seq_length = 8
    num_features = 4
    num_heads = 4
    num_layers = 2
    d_model = 32
    ff_dim = 64
    target_size = 3
    num_products = 10
    batch = 2

    key = jax.random.PRNGKey(0)
    k_par, k_num, k_prod = jax.random.split(key, 3)

    params = init_params(
        k_par, num_features=num_features, d_model=d_model, ff_dim=ff_dim,
        num_layers=num_layers, num_products=num_products,
        target_size=target_size)
    prep = prepare_params(params)

    numerical_input = jax.random.normal(
        k_num, (batch, seq_length, num_features), dtype=jnp.float32)
    product_input = jax.random.randint(
        k_prod, (batch, seq_length), 0, num_products, dtype=jnp.int32)

    out = transformer_forward(prep, numerical_input, product_input,
                              num_heads=num_heads)
    out = jax.block_until_ready(out)
    assert out.shape == (batch, target_size)
    assert bool(jnp.all(jnp.isfinite(out)))
    print("KERNEL_OK")
</pallas_src>

<mosaic_0001>
module attributes {stable_mosaic.version = 11 : i64} {
  func.func @fused_forward_kernel(%arg0: i32, %arg1: memref<2x8x4xf32, #tpu.memory_space<vmem>>, %arg2: memref<2x8x32xf32, #tpu.memory_space<vmem>>, %arg3: memref<4x32xf32, #tpu.memory_space<vmem>>, %arg4: memref<1x32xf32, #tpu.memory_space<vmem>>, %arg5: memref<2x32x32xf32, #tpu.memory_space<vmem>>, %arg6: memref<2x32x32xf32, #tpu.memory_space<vmem>>, %arg7: memref<2x32x32xf32, #tpu.memory_space<vmem>>, %arg8: memref<2x1x32xf32, #tpu.memory_space<vmem>>, %arg9: memref<2x1x32xf32, #tpu.memory_space<vmem>>, %arg10: memref<2x1x32xf32, #tpu.memory_space<vmem>>, %arg11: memref<2x32x32xf32, #tpu.memory_space<vmem>>, %arg12: memref<2x1x32xf32, #tpu.memory_space<vmem>>, %arg13: memref<2x1x32xf32, #tpu.memory_space<vmem>>, %arg14: memref<2x1x32xf32, #tpu.memory_space<vmem>>, %arg15: memref<2x32x64xf32, #tpu.memory_space<vmem>>, %arg16: memref<2x1x64xf32, #tpu.memory_space<vmem>>, %arg17: memref<2x64x32xf32, #tpu.memory_space<vmem>>, %arg18: memref<2x1x32xf32, #tpu.memory_space<vmem>>, %arg19: memref<2x1x32xf32, #tpu.memory_space<vmem>>, %arg20: memref<2x1x32xf32, #tpu.memory_space<vmem>>, %arg21: memref<32x3xf32, #tpu.memory_space<vmem>>, %arg22: memref<1x3xf32, #tpu.memory_space<vmem>>, %arg23: memref<2x3xf32, #tpu.memory_space<vmem>>) attributes {dimension_semantics = [#tpu.dimension_semantics<parallel>], iteration_bounds = array<i64: 1>, scalar_prefetch = 0 : i64, scratch_operands = 0 : i64, tpu.core_type = #tpu.core_type<tc>, window_params = [{transform_indices = @transform_0, window_bounds = array<i64: 2, 8, 4>}, {transform_indices = @transform_1, window_bounds = array<i64: 2, 8, 32>}, {pipeline_mode = #tpu.pipeline_mode<synchronous>, transform_indices = @transform_2, window_bounds = array<i64: 4, 32>}, {pipeline_mode = #tpu.pipeline_mode<synchronous>, transform_indices = @transform_3, window_bounds = array<i64: 1, 32>}, {pipeline_mode = #tpu.pipeline_mode<synchronous>, transform_indices = @transform_4, window_bounds = array<i64: 2, 32, 32>}, {pipeline_mode = #tpu.pipeline_mode<synchronous>, transform_indices = @transform_5, window_bounds = array<i64: 2, 32, 32>}, {pipeline_mode = #tpu.pipeline_mode<synchronous>, transform_indices = @transform_6, window_bounds = array<i64: 2, 32, 32>}, {pipeline_mode = #tpu.pipeline_mode<synchronous>, transform_indices = @transform_7, window_bounds = array<i64: 2, 1, 32>}, {pipeline_mode = #tpu.pipeline_mode<synchronous>, transform_indices = @transform_8, window_bounds = array<i64: 2, 1, 32>}, {pipeline_mode = #tpu.pipeline_mode<synchronous>, transform_indices = @transform_9, window_bounds = array<i64: 2, 1, 32>}, {pipeline_mode = #tpu.pipeline_mode<synchronous>, transform_indices = @transform_10, window_bounds = array<i64: 2, 32, 32>}, {pipeline_mode = #tpu.pipeline_mode<synchronous>, transform_indices = @transform_11, window_bounds = array<i64: 2, 1, 32>}, {pipeline_mode = #tpu.pipeline_mode<synchronous>, transform_indices = @transform_12, window_bounds = array<i64: 2, 1, 32>}, {pipeline_mode = #tpu.pipeline_mode<synchronous>, transform_indices = @transform_13, window_bounds = array<i64: 2, 1, 32>}, {pipeline_mode = #tpu.pipeline_mode<synchronous>, transform_indices = @transform_14, window_bounds = array<i64: 2, 32, 64>}, {pipeline_mode = #tpu.pipeline_mode<synchronous>, transform_indices = @transform_15, window_bounds = array<i64: 2, 1, 64>}, {pipeline_mode = #tpu.pipeline_mode<synchronous>, transform_indices = @transform_16, window_bounds = array<i64: 2, 64, 32>}, {pipeline_mode = #tpu.pipeline_mode<synchronous>, transform_indices = @transform_17, window_bounds = array<i64: 2, 1, 32>}, {pipeline_mode = #tpu.pipeline_mode<synchronous>, transform_indices = @transform_18, window_bounds = array<i64: 2, 1, 32>}, {pipeline_mode = #tpu.pipeline_mode<synchronous>, transform_indices = @transform_19, window_bounds = array<i64: 2, 1, 32>}, {pipeline_mode = #tpu.pipeline_mode<synchronous>, transform_indices = @transform_20, window_bounds = array<i64: 32, 3>}, {pipeline_mode = #tpu.pipeline_mode<synchronous>, transform_indices = @transform_21, window_bounds = array<i64: 1, 3>}, {transform_indices = @transform_22, window_bounds = array<i64: 2, 3>}]} {
    %c0 = arith.constant 0 : index
    %c0_0 = arith.constant 0 : index
    %c0_1 = arith.constant 0 : index
    %0 = vector.load %arg1[%c0, %c0_0, %c0_1] : memref<2x8x4xf32, #tpu.memory_space<vmem>>, vector<2x8x4xf32>
    %1 = vector.shape_cast %0 : vector<2x8x4xf32> to vector<16x4xf32>
    %c0_2 = arith.constant 0 : index
    %c0_3 = arith.constant 0 : index
    %2 = vector.load %arg3[%c0_2, %c0_3] : memref<4x32xf32, #tpu.memory_space<vmem>>, vector<4x32xf32>
    %cst = arith.constant dense<0.000000e+00> : vector<16x32xf32>
    %3 = tpu.matmul %1, %2, %cst {dimension_numbers = #tpu.dot_dimension_numbers<[1], [0], [0], [1], [0, 0, 1, 1], [], []>} : vector<16x4xf32>, vector<4x32xf32>, vector<16x32xf32> -> vector<16x32xf32>
    %c0_4 = arith.constant 0 : index
    %c0_5 = arith.constant 0 : index
    %4 = vector.load %arg4[%c0_4, %c0_5] : memref<1x32xf32, #tpu.memory_space<vmem>>, vector<1x32xf32>
    %5 = vector.broadcast %4 : vector<1x32xf32> to vector<16x32xf32>
    %6 = arith.addf %3, %5 : vector<16x32xf32>
    %c0_6 = arith.constant 0 : index
    %c0_7 = arith.constant 0 : index
    %c0_8 = arith.constant 0 : index
    %7 = vector.load %arg2[%c0_6, %c0_7, %c0_8] : memref<2x8x32xf32, #tpu.memory_space<vmem>>, vector<2x8x32xf32>
    %8 = vector.shape_cast %7 : vector<2x8x32xf32> to vector<16x32xf32>
    %9 = arith.addf %6, %8 : vector<16x32xf32>
    %c0_9 = arith.constant 0 : index
    %c0_10 = arith.constant 0 : index
    %c0_11 = arith.constant 0 : index
    %10 = vector.load %arg5[%c0_9, %c0_10, %c0_11] : memref<2x32x32xf32, #tpu.memory_space<vmem>>, vector<1x32x32xf32>
    %11 = vector.shape_cast %10 : vector<1x32x32xf32> to vector<32x32xf32>
    %cst_12 = arith.constant dense<0.000000e+00> : vector<16x32xf32>
    %12 = tpu.matmul %9, %11, %cst_12 {dimension_numbers = #tpu.dot_dimension_numbers<[1], [0], [0], [1], [0, 0, 1, 1], [], []>} : vector<16x32xf32>, vector<32x32xf32>, vector<16x32xf32> -> vector<16x32xf32>
    %c0_13 = arith.constant 0 : index
    %c0_14 = arith.constant 0 : index
    %c0_15 = arith.constant 0 : index
    %13 = vector.load %arg8[%c0_13, %c0_14, %c0_15] : memref<2x1x32xf32, #tpu.memory_space<vmem>>, vector<1x1x32xf32>
    %14 = vector.shape_cast %13 : vector<1x1x32xf32> to vector<1x32xf32>
    %15 = vector.broadcast %14 : vector<1x32xf32> to vector<16x32xf32>
    %16 = arith.addf %12, %15 : vector<16x32xf32>
    %c0_16 = arith.constant 0 : index
    %c0_17 = arith.constant 0 : index
    %c0_18 = arith.constant 0 : index
    %17 = vector.load %arg6[%c0_16, %c0_17, %c0_18] : memref<2x32x32xf32, #tpu.memory_space<vmem>>, vector<1x32x32xf32>
    %18 = vector.shape_cast %17 : vector<1x32x32xf32> to vector<32x32xf32>
    %cst_19 = arith.constant dense<0.000000e+00> : vector<16x32xf32>
    %19 = tpu.matmul %9, %18, %cst_19 {dimension_numbers = #tpu.dot_dimension_numbers<[1], [0], [0], [1], [0, 0, 1, 1], [], []>} : vector<16x32xf32>, vector<32x32xf32>, vector<16x32xf32> -> vector<16x32xf32>
    %c0_20 = arith.constant 0 : index
    %c0_21 = arith.constant 0 : index
    %c0_22 = arith.constant 0 : index
    %20 = vector.load %arg9[%c0_20, %c0_21, %c0_22] : memref<2x1x32xf32, #tpu.memory_space<vmem>>, vector<1x1x32xf32>
    %21 = vector.shape_cast %20 : vector<1x1x32xf32> to vector<1x32xf32>
    %22 = vector.broadcast %21 : vector<1x32xf32> to vector<16x32xf32>
    %23 = arith.addf %19, %22 : vector<16x32xf32>
    %c0_23 = arith.constant 0 : index
    %c0_24 = arith.constant 0 : index
    %c0_25 = arith.constant 0 : index
    %24 = vector.load %arg7[%c0_23, %c0_24, %c0_25] : memref<2x32x32xf32, #tpu.memory_space<vmem>>, vector<1x32x32xf32>
    %25 = vector.shape_cast %24 : vector<1x32x32xf32> to vector<32x32xf32>
    %cst_26 = arith.constant dense<0.000000e+00> : vector<16x32xf32>
    %26 = tpu.matmul %9, %25, %cst_26 {dimension_numbers = #tpu.dot_dimension_numbers<[1], [0], [0], [1], [0, 0, 1, 1], [], []>} : vector<16x32xf32>, vector<32x32xf32>, vector<16x32xf32> -> vector<16x32xf32>
    %c0_27 = arith.constant 0 : index
    %c0_28 = arith.constant 0 : index
    %c0_29 = arith.constant 0 : index
    %27 = vector.load %arg10[%c0_27, %c0_28, %c0_29] : memref<2x1x32xf32, #tpu.memory_space<vmem>>, vector<1x1x32xf32>
    %28 = vector.shape_cast %27 : vector<1x1x32xf32> to vector<1x32xf32>
    %29 = vector.broadcast %28 : vector<1x32xf32> to vector<16x32xf32>
    %30 = arith.addf %26, %29 : vector<16x32xf32>
    %c0_30 = arith.constant 0 : index
    %c0_31 = arith.constant 0 : index
    %c0_32 = arith.constant 0 : index
    %31 = vector.load %arg11[%c0_30, %c0_31, %c0_32] : memref<2x32x32xf32, #tpu.memory_space<vmem>>, vector<1x32x32xf32>
    %32 = vector.shape_cast %31 : vector<1x32x32xf32> to vector<32x32xf32>
    %cst_33 = arith.constant 0.000000e+00 : f32
    %33 = vector.broadcast %cst_33 : f32 to vector<16x32xf32>
    %34 = vector.extract_strided_slice %16 {offsets = [0, 0], sizes = [16, 8], strides = [1, 1]} : vector<16x32xf32> to vector<16x8xf32>
    %35 = vector.shape_cast %34 : vector<16x8xf32> to vector<2x8x8xf32>
    %36 = vector.extract_strided_slice %23 {offsets = [0, 0], sizes = [16, 8], strides = [1, 1]} : vector<16x32xf32> to vector<16x8xf32>
    %37 = vector.shape_cast %36 : vector<16x8xf32> to vector<2x8x8xf32>
    %38 = vector.extract_strided_slice %30 {offsets = [0, 0], sizes = [16, 8], strides = [1, 1]} : vector<16x32xf32> to vector<16x8xf32>
    %39 = vector.shape_cast %38 : vector<16x8xf32> to vector<2x8x8xf32>
    "tpu.trace_start"() <{level = 10 : i32, message = "bqd,bkd->bqk"}> : () -> ()
    %cst_34 = arith.constant dense<0.000000e+00> : vector<2x8x8xf32>
    %40 = tpu.matmul %35, %37, %cst_34 {dimension_numbers = #tpu.dot_dimension_numbers<[2], [2], [1], [1], [0, 0, 0, 1, 1, 1], [0], [0]>} : vector<2x8x8xf32>, vector<2x8x8xf32>, vector<2x8x8xf32> -> vector<2x8x8xf32>
    "tpu.trace_stop"() : () -> ()
    %cst_35 = arith.constant 0.353553385 : f32
    %41 = vector.broadcast %cst_35 : f32 to vector<2x8x8xf32>
    %42 = arith.mulf %40, %41 : vector<2x8x8xf32>
    %cst_36 = arith.constant dense<0xFF800000> : vector<2x8xf32>
    %43 = vector.multi_reduction <maximumf>, %42, %cst_36 [2] : vector<2x8x8xf32> to vector<2x8xf32>
    %44 = vector.shape_cast %43 : vector<2x8xf32> to vector<2x8x1xf32>
    %45 = vector.broadcast %44 : vector<2x8x1xf32> to vector<2x8x8xf32>
    %46 = arith.subf %42, %45 : vector<2x8x8xf32>
    %47 = math.exp %46 : vector<2x8x8xf32>
    %cst_37 = arith.constant dense<0.000000e+00> : vector<2x8xf32>
    %48 = vector.multi_reduction <add>, %47, %cst_37 [2] : vector<2x8x8xf32> to vector<2x8xf32>
    %49 = vector.shape_cast %48 : vector<2x8xf32> to vector<2x8x1xf32>
    %50 = tpu.reciprocal %49 {approx = true} : vector<2x8x1xf32> -> vector<2x8x1xf32>
    %51 = vector.broadcast %50 : vector<2x8x1xf32> to vector<2x8x8xf32>
    %52 = arith.mulf %47, %51 : vector<2x8x8xf32>
    "tpu.trace_start"() <{level = 10 : i32, message = "bqk,bkd->bqd"}> : () -> ()
    %cst_38 = arith.constant dense<0.000000e+00> : vector<2x8x8xf32>
    %53 = tpu.matmul %52, %39, %cst_38 {dimension_numbers = #tpu.dot_dimension_numbers<[2], [1], [1], [2], [0, 0, 0, 1, 1, 2], [0], [0]>} : vector<2x8x8xf32>, vector<2x8x8xf32>, vector<2x8x8xf32> -> vector<2x8x8xf32>
    "tpu.trace_stop"() : () -> ()
    %54 = vector.shape_cast %53 : vector<2x8x8xf32> to vector<16x8xf32>
    %55 = vector.extract_strided_slice %32 {offsets = [0, 0], sizes = [8, 32], strides = [1, 1]} : vector<32x32xf32> to vector<8x32xf32>
    %cst_39 = arith.constant dense<0.000000e+00> : vector<16x32xf32>
    %56 = tpu.matmul %54, %55, %cst_39 {dimension_numbers = #tpu.dot_dimension_numbers<[1], [0], [0], [1], [0, 0, 1, 1], [], []>} : vector<16x8xf32>, vector<8x32xf32>, vector<16x32xf32> -> vector<16x32xf32>
    %57 = arith.addf %33, %56 : vector<16x32xf32>
    %58 = vector.extract_strided_slice %16 {offsets = [0, 8], sizes = [16, 8], strides = [1, 1]} : vector<16x32xf32> to vector<16x8xf32>
    %59 = vector.shape_cast %58 : vector<16x8xf32> to vector<2x8x8xf32>
    %60 = vector.extract_strided_slice %23 {offsets = [0, 8], sizes = [16, 8], strides = [1, 1]} : vector<16x32xf32> to vector<16x8xf32>
    %61 = vector.shape_cast %60 : vector<16x8xf32> to vector<2x8x8xf32>
    %62 = vector.extract_strided_slice %30 {offsets = [0, 8], sizes = [16, 8], strides = [1, 1]} : vector<16x32xf32> to vector<16x8xf32>
    %63 = vector.shape_cast %62 : vector<16x8xf32> to vector<2x8x8xf32>
    "tpu.trace_start"() <{level = 10 : i32, message = "bqd,bkd->bqk"}> : () -> ()
    %cst_40 = arith.constant dense<0.000000e+00> : vector<2x8x8xf32>
    %64 = tpu.matmul %59, %61, %cst_40 {dimension_numbers = #tpu.dot_dimension_numbers<[2], [2], [1], [1], [0, 0, 0, 1, 1, 1], [0], [0]>} : vector<2x8x8xf32>, vector<2x8x8xf32>, vector<2x8x8xf32> -> vector<2x8x8xf32>
    "tpu.trace_stop"() : () -> ()
    %cst_41 = arith.constant 0.353553385 : f32
    %65 = vector.broadcast %cst_41 : f32 to vector<2x8x8xf32>
    %66 = arith.mulf %64, %65 : vector<2x8x8xf32>
    %cst_42 = arith.constant dense<0xFF800000> : vector<2x8xf32>
    %67 = vector.multi_reduction <maximumf>, %66, %cst_42 [2] : vector<2x8x8xf32> to vector<2x8xf32>
    %68 = vector.shape_cast %67 : vector<2x8xf32> to vector<2x8x1xf32>
    %69 = vector.broadcast %68 : vector<2x8x1xf32> to vector<2x8x8xf32>
    %70 = arith.subf %66, %69 : vector<2x8x8xf32>
    %71 = math.exp %70 : vector<2x8x8xf32>
    %cst_43 = arith.constant dense<0.000000e+00> : vector<2x8xf32>
    %72 = vector.multi_reduction <add>, %71, %cst_43 [2] : vector<2x8x8xf32> to vector<2x8xf32>
    %73 = vector.shape_cast %72 : vector<2x8xf32> to vector<2x8x1xf32>
    %74 = tpu.reciprocal %73 {approx = true} : vector<2x8x1xf32> -> vector<2x8x1xf32>
    %75 = vector.broadcast %74 : vector<2x8x1xf32> to vector<2x8x8xf32>
    %76 = arith.mulf %71, %75 : vector<2x8x8xf32>
    "tpu.trace_start"() <{level = 10 : i32, message = "bqk,bkd->bqd"}> : () -> ()
    %cst_44 = arith.constant dense<0.000000e+00> : vector<2x8x8xf32>
    %77 = tpu.matmul %76, %63, %cst_44 {dimension_numbers = #tpu.dot_dimension_numbers<[2], [1], [1], [2], [0, 0, 0, 1, 1, 2], [0], [0]>} : vector<2x8x8xf32>, vector<2x8x8xf32>, vector<2x8x8xf32> -> vector<2x8x8xf32>
    "tpu.trace_stop"() : () -> ()
    %78 = vector.shape_cast %77 : vector<2x8x8xf32> to vector<16x8xf32>
    %79 = vector.extract_strided_slice %32 {offsets = [8, 0], sizes = [8, 32], strides = [1, 1]} : vector<32x32xf32> to vector<8x32xf32>
    %cst_45 = arith.constant dense<0.000000e+00> : vector<16x32xf32>
    %80 = tpu.matmul %78, %79, %cst_45 {dimension_numbers = #tpu.dot_dimension_numbers<[1], [0], [0], [1], [0, 0, 1, 1], [], []>} : vector<16x8xf32>, vector<8x32xf32>, vector<16x32xf32> -> vector<16x32xf32>
    %81 = arith.addf %57, %80 : vector<16x32xf32>
    %82 = vector.extract_strided_slice %16 {offsets = [0, 16], sizes = [16, 8], strides = [1, 1]} : vector<16x32xf32> to vector<16x8xf32>
    %83 = vector.shape_cast %82 : vector<16x8xf32> to vector<2x8x8xf32>
    %84 = vector.extract_strided_slice %23 {offsets = [0, 16], sizes = [16, 8], strides = [1, 1]} : vector<16x32xf32> to vector<16x8xf32>
    %85 = vector.shape_cast %84 : vector<16x8xf32> to vector<2x8x8xf32>
    %86 = vector.extract_strided_slice %30 {offsets = [0, 16], sizes = [16, 8], strides = [1, 1]} : vector<16x32xf32> to vector<16x8xf32>
    %87 = vector.shape_cast %86 : vector<16x8xf32> to vector<2x8x8xf32>
    "tpu.trace_start"() <{level = 10 : i32, message = "bqd,bkd->bqk"}> : () -> ()
    %cst_46 = arith.constant dense<0.000000e+00> : vector<2x8x8xf32>
    %88 = tpu.matmul %83, %85, %cst_46 {dimension_numbers = #tpu.dot_dimension_numbers<[2], [2], [1], [1], [0, 0, 0, 1, 1, 1], [0], [0]>} : vector<2x8x8xf32>, vector<2x8x8xf32>, vector<2x8x8xf32> -> vector<2x8x8xf32>
    "tpu.trace_stop"() : () -> ()
    %cst_47 = arith.constant 0.353553385 : f32
    %89 = vector.broadcast %cst_47 : f32 to vector<2x8x8xf32>
    %90 = arith.mulf %88, %89 : vector<2x8x8xf32>
    %cst_48 = arith.constant dense<0xFF800000> : vector<2x8xf32>
    %91 = vector.multi_reduction <maximumf>, %90, %cst_48 [2] : vector<2x8x8xf32> to vector<2x8xf32>
    %92 = vector.shape_cast %91 : vector<2x8xf32> to vector<2x8x1xf32>
    %93 = vector.broadcast %92 : vector<2x8x1xf32> to vector<2x8x8xf32>
    %94 = arith.subf %90, %93 : vector<2x8x8xf32>
    %95 = math.exp %94 : vector<2x8x8xf32>
    %cst_49 = arith.constant dense<0.000000e+00> : vector<2x8xf32>
    %96 = vector.multi_reduction <add>, %95, %cst_49 [2] : vector<2x8x8xf32> to vector<2x8xf32>
    %97 = vector.shape_cast %96 : vector<2x8xf32> to vector<2x8x1xf32>
    %98 = tpu.reciprocal %97 {approx = true} : vector<2x8x1xf32> -> vector<2x8x1xf32>
    %99 = vector.broadcast %98 : vector<2x8x1xf32> to vector<2x8x8xf32>
    %100 = arith.mulf %95, %99 : vector<2x8x8xf32>
    "tpu.trace_start"() <{level = 10 : i32, message = "bqk,bkd->bqd"}> : () -> ()
    %cst_50 = arith.constant dense<0.000000e+00> : vector<2x8x8xf32>
    %101 = tpu.matmul %100, %87, %cst_50 {dimension_numbers = #tpu.dot_dimension_numbers<[2], [1], [1], [2], [0, 0, 0, 1, 1, 2], [0], [0]>} : vector<2x8x8xf32>, vector<2x8x8xf32>, vector<2x8x8xf32> -> vector<2x8x8xf32>
    "tpu.trace_stop"() : () -> ()
    %102 = vector.shape_cast %101 : vector<2x8x8xf32> to vector<16x8xf32>
    %103 = vector.extract_strided_slice %32 {offsets = [16, 0], sizes = [8, 32], strides = [1, 1]} : vector<32x32xf32> to vector<8x32xf32>
    %cst_51 = arith.constant dense<0.000000e+00> : vector<16x32xf32>
    %104 = tpu.matmul %102, %103, %cst_51 {dimension_numbers = #tpu.dot_dimension_numbers<[1], [0], [0], [1], [0, 0, 1, 1], [], []>} : vector<16x8xf32>, vector<8x32xf32>, vector<16x32xf32> -> vector<16x32xf32>
    %105 = arith.addf %81, %104 : vector<16x32xf32>
    %106 = vector.extract_strided_slice %16 {offsets = [0, 24], sizes = [16, 8], strides = [1, 1]} : vector<16x32xf32> to vector<16x8xf32>
    %107 = vector.shape_cast %106 : vector<16x8xf32> to vector<2x8x8xf32>
    %108 = vector.extract_strided_slice %23 {offsets = [0, 24], sizes = [16, 8], strides = [1, 1]} : vector<16x32xf32> to vector<16x8xf32>
    %109 = vector.shape_cast %108 : vector<16x8xf32> to vector<2x8x8xf32>
    %110 = vector.extract_strided_slice %30 {offsets = [0, 24], sizes = [16, 8], strides = [1, 1]} : vector<16x32xf32> to vector<16x8xf32>
    %111 = vector.shape_cast %110 : vector<16x8xf32> to vector<2x8x8xf32>
    "tpu.trace_start"() <{level = 10 : i32, message = "bqd,bkd->bqk"}> : () -> ()
    %cst_52 = arith.constant dense<0.000000e+00> : vector<2x8x8xf32>
    %112 = tpu.matmul %107, %109, %cst_52 {dimension_numbers = #tpu.dot_dimension_numbers<[2], [2], [1], [1], [0, 0, 0, 1, 1, 1], [0], [0]>} : vector<2x8x8xf32>, vector<2x8x8xf32>, vector<2x8x8xf32> -> vector<2x8x8xf32>
    "tpu.trace_stop"() : () -> ()
    %cst_53 = arith.constant 0.353553385 : f32
    %113 = vector.broadcast %cst_53 : f32 to vector<2x8x8xf32>
    %114 = arith.mulf %112, %113 : vector<2x8x8xf32>
    %cst_54 = arith.constant dense<0xFF800000> : vector<2x8xf32>
    %115 = vector.multi_reduction <maximumf>, %114, %cst_54 [2] : vector<2x8x8xf32> to vector<2x8xf32>
    %116 = vector.shape_cast %115 : vector<2x8xf32> to vector<2x8x1xf32>
    %117 = vector.broadcast %116 : vector<2x8x1xf32> to vector<2x8x8xf32>
    %118 = arith.subf %114, %117 : vector<2x8x8xf32>
    %119 = math.exp %118 : vector<2x8x8xf32>
    %cst_55 = arith.constant dense<0.000000e+00> : vector<2x8xf32>
    %120 = vector.multi_reduction <add>, %119, %cst_55 [2] : vector<2x8x8xf32> to vector<2x8xf32>
    %121 = vector.shape_cast %120 : vector<2x8xf32> to vector<2x8x1xf32>
    %122 = tpu.reciprocal %121 {approx = true} : vector<2x8x1xf32> -> vector<2x8x1xf32>
    %123 = vector.broadcast %122 : vector<2x8x1xf32> to vector<2x8x8xf32>
    %124 = arith.mulf %119, %123 : vector<2x8x8xf32>
    "tpu.trace_start"() <{level = 10 : i32, message = "bqk,bkd->bqd"}> : () -> ()
    %cst_56 = arith.constant dense<0.000000e+00> : vector<2x8x8xf32>
    %125 = tpu.matmul %124, %111, %cst_56 {dimension_numbers = #tpu.dot_dimension_numbers<[2], [1], [1], [2], [0, 0, 0, 1, 1, 2], [0], [0]>} : vector<2x8x8xf32>, vector<2x8x8xf32>, vector<2x8x8xf32> -> vector<2x8x8xf32>
    "tpu.trace_stop"() : () -> ()
    %126 = vector.shape_cast %125 : vector<2x8x8xf32> to vector<16x8xf32>
    %127 = vector.extract_strided_slice %32 {offsets = [24, 0], sizes = [8, 32], strides = [1, 1]} : vector<32x32xf32> to vector<8x32xf32>
    %cst_57 = arith.constant dense<0.000000e+00> : vector<16x32xf32>
    %128 = tpu.matmul %126, %127, %cst_57 {dimension_numbers = #tpu.dot_dimension_numbers<[1], [0], [0], [1], [0, 0, 1, 1], [], []>} : vector<16x8xf32>, vector<8x32xf32>, vector<16x32xf32> -> vector<16x32xf32>
    %129 = arith.addf %105, %128 : vector<16x32xf32>
    %c0_58 = arith.constant 0 : index
    %c0_59 = arith.constant 0 : index
    %c0_60 = arith.constant 0 : index
    %130 = vector.load %arg12[%c0_58, %c0_59, %c0_60] : memref<2x1x32xf32, #tpu.memory_space<vmem>>, vector<1x1x32xf32>
    %131 = vector.shape_cast %130 : vector<1x1x32xf32> to vector<1x32xf32>
    %132 = vector.broadcast %131 : vector<1x32xf32> to vector<16x32xf32>
    %133 = arith.addf %129, %132 : vector<16x32xf32>
    %134 = arith.addf %9, %133 : vector<16x32xf32>
    %c0_61 = arith.constant 0 : index
    %c0_62 = arith.constant 0 : index
    %c0_63 = arith.constant 0 : index
    %135 = vector.load %arg13[%c0_61, %c0_62, %c0_63] : memref<2x1x32xf32, #tpu.memory_space<vmem>>, vector<1x1x32xf32>
    %136 = vector.shape_cast %135 : vector<1x1x32xf32> to vector<1x32xf32>
    %c0_64 = arith.constant 0 : index
    %c0_65 = arith.constant 0 : index
    %c0_66 = arith.constant 0 : index
    %137 = vector.load %arg14[%c0_64, %c0_65, %c0_66] : memref<2x1x32xf32, #tpu.memory_space<vmem>>, vector<1x1x32xf32>
    %138 = vector.shape_cast %137 : vector<1x1x32xf32> to vector<1x32xf32>
    %cst_67 = arith.constant dense<0.000000e+00> : vector<16xf32>
    %139 = vector.multi_reduction <add>, %134, %cst_67 [1] : vector<16x32xf32> to vector<16xf32>
    %140 = vector.shape_cast %139 : vector<16xf32> to vector<16x1xf32>
    %cst_68 = arith.constant 3.200000e+01 : f32
    %141 = vector.broadcast %cst_68 : f32 to vector<16x1xf32>
    %142 = arith.divf %140, %141 : vector<16x1xf32>
    %143 = vector.broadcast %142 : vector<16x1xf32> to vector<16x32xf32>
    %144 = arith.subf %134, %143 : vector<16x32xf32>
    %145 = arith.mulf %144, %144 : vector<16x32xf32>
    %cst_69 = arith.constant dense<0.000000e+00> : vector<16xf32>
    %146 = vector.multi_reduction <add>, %145, %cst_69 [1] : vector<16x32xf32> to vector<16xf32>
    %147 = vector.shape_cast %146 : vector<16xf32> to vector<16x1xf32>
    %cst_70 = arith.constant 3.200000e+01 : f32
    %148 = vector.broadcast %cst_70 : f32 to vector<16x1xf32>
    %149 = arith.divf %147, %148 : vector<16x1xf32>
    %150 = vector.broadcast %142 : vector<16x1xf32> to vector<16x32xf32>
    %151 = arith.subf %134, %150 : vector<16x32xf32>
    %cst_71 = arith.constant 9.99999974E-6 : f32
    %152 = vector.broadcast %cst_71 : f32 to vector<16x1xf32>
    %153 = arith.addf %149, %152 : vector<16x1xf32>
    %154 = math.rsqrt %153 : vector<16x1xf32>
    %155 = vector.broadcast %154 : vector<16x1xf32> to vector<16x32xf32>
    %156 = arith.mulf %151, %155 : vector<16x32xf32>
    %157 = vector.broadcast %136 : vector<1x32xf32> to vector<16x32xf32>
    %158 = arith.mulf %156, %157 : vector<16x32xf32>
    %159 = vector.broadcast %138 : vector<1x32xf32> to vector<16x32xf32>
    %160 = arith.addf %158, %159 : vector<16x32xf32>
    %c0_72 = arith.constant 0 : index
    %c0_73 = arith.constant 0 : index
    %c0_74 = arith.constant 0 : index
    %161 = vector.load %arg15[%c0_72, %c0_73, %c0_74] : memref<2x32x64xf32, #tpu.memory_space<vmem>>, vector<1x32x64xf32>
    %162 = vector.shape_cast %161 : vector<1x32x64xf32> to vector<32x64xf32>
    %cst_75 = arith.constant dense<0.000000e+00> : vector<16x64xf32>
    %163 = tpu.matmul %160, %162, %cst_75 {dimension_numbers = #tpu.dot_dimension_numbers<[1], [0], [0], [1], [0, 0, 1, 1], [], []>} : vector<16x32xf32>, vector<32x64xf32>, vector<16x64xf32> -> vector<16x64xf32>
    %c0_76 = arith.constant 0 : index
    %c0_77 = arith.constant 0 : index
    %c0_78 = arith.constant 0 : index
    %164 = vector.load %arg16[%c0_76, %c0_77, %c0_78] : memref<2x1x64xf32, #tpu.memory_space<vmem>>, vector<1x1x64xf32>
    %165 = vector.shape_cast %164 : vector<1x1x64xf32> to vector<1x64xf32>
    %166 = vector.broadcast %165 : vector<1x64xf32> to vector<16x64xf32>
    %167 = arith.addf %163, %166 : vector<16x64xf32>
    %cst_79 = arith.constant 0.000000e+00 : f32
    %168 = vector.broadcast %cst_79 : f32 to vector<16x64xf32>
    %169 = arith.maximumf %167, %168 : vector<16x64xf32>
    %c0_80 = arith.constant 0 : index
    %c0_81 = arith.constant 0 : index
    %c0_82 = arith.constant 0 : index
    %170 = vector.load %arg17[%c0_80, %c0_81, %c0_82] : memref<2x64x32xf32, #tpu.memory_space<vmem>>, vector<1x64x32xf32>
    %171 = vector.shape_cast %170 : vector<1x64x32xf32> to vector<64x32xf32>
    %cst_83 = arith.constant dense<0.000000e+00> : vector<16x32xf32>
    %172 = tpu.matmul %169, %171, %cst_83 {dimension_numbers = #tpu.dot_dimension_numbers<[1], [0], [0], [1], [0, 0, 1, 1], [], []>} : vector<16x64xf32>, vector<64x32xf32>, vector<16x32xf32> -> vector<16x32xf32>
    %c0_84 = arith.constant 0 : index
    %c0_85 = arith.constant 0 : index
    %c0_86 = arith.constant 0 : index
    %173 = vector.load %arg18[%c0_84, %c0_85, %c0_86] : memref<2x1x32xf32, #tpu.memory_space<vmem>>, vector<1x1x32xf32>
    %174 = vector.shape_cast %173 : vector<1x1x32xf32> to vector<1x32xf32>
    %175 = vector.broadcast %174 : vector<1x32xf32> to vector<16x32xf32>
    %176 = arith.addf %172, %175 : vector<16x32xf32>
    %177 = arith.addf %160, %176 : vector<16x32xf32>
    %c0_87 = arith.constant 0 : index
    %c0_88 = arith.constant 0 : index
    %c0_89 = arith.constant 0 : index
    %178 = vector.load %arg19[%c0_87, %c0_88, %c0_89] : memref<2x1x32xf32, #tpu.memory_space<vmem>>, vector<1x1x32xf32>
    %179 = vector.shape_cast %178 : vector<1x1x32xf32> to vector<1x32xf32>
    %c0_90 = arith.constant 0 : index
    %c0_91 = arith.constant 0 : index
    %c0_92 = arith.constant 0 : index
    %180 = vector.load %arg20[%c0_90, %c0_91, %c0_92] : memref<2x1x32xf32, #tpu.memory_space<vmem>>, vector<1x1x32xf32>
    %181 = vector.shape_cast %180 : vector<1x1x32xf32> to vector<1x32xf32>
    %cst_93 = arith.constant dense<0.000000e+00> : vector<16xf32>
    %182 = vector.multi_reduction <add>, %177, %cst_93 [1] : vector<16x32xf32> to vector<16xf32>
    %183 = vector.shape_cast %182 : vector<16xf32> to vector<16x1xf32>
    %cst_94 = arith.constant 3.200000e+01 : f32
    %184 = vector.broadcast %cst_94 : f32 to vector<16x1xf32>
    %185 = arith.divf %183, %184 : vector<16x1xf32>
    %186 = vector.broadcast %185 : vector<16x1xf32> to vector<16x32xf32>
    %187 = arith.subf %177, %186 : vector<16x32xf32>
    %188 = arith.mulf %187, %187 : vector<16x32xf32>
    %cst_95 = arith.constant dense<0.000000e+00> : vector<16xf32>
    %189 = vector.multi_reduction <add>, %188, %cst_95 [1] : vector<16x32xf32> to vector<16xf32>
    %190 = vector.shape_cast %189 : vector<16xf32> to vector<16x1xf32>
    %cst_96 = arith.constant 3.200000e+01 : f32
    %191 = vector.broadcast %cst_96 : f32 to vector<16x1xf32>
    %192 = arith.divf %190, %191 : vector<16x1xf32>
    %193 = vector.broadcast %185 : vector<16x1xf32> to vector<16x32xf32>
    %194 = arith.subf %177, %193 : vector<16x32xf32>
    %cst_97 = arith.constant 9.99999974E-6 : f32
    %195 = vector.broadcast %cst_97 : f32 to vector<16x1xf32>
    %196 = arith.addf %192, %195 : vector<16x1xf32>
    %197 = math.rsqrt %196 : vector<16x1xf32>
    %198 = vector.broadcast %197 : vector<16x1xf32> to vector<16x32xf32>
    %199 = arith.mulf %194, %198 : vector<16x32xf32>
    %200 = vector.broadcast %179 : vector<1x32xf32> to vector<16x32xf32>
    %201 = arith.mulf %199, %200 : vector<16x32xf32>
    %202 = vector.broadcast %181 : vector<1x32xf32> to vector<16x32xf32>
    %203 = arith.addf %201, %202 : vector<16x32xf32>
    %c1 = arith.constant 1 : index
    %c0_98 = arith.constant 0 : index
    %c0_99 = arith.constant 0 : index
    %204 = vector.load %arg5[%c1, %c0_98, %c0_99] : memref<2x32x32xf32, #tpu.memory_space<vmem>>, vector<1x32x32xf32>
    %205 = vector.shape_cast %204 : vector<1x32x32xf32> to vector<32x32xf32>
    %cst_100 = arith.constant dense<0.000000e+00> : vector<16x32xf32>
    %206 = tpu.matmul %203, %205, %cst_100 {dimension_numbers = #tpu.dot_dimension_numbers<[1], [0], [0], [1], [0, 0, 1, 1], [], []>} : vector<16x32xf32>, vector<32x32xf32>, vector<16x32xf32> -> vector<16x32xf32>
    %c1_101 = arith.constant 1 : index
    %c0_102 = arith.constant 0 : index
    %c0_103 = arith.constant 0 : index
    %207 = vector.load %arg8[%c1_101, %c0_102, %c0_103] : memref<2x1x32xf32, #tpu.memory_space<vmem>>, vector<1x1x32xf32>
    %208 = vector.shape_cast %207 : vector<1x1x32xf32> to vector<1x32xf32>
    %209 = vector.broadcast %208 : vector<1x32xf32> to vector<16x32xf32>
    %210 = arith.addf %206, %209 : vector<16x32xf32>
    %c1_104 = arith.constant 1 : index
    %c0_105 = arith.constant 0 : index
    %c0_106 = arith.constant 0 : index
    %211 = vector.load %arg6[%c1_104, %c0_105, %c0_106] : memref<2x32x32xf32, #tpu.memory_space<vmem>>, vector<1x32x32xf32>
    %212 = vector.shape_cast %211 : vector<1x32x32xf32> to vector<32x32xf32>
    %cst_107 = arith.constant dense<0.000000e+00> : vector<16x32xf32>
    %213 = tpu.matmul %203, %212, %cst_107 {dimension_numbers = #tpu.dot_dimension_numbers<[1], [0], [0], [1], [0, 0, 1, 1], [], []>} : vector<16x32xf32>, vector<32x32xf32>, vector<16x32xf32> -> vector<16x32xf32>
    %c1_108 = arith.constant 1 : index
    %c0_109 = arith.constant 0 : index
    %c0_110 = arith.constant 0 : index
    %214 = vector.load %arg9[%c1_108, %c0_109, %c0_110] : memref<2x1x32xf32, #tpu.memory_space<vmem>>, vector<1x1x32xf32>
    %215 = vector.shape_cast %214 : vector<1x1x32xf32> to vector<1x32xf32>
    %216 = vector.broadcast %215 : vector<1x32xf32> to vector<16x32xf32>
    %217 = arith.addf %213, %216 : vector<16x32xf32>
    %c1_111 = arith.constant 1 : index
    %c0_112 = arith.constant 0 : index
    %c0_113 = arith.constant 0 : index
    %218 = vector.load %arg7[%c1_111, %c0_112, %c0_113] : memref<2x32x32xf32, #tpu.memory_space<vmem>>, vector<1x32x32xf32>
    %219 = vector.shape_cast %218 : vector<1x32x32xf32> to vector<32x32xf32>
    %cst_114 = arith.constant dense<0.000000e+00> : vector<16x32xf32>
    %220 = tpu.matmul %203, %219, %cst_114 {dimension_numbers = #tpu.dot_dimension_numbers<[1], [0], [0], [1], [0, 0, 1, 1], [], []>} : vector<16x32xf32>, vector<32x32xf32>, vector<16x32xf32> -> vector<16x32xf32>
    %c1_115 = arith.constant 1 : index
    %c0_116 = arith.constant 0 : index
    %c0_117 = arith.constant 0 : index
    %221 = vector.load %arg10[%c1_115, %c0_116, %c0_117] : memref<2x1x32xf32, #tpu.memory_space<vmem>>, vector<1x1x32xf32>
    %222 = vector.shape_cast %221 : vector<1x1x32xf32> to vector<1x32xf32>
    %223 = vector.broadcast %222 : vector<1x32xf32> to vector<16x32xf32>
    %224 = arith.addf %220, %223 : vector<16x32xf32>
    %c1_118 = arith.constant 1 : index
    %c0_119 = arith.constant 0 : index
    %c0_120 = arith.constant 0 : index
    %225 = vector.load %arg11[%c1_118, %c0_119, %c0_120] : memref<2x32x32xf32, #tpu.memory_space<vmem>>, vector<1x32x32xf32>
    %226 = vector.shape_cast %225 : vector<1x32x32xf32> to vector<32x32xf32>
    %cst_121 = arith.constant 0.000000e+00 : f32
    %227 = vector.broadcast %cst_121 : f32 to vector<16x32xf32>
    %228 = vector.extract_strided_slice %210 {offsets = [0, 0], sizes = [16, 8], strides = [1, 1]} : vector<16x32xf32> to vector<16x8xf32>
    %229 = vector.shape_cast %228 : vector<16x8xf32> to vector<2x8x8xf32>
    %230 = vector.extract_strided_slice %217 {offsets = [0, 0], sizes = [16, 8], strides = [1, 1]} : vector<16x32xf32> to vector<16x8xf32>
    %231 = vector.shape_cast %230 : vector<16x8xf32> to vector<2x8x8xf32>
    %232 = vector.extract_strided_slice %224 {offsets = [0, 0], sizes = [16, 8], strides = [1, 1]} : vector<16x32xf32> to vector<16x8xf32>
    %233 = vector.shape_cast %232 : vector<16x8xf32> to vector<2x8x8xf32>
    "tpu.trace_start"() <{level = 10 : i32, message = "bqd,bkd->bqk"}> : () -> ()
    %cst_122 = arith.constant dense<0.000000e+00> : vector<2x8x8xf32>
    %234 = tpu.matmul %229, %231, %cst_122 {dimension_numbers = #tpu.dot_dimension_numbers<[2], [2], [1], [1], [0, 0, 0, 1, 1, 1], [0], [0]>} : vector<2x8x8xf32>, vector<2x8x8xf32>, vector<2x8x8xf32> -> vector<2x8x8xf32>
    "tpu.trace_stop"() : () -> ()
    %cst_123 = arith.constant 0.353553385 : f32
    %235 = vector.broadcast %cst_123 : f32 to vector<2x8x8xf32>
    %236 = arith.mulf %234, %235 : vector<2x8x8xf32>
    %cst_124 = arith.constant dense<0xFF800000> : vector<2x8xf32>
    %237 = vector.multi_reduction <maximumf>, %236, %cst_124 [2] : vector<2x8x8xf32> to vector<2x8xf32>
    %238 = vector.shape_cast %237 : vector<2x8xf32> to vector<2x8x1xf32>
    %239 = vector.broadcast %238 : vector<2x8x1xf32> to vector<2x8x8xf32>
    %240 = arith.subf %236, %239 : vector<2x8x8xf32>
    %241 = math.exp %240 : vector<2x8x8xf32>
    %cst_125 = arith.constant dense<0.000000e+00> : vector<2x8xf32>
    %242 = vector.multi_reduction <add>, %241, %cst_125 [2] : vector<2x8x8xf32> to vector<2x8xf32>
    %243 = vector.shape_cast %242 : vector<2x8xf32> to vector<2x8x1xf32>
    %244 = tpu.reciprocal %243 {approx = true} : vector<2x8x1xf32> -> vector<2x8x1xf32>
    %245 = vector.broadcast %244 : vector<2x8x1xf32> to vector<2x8x8xf32>
    %246 = arith.mulf %241, %245 : vector<2x8x8xf32>
    "tpu.trace_start"() <{level = 10 : i32, message = "bqk,bkd->bqd"}> : () -> ()
    %cst_126 = arith.constant dense<0.000000e+00> : vector<2x8x8xf32>
    %247 = tpu.matmul %246, %233, %cst_126 {dimension_numbers = #tpu.dot_dimension_numbers<[2], [1], [1], [2], [0, 0, 0, 1, 1, 2], [0], [0]>} : vector<2x8x8xf32>, vector<2x8x8xf32>, vector<2x8x8xf32> -> vector<2x8x8xf32>
    "tpu.trace_stop"() : () -> ()
    %248 = vector.shape_cast %247 : vector<2x8x8xf32> to vector<16x8xf32>
    %249 = vector.extract_strided_slice %226 {offsets = [0, 0], sizes = [8, 32], strides = [1, 1]} : vector<32x32xf32> to vector<8x32xf32>
    %cst_127 = arith.constant dense<0.000000e+00> : vector<16x32xf32>
    %250 = tpu.matmul %248, %249, %cst_127 {dimension_numbers = #tpu.dot_dimension_numbers<[1], [0], [0], [1], [0, 0, 1, 1], [], []>} : vector<16x8xf32>, vector<8x32xf32>, vector<16x32xf32> -> vector<16x32xf32>
    %251 = arith.addf %227, %250 : vector<16x32xf32>
    %252 = vector.extract_strided_slice %210 {offsets = [0, 8], sizes = [16, 8], strides = [1, 1]} : vector<16x32xf32> to vector<16x8xf32>
    %253 = vector.shape_cast %252 : vector<16x8xf32> to vector<2x8x8xf32>
    %254 = vector.extract_strided_slice %217 {offsets = [0, 8], sizes = [16, 8], strides = [1, 1]} : vector<16x32xf32> to vector<16x8xf32>
    %255 = vector.shape_cast %254 : vector<16x8xf32> to vector<2x8x8xf32>
    %256 = vector.extract_strided_slice %224 {offsets = [0, 8], sizes = [16, 8], strides = [1, 1]} : vector<16x32xf32> to vector<16x8xf32>
    %257 = vector.shape_cast %256 : vector<16x8xf32> to vector<2x8x8xf32>
    "tpu.trace_start"() <{level = 10 : i32, message = "bqd,bkd->bqk"}> : () -> ()
    %cst_128 = arith.constant dense<0.000000e+00> : vector<2x8x8xf32>
    %258 = tpu.matmul %253, %255, %cst_128 {dimension_numbers = #tpu.dot_dimension_numbers<[2], [2], [1], [1], [0, 0, 0, 1, 1, 1], [0], [0]>} : vector<2x8x8xf32>, vector<2x8x8xf32>, vector<2x8x8xf32> -> vector<2x8x8xf32>
    "tpu.trace_stop"() : () -> ()
    %cst_129 = arith.constant 0.353553385 : f32
    %259 = vector.broadcast %cst_129 : f32 to vector<2x8x8xf32>
    %260 = arith.mulf %258, %259 : vector<2x8x8xf32>
    %cst_130 = arith.constant dense<0xFF800000> : vector<2x8xf32>
    %261 = vector.multi_reduction <maximumf>, %260, %cst_130 [2] : vector<2x8x8xf32> to vector<2x8xf32>
    %262 = vector.shape_cast %261 : vector<2x8xf32> to vector<2x8x1xf32>
    %263 = vector.broadcast %262 : vector<2x8x1xf32> to vector<2x8x8xf32>
    %264 = arith.subf %260, %263 : vector<2x8x8xf32>
    %265 = math.exp %264 : vector<2x8x8xf32>
    %cst_131 = arith.constant dense<0.000000e+00> : vector<2x8xf32>
    %266 = vector.multi_reduction <add>, %265, %cst_131 [2] : vector<2x8x8xf32> to vector<2x8xf32>
    %267 = vector.shape_cast %266 : vector<2x8xf32> to vector<2x8x1xf32>
    %268 = tpu.reciprocal %267 {approx = true} : vector<2x8x1xf32> -> vector<2x8x1xf32>
    %269 = vector.broadcast %268 : vector<2x8x1xf32> to vector<2x8x8xf32>
    %270 = arith.mulf %265, %269 : vector<2x8x8xf32>
    "tpu.trace_start"() <{level = 10 : i32, message = "bqk,bkd->bqd"}> : () -> ()
    %cst_132 = arith.constant dense<0.000000e+00> : vector<2x8x8xf32>
    %271 = tpu.matmul %270, %257, %cst_132 {dimension_numbers = #tpu.dot_dimension_numbers<[2], [1], [1], [2], [0, 0, 0, 1, 1, 2], [0], [0]>} : vector<2x8x8xf32>, vector<2x8x8xf32>, vector<2x8x8xf32> -> vector<2x8x8xf32>
    "tpu.trace_stop"() : () -> ()
    %272 = vector.shape_cast %271 : vector<2x8x8xf32> to vector<16x8xf32>
    %273 = vector.extract_strided_slice %226 {offsets = [8, 0], sizes = [8, 32], strides = [1, 1]} : vector<32x32xf32> to vector<8x32xf32>
    %cst_133 = arith.constant dense<0.000000e+00> : vector<16x32xf32>
    %274 = tpu.matmul %272, %273, %cst_133 {dimension_numbers = #tpu.dot_dimension_numbers<[1], [0], [0], [1], [0, 0, 1, 1], [], []>} : vector<16x8xf32>, vector<8x32xf32>, vector<16x32xf32> -> vector<16x32xf32>
    %275 = arith.addf %251, %274 : vector<16x32xf32>
    %276 = vector.extract_strided_slice %210 {offsets = [0, 16], sizes = [16, 8], strides = [1, 1]} : vector<16x32xf32> to vector<16x8xf32>
    %277 = vector.shape_cast %276 : vector<16x8xf32> to vector<2x8x8xf32>
    %278 = vector.extract_strided_slice %217 {offsets = [0, 16], sizes = [16, 8], strides = [1, 1]} : vector<16x32xf32> to vector<16x8xf32>
    %279 = vector.shape_cast %278 : vector<16x8xf32> to vector<2x8x8xf32>
    %280 = vector.extract_strided_slice %224 {offsets = [0, 16], sizes = [16, 8], strides = [1, 1]} : vector<16x32xf32> to vector<16x8xf32>
    %281 = vector.shape_cast %280 : vector<16x8xf32> to vector<2x8x8xf32>
    "tpu.trace_start"() <{level = 10 : i32, message = "bqd,bkd->bqk"}> : () -> ()
    %cst_134 = arith.constant dense<0.000000e+00> : vector<2x8x8xf32>
    %282 = tpu.matmul %277, %279, %cst_134 {dimension_numbers = #tpu.dot_dimension_numbers<[2], [2], [1], [1], [0, 0, 0, 1, 1, 1], [0], [0]>} : vector<2x8x8xf32>, vector<2x8x8xf32>, vector<2x8x8xf32> -> vector<2x8x8xf32>
    "tpu.trace_stop"() : () -> ()
    %cst_135 = arith.constant 0.353553385 : f32
    %283 = vector.broadcast %cst_135 : f32 to vector<2x8x8xf32>
    %284 = arith.mulf %282, %283 : vector<2x8x8xf32>
    %cst_136 = arith.constant dense<0xFF800000> : vector<2x8xf32>
    %285 = vector.multi_reduction <maximumf>, %284, %cst_136 [2] : vector<2x8x8xf32> to vector<2x8xf32>
    %286 = vector.shape_cast %285 : vector<2x8xf32> to vector<2x8x1xf32>
    %287 = vector.broadcast %286 : vector<2x8x1xf32> to vector<2x8x8xf32>
    %288 = arith.subf %284, %287 : vector<2x8x8xf32>
    %289 = math.exp %288 : vector<2x8x8xf32>
    %cst_137 = arith.constant dense<0.000000e+00> : vector<2x8xf32>
    %290 = vector.multi_reduction <add>, %289, %cst_137 [2] : vector<2x8x8xf32> to vector<2x8xf32>
    %291 = vector.shape_cast %290 : vector<2x8xf32> to vector<2x8x1xf32>
    %292 = tpu.reciprocal %291 {approx = true} : vector<2x8x1xf32> -> vector<2x8x1xf32>
    %293 = vector.broadcast %292 : vector<2x8x1xf32> to vector<2x8x8xf32>
    %294 = arith.mulf %289, %293 : vector<2x8x8xf32>
    "tpu.trace_start"() <{level = 10 : i32, message = "bqk,bkd->bqd"}> : () -> ()
    %cst_138 = arith.constant dense<0.000000e+00> : vector<2x8x8xf32>
    %295 = tpu.matmul %294, %281, %cst_138 {dimension_numbers = #tpu.dot_dimension_numbers<[2], [1], [1], [2], [0, 0, 0, 1, 1, 2], [0], [0]>} : vector<2x8x8xf32>, vector<2x8x8xf32>, vector<2x8x8xf32> -> vector<2x8x8xf32>
    "tpu.trace_stop"() : () -> ()
    %296 = vector.shape_cast %295 : vector<2x8x8xf32> to vector<16x8xf32>
    %297 = vector.extract_strided_slice %226 {offsets = [16, 0], sizes = [8, 32], strides = [1, 1]} : vector<32x32xf32> to vector<8x32xf32>
    %cst_139 = arith.constant dense<0.000000e+00> : vector<16x32xf32>
    %298 = tpu.matmul %296, %297, %cst_139 {dimension_numbers = #tpu.dot_dimension_numbers<[1], [0], [0], [1], [0, 0, 1, 1], [], []>} : vector<16x8xf32>, vector<8x32xf32>, vector<16x32xf32> -> vector<16x32xf32>
    %299 = arith.addf %275, %298 : vector<16x32xf32>
    %300 = vector.extract_strided_slice %210 {offsets = [0, 24], sizes = [16, 8], strides = [1, 1]} : vector<16x32xf32> to vector<16x8xf32>
    %301 = vector.shape_cast %300 : vector<16x8xf32> to vector<2x8x8xf32>
    %302 = vector.extract_strided_slice %217 {offsets = [0, 24], sizes = [16, 8], strides = [1, 1]} : vector<16x32xf32> to vector<16x8xf32>
    %303 = vector.shape_cast %302 : vector<16x8xf32> to vector<2x8x8xf32>
    %304 = vector.extract_strided_slice %224 {offsets = [0, 24], sizes = [16, 8], strides = [1, 1]} : vector<16x32xf32> to vector<16x8xf32>
    %305 = vector.shape_cast %304 : vector<16x8xf32> to vector<2x8x8xf32>
    "tpu.trace_start"() <{level = 10 : i32, message = "bqd,bkd->bqk"}> : () -> ()
    %cst_140 = arith.constant dense<0.000000e+00> : vector<2x8x8xf32>
    %306 = tpu.matmul %301, %303, %cst_140 {dimension_numbers = #tpu.dot_dimension_numbers<[2], [2], [1], [1], [0, 0, 0, 1, 1, 1], [0], [0]>} : vector<2x8x8xf32>, vector<2x8x8xf32>, vector<2x8x8xf32> -> vector<2x8x8xf32>
    "tpu.trace_stop"() : () -> ()
    %cst_141 = arith.constant 0.353553385 : f32
    %307 = vector.broadcast %cst_141 : f32 to vector<2x8x8xf32>
    %308 = arith.mulf %306, %307 : vector<2x8x8xf32>
    %cst_142 = arith.constant dense<0xFF800000> : vector<2x8xf32>
    %309 = vector.multi_reduction <maximumf>, %308, %cst_142 [2] : vector<2x8x8xf32> to vector<2x8xf32>
    %310 = vector.shape_cast %309 : vector<2x8xf32> to vector<2x8x1xf32>
    %311 = vector.broadcast %310 : vector<2x8x1xf32> to vector<2x8x8xf32>
    %312 = arith.subf %308, %311 : vector<2x8x8xf32>
    %313 = math.exp %312 : vector<2x8x8xf32>
    %cst_143 = arith.constant dense<0.000000e+00> : vector<2x8xf32>
    %314 = vector.multi_reduction <add>, %313, %cst_143 [2] : vector<2x8x8xf32> to vector<2x8xf32>
    %315 = vector.shape_cast %314 : vector<2x8xf32> to vector<2x8x1xf32>
    %316 = tpu.reciprocal %315 {approx = true} : vector<2x8x1xf32> -> vector<2x8x1xf32>
    %317 = vector.broadcast %316 : vector<2x8x1xf32> to vector<2x8x8xf32>
    %318 = arith.mulf %313, %317 : vector<2x8x8xf32>
    "tpu.trace_start"() <{level = 10 : i32, message = "bqk,bkd->bqd"}> : () -> ()
    %cst_144 = arith.constant dense<0.000000e+00> : vector<2x8x8xf32>
    %319 = tpu.matmul %318, %305, %cst_144 {dimension_numbers = #tpu.dot_dimension_numbers<[2], [1], [1], [2], [0, 0, 0, 1, 1, 2], [0], [0]>} : vector<2x8x8xf32>, vector<2x8x8xf32>, vector<2x8x8xf32> -> vector<2x8x8xf32>
    "tpu.trace_stop"() : () -> ()
    %320 = vector.shape_cast %319 : vector<2x8x8xf32> to vector<16x8xf32>
    %321 = vector.extract_strided_slice %226 {offsets = [24, 0], sizes = [8, 32], strides = [1, 1]} : vector<32x32xf32> to vector<8x32xf32>
    %cst_145 = arith.constant dense<0.000000e+00> : vector<16x32xf32>
    %322 = tpu.matmul %320, %321, %cst_145 {dimension_numbers = #tpu.dot_dimension_numbers<[1], [0], [0], [1], [0, 0, 1, 1], [], []>} : vector<16x8xf32>, vector<8x32xf32>, vector<16x32xf32> -> vector<16x32xf32>
    %323 = arith.addf %299, %322 : vector<16x32xf32>
    %c1_146 = arith.constant 1 : index
    %c0_147 = arith.constant 0 : index
    %c0_148 = arith.constant 0 : index
    %324 = vector.load %arg12[%c1_146, %c0_147, %c0_148] : memref<2x1x32xf32, #tpu.memory_space<vmem>>, vector<1x1x32xf32>
    %325 = vector.shape_cast %324 : vector<1x1x32xf32> to vector<1x32xf32>
    %326 = vector.broadcast %325 : vector<1x32xf32> to vector<16x32xf32>
    %327 = arith.addf %323, %326 : vector<16x32xf32>
    %328 = arith.addf %203, %327 : vector<16x32xf32>
    %c1_149 = arith.constant 1 : index
    %c0_150 = arith.constant 0 : index
    %c0_151 = arith.constant 0 : index
    %329 = vector.load %arg13[%c1_149, %c0_150, %c0_151] : memref<2x1x32xf32, #tpu.memory_space<vmem>>, vector<1x1x32xf32>
    %330 = vector.shape_cast %329 : vector<1x1x32xf32> to vector<1x32xf32>
    %c1_152 = arith.constant 1 : index
    %c0_153 = arith.constant 0 : index
    %c0_154 = arith.constant 0 : index
    %331 = vector.load %arg14[%c1_152, %c0_153, %c0_154] : memref<2x1x32xf32, #tpu.memory_space<vmem>>, vector<1x1x32xf32>
    %332 = vector.shape_cast %331 : vector<1x1x32xf32> to vector<1x32xf32>
    %cst_155 = arith.constant dense<0.000000e+00> : vector<16xf32>
    %333 = vector.multi_reduction <add>, %328, %cst_155 [1] : vector<16x32xf32> to vector<16xf32>
    %334 = vector.shape_cast %333 : vector<16xf32> to vector<16x1xf32>
    %cst_156 = arith.constant 3.200000e+01 : f32
    %335 = vector.broadcast %cst_156 : f32 to vector<16x1xf32>
    %336 = arith.divf %334, %335 : vector<16x1xf32>
    %337 = vector.broadcast %336 : vector<16x1xf32> to vector<16x32xf32>
    %338 = arith.subf %328, %337 : vector<16x32xf32>
    %339 = arith.mulf %338, %338 : vector<16x32xf32>
    %cst_157 = arith.constant dense<0.000000e+00> : vector<16xf32>
    %340 = vector.multi_reduction <add>, %339, %cst_157 [1] : vector<16x32xf32> to vector<16xf32>
    %341 = vector.shape_cast %340 : vector<16xf32> to vector<16x1xf32>
    %cst_158 = arith.constant 3.200000e+01 : f32
    %342 = vector.broadcast %cst_158 : f32 to vector<16x1xf32>
    %343 = arith.divf %341, %342 : vector<16x1xf32>
    %344 = vector.broadcast %336 : vector<16x1xf32> to vector<16x32xf32>
    %345 = arith.subf %328, %344 : vector<16x32xf32>
    %cst_159 = arith.constant 9.99999974E-6 : f32
    %346 = vector.broadcast %cst_159 : f32 to vector<16x1xf32>
    %347 = arith.addf %343, %346 : vector<16x1xf32>
    %348 = math.rsqrt %347 : vector<16x1xf32>
    %349 = vector.broadcast %348 : vector<16x1xf32> to vector<16x32xf32>
    %350 = arith.mulf %345, %349 : vector<16x32xf32>
    %351 = vector.broadcast %330 : vector<1x32xf32> to vector<16x32xf32>
    %352 = arith.mulf %350, %351 : vector<16x32xf32>
    %353 = vector.broadcast %332 : vector<1x32xf32> to vector<16x32xf32>
    %354 = arith.addf %352, %353 : vector<16x32xf32>
    %c1_160 = arith.constant 1 : index
    %c0_161 = arith.constant 0 : index
    %c0_162 = arith.constant 0 : index
    %355 = vector.load %arg15[%c1_160, %c0_161, %c0_162] : memref<2x32x64xf32, #tpu.memory_space<vmem>>, vector<1x32x64xf32>
    %356 = vector.shape_cast %355 : vector<1x32x64xf32> to vector<32x64xf32>
    %cst_163 = arith.constant dense<0.000000e+00> : vector<16x64xf32>
    %357 = tpu.matmul %354, %356, %cst_163 {dimension_numbers = #tpu.dot_dimension_numbers<[1], [0], [0], [1], [0, 0, 1, 1], [], []>} : vector<16x32xf32>, vector<32x64xf32>, vector<16x64xf32> -> vector<16x64xf32>
    %c1_164 = arith.constant 1 : index
    %c0_165 = arith.constant 0 : index
    %c0_166 = arith.constant 0 : index
    %358 = vector.load %arg16[%c1_164, %c0_165, %c0_166] : memref<2x1x64xf32, #tpu.memory_space<vmem>>, vector<1x1x64xf32>
    %359 = vector.shape_cast %358 : vector<1x1x64xf32> to vector<1x64xf32>
    %360 = vector.broadcast %359 : vector<1x64xf32> to vector<16x64xf32>
    %361 = arith.addf %357, %360 : vector<16x64xf32>
    %cst_167 = arith.constant 0.000000e+00 : f32
    %362 = vector.broadcast %cst_167 : f32 to vector<16x64xf32>
    %363 = arith.maximumf %361, %362 : vector<16x64xf32>
    %c1_168 = arith.constant 1 : index
    %c0_169 = arith.constant 0 : index
    %c0_170 = arith.constant 0 : index
    %364 = vector.load %arg17[%c1_168, %c0_169, %c0_170] : memref<2x64x32xf32, #tpu.memory_space<vmem>>, vector<1x64x32xf32>
    %365 = vector.shape_cast %364 : vector<1x64x32xf32> to vector<64x32xf32>
    %cst_171 = arith.constant dense<0.000000e+00> : vector<16x32xf32>
    %366 = tpu.matmul %363, %365, %cst_171 {dimension_numbers = #tpu.dot_dimension_numbers<[1], [0], [0], [1], [0, 0, 1, 1], [], []>} : vector<16x64xf32>, vector<64x32xf32>, vector<16x32xf32> -> vector<16x32xf32>
    %c1_172 = arith.constant 1 : index
    %c0_173 = arith.constant 0 : index
    %c0_174 = arith.constant 0 : index
    %367 = vector.load %arg18[%c1_172, %c0_173, %c0_174] : memref<2x1x32xf32, #tpu.memory_space<vmem>>, vector<1x1x32xf32>
    %368 = vector.shape_cast %367 : vector<1x1x32xf32> to vector<1x32xf32>
    %369 = vector.broadcast %368 : vector<1x32xf32> to vector<16x32xf32>
    %370 = arith.addf %366, %369 : vector<16x32xf32>
    %371 = arith.addf %354, %370 : vector<16x32xf32>
    %c1_175 = arith.constant 1 : index
    %c0_176 = arith.constant 0 : index
    %c0_177 = arith.constant 0 : index
    %372 = vector.load %arg19[%c1_175, %c0_176, %c0_177] : memref<2x1x32xf32, #tpu.memory_space<vmem>>, vector<1x1x32xf32>
    %373 = vector.shape_cast %372 : vector<1x1x32xf32> to vector<1x32xf32>
    %c1_178 = arith.constant 1 : index
    %c0_179 = arith.constant 0 : index
    %c0_180 = arith.constant 0 : index
    %374 = vector.load %arg20[%c1_178, %c0_179, %c0_180] : memref<2x1x32xf32, #tpu.memory_space<vmem>>, vector<1x1x32xf32>
    %375 = vector.shape_cast %374 : vector<1x1x32xf32> to vector<1x32xf32>
    %cst_181 = arith.constant dense<0.000000e+00> : vector<16xf32>
    %376 = vector.multi_reduction <add>, %371, %cst_181 [1] : vector<16x32xf32> to vector<16xf32>
    %377 = vector.shape_cast %376 : vector<16xf32> to vector<16x1xf32>
    %cst_182 = arith.constant 3.200000e+01 : f32
    %378 = vector.broadcast %cst_182 : f32 to vector<16x1xf32>
    %379 = arith.divf %377, %378 : vector<16x1xf32>
    %380 = vector.broadcast %379 : vector<16x1xf32> to vector<16x32xf32>
    %381 = arith.subf %371, %380 : vector<16x32xf32>
    %382 = arith.mulf %381, %381 : vector<16x32xf32>
    %cst_183 = arith.constant dense<0.000000e+00> : vector<16xf32>
    %383 = vector.multi_reduction <add>, %382, %cst_183 [1] : vector<16x32xf32> to vector<16xf32>
    %384 = vector.shape_cast %383 : vector<16xf32> to vector<16x1xf32>
    %cst_184 = arith.constant 3.200000e+01 : f32
    %385 = vector.broadcast %cst_184 : f32 to vector<16x1xf32>
    %386 = arith.divf %384, %385 : vector<16x1xf32>
    %387 = vector.broadcast %379 : vector<16x1xf32> to vector<16x32xf32>
    %388 = arith.subf %371, %387 : vector<16x32xf32>
    %cst_185 = arith.constant 9.99999974E-6 : f32
    %389 = vector.broadcast %cst_185 : f32 to vector<16x1xf32>
    %390 = arith.addf %386, %389 : vector<16x1xf32>
    %391 = math.rsqrt %390 : vector<16x1xf32>
    %392 = vector.broadcast %391 : vector<16x1xf32> to vector<16x32xf32>
    %393 = arith.mulf %388, %392 : vector<16x32xf32>
    %394 = vector.broadcast %373 : vector<1x32xf32> to vector<16x32xf32>
    %395 = arith.mulf %393, %394 : vector<16x32xf32>
    %396 = vector.broadcast %375 : vector<1x32xf32> to vector<16x32xf32>
    %397 = arith.addf %395, %396 : vector<16x32xf32>
    %398 = vector.shape_cast %397 : vector<16x32xf32> to vector<2x8x32xf32>
    %cst_186 = arith.constant dense<0.000000e+00> : vector<2x32xf32>
    %399 = vector.multi_reduction <add>, %398, %cst_186 [1] : vector<2x8x32xf32> to vector<2x32xf32>
    %cst_187 = arith.constant 8.000000e+00 : f32
    %400 = vector.broadcast %cst_187 : f32 to vector<2x32xf32>
    %401 = arith.divf %399, %400 : vector<2x32xf32>
    %c0_188 = arith.constant 0 : index
    %c0_189 = arith.constant 0 : index
    %402 = vector.load %arg21[%c0_188, %c0_189] : memref<32x3xf32, #tpu.memory_space<vmem>>, vector<32x3xf32>
    %cst_190 = arith.constant dense<0.000000e+00> : vector<2x3xf32>
    %403 = tpu.matmul %401, %402, %cst_190 {dimension_numbers = #tpu.dot_dimension_numbers<[1], [0], [0], [1], [0, 0, 1, 1], [], []>} : vector<2x32xf32>, vector<32x3xf32>, vector<2x3xf32> -> vector<2x3xf32>
    %c0_191 = arith.constant 0 : index
    %c0_192 = arith.constant 0 : index
    %404 = vector.load %arg22[%c0_191, %c0_192] : memref<1x3xf32, #tpu.memory_space<vmem>>, vector<1x3xf32>
    %405 = vector.broadcast %404 : vector<1x3xf32> to vector<2x3xf32>
    %406 = arith.addf %403, %405 : vector<2x3xf32>
    %c0_193 = arith.constant 0 : index
    %c0_194 = arith.constant 0 : index
    %407 = vector.load %arg23[%c0_193, %c0_194] : memref<2x3xf32, #tpu.memory_space<vmem>>, vector<2x3xf32>
    tpu.vector_store %arg23[%c0_193, %c0_194], %406 {strides = array<i32>} : memref<2x3xf32, #tpu.memory_space<vmem>>, vector<2x3xf32>,
    return
  }
  func.func @transform_0(%arg0: i32) -> (i32, i32, i32) {
    %c0_i32 = arith.constant 0 : i32
    %c0_i32_0 = arith.constant 0 : i32
    %c0_i32_1 = arith.constant 0 : i32
    return %arg0, %c0_i32, %c0_i32_0 : i32, i32, i32
  }
  func.func @transform_1(%arg0: i32) -> (i32, i32, i32) {
    %c0_i32 = arith.constant 0 : i32
    %c0_i32_0 = arith.constant 0 : i32
    %c0_i32_1 = arith.constant 0 : i32
    return %arg0, %c0_i32, %c0_i32_0 : i32, i32, i32
  }
  func.func @transform_2(%arg0: i32) -> (i32, i32) {
    %c0_i32 = arith.constant 0 : i32
    %c0_i32_0 = arith.constant 0 : i32
    %c0_i32_1 = arith.constant 0 : i32
    return %c0_i32, %c0_i32_0 : i32, i32
  }
  func.func @transform_3(%arg0: i32) -> (i32, i32) {
    %c0_i32 = arith.constant 0 : i32
    %c0_i32_0 = arith.constant 0 : i32
    %c0_i32_1 = arith.constant 0 : i32
    return %c0_i32, %c0_i32_0 : i32, i32
  }
  func.func @transform_4(%arg0: i32) -> (i32, i32, i32) {
    %c0_i32 = arith.constant 0 : i32
    %c0_i32_0 = arith.constant 0 : i32
    %c0_i32_1 = arith.constant 0 : i32
    %c0_i32_2 = arith.constant 0 : i32
    return %c0_i32, %c0_i32_0, %c0_i32_1 : i32, i32, i32
  }
  func.func @transform_5(%arg0: i32) -> (i32, i32, i32) {
    %c0_i32 = arith.constant 0 : i32
    %c0_i32_0 = arith.constant 0 : i32
    %c0_i32_1 = arith.constant 0 : i32
    %c0_i32_2 = arith.constant 0 : i32
    return %c0_i32, %c0_i32_0, %c0_i32_1 : i32, i32, i32
  }
  func.func @transform_6(%arg0: i32) -> (i32, i32, i32) {
    %c0_i32 = arith.constant 0 : i32
    %c0_i32_0 = arith.constant 0 : i32
    %c0_i32_1 = arith.constant 0 : i32
    %c0_i32_2 = arith.constant 0 : i32
    return %c0_i32, %c0_i32_0, %c0_i32_1 : i32, i32, i32
  }
  func.func @transform_7(%arg0: i32) -> (i32, i32, i32) {
    %c0_i32 = arith.constant 0 : i32
    %c0_i32_0 = arith.constant 0 : i32
    %c0_i32_1 = arith.constant 0 : i32
    %c0_i32_2 = arith.constant 0 : i32
    return %c0_i32, %c0_i32_0, %c0_i32_1 : i32, i32, i32
  }
  func.func @transform_8(%arg0: i32) -> (i32, i32, i32) {
    %c0_i32 = arith.constant 0 : i32
    %c0_i32_0 = arith.constant 0 : i32
    %c0_i32_1 = arith.constant 0 : i32
    %c0_i32_2 = arith.constant 0 : i32
    return %c0_i32, %c0_i32_0, %c0_i32_1 : i32, i32, i32
  }
  func.func @transform_9(%arg0: i32) -> (i32, i32, i32) {
    %c0_i32 = arith.constant 0 : i32
    %c0_i32_0 = arith.constant 0 : i32
    %c0_i32_1 = arith.constant 0 : i32
    %c0_i32_2 = arith.constant 0 : i32
    return %c0_i32, %c0_i32_0, %c0_i32_1 : i32, i32, i32
  }
  func.func @transform_10(%arg0: i32) -> (i32, i32, i32) {
    %c0_i32 = arith.constant 0 : i32
    %c0_i32_0 = arith.constant 0 : i32
    %c0_i32_1 = arith.constant 0 : i32
    %c0_i32_2 = arith.constant 0 : i32
    return %c0_i32, %c0_i32_0, %c0_i32_1 : i32, i32, i32
  }
  func.func @transform_11(%arg0: i32) -> (i32, i32, i32) {
    %c0_i32 = arith.constant 0 : i32
    %c0_i32_0 = arith.constant 0 : i32
    %c0_i32_1 = arith.constant 0 : i32
    %c0_i32_2 = arith.constant 0 : i32
    return %c0_i32, %c0_i32_0, %c0_i32_1 : i32, i32, i32
  }
  func.func @transform_12(%arg0: i32) -> (i32, i32, i32) {
    %c0_i32 = arith.constant 0 : i32
    %c0_i32_0 = arith.constant 0 : i32
    %c0_i32_1 = arith.constant 0 : i32
    %c0_i32_2 = arith.constant 0 : i32
    return %c0_i32, %c0_i32_0, %c0_i32_1 : i32, i32, i32
  }
  func.func @transform_13(%arg0: i32) -> (i32, i32, i32) {
    %c0_i32 = arith.constant 0 : i32
    %c0_i32_0 = arith.constant 0 : i32
    %c0_i32_1 = arith.constant 0 : i32
    %c0_i32_2 = arith.constant 0 : i32
    return %c0_i32, %c0_i32_0, %c0_i32_1 : i32, i32, i32
  }
  func.func @transform_14(%arg0: i32) -> (i32, i32, i32) {
    %c0_i32 = arith.constant 0 : i32
    %c0_i32_0 = arith.constant 0 : i32
    %c0_i32_1 = arith.constant 0 : i32
    %c0_i32_2 = arith.constant 0 : i32
    return %c0_i32, %c0_i32_0, %c0_i32_1 : i32, i32, i32
  }
  func.func @transform_15(%arg0: i32) -> (i32, i32, i32) {
    %c0_i32 = arith.constant 0 : i32
    %c0_i32_0 = arith.constant 0 : i32
    %c0_i32_1 = arith.constant 0 : i32
    %c0_i32_2 = arith.constant 0 : i32
    return %c0_i32, %c0_i32_0, %c0_i32_1 : i32, i32, i32
  }
  func.func @transform_16(%arg0: i32) -> (i32, i32, i32) {
    %c0_i32 = arith.constant 0 : i32
    %c0_i32_0 = arith.constant 0 : i32
    %c0_i32_1 = arith.constant 0 : i32
    %c0_i32_2 = arith.constant 0 : i32
    return %c0_i32, %c0_i32_0, %c0_i32_1 : i32, i32, i32
  }
  func.func @transform_17(%arg0: i32) -> (i32, i32, i32) {
    %c0_i32 = arith.constant 0 : i32
    %c0_i32_0 = arith.constant 0 : i32
    %c0_i32_1 = arith.constant 0 : i32
    %c0_i32_2 = arith.constant 0 : i32
    return %c0_i32, %c0_i32_0, %c0_i32_1 : i32, i32, i32
  }
  func.func @transform_18(%arg0: i32) -> (i32, i32, i32) {
    %c0_i32 = arith.constant 0 : i32
    %c0_i32_0 = arith.constant 0 : i32
    %c0_i32_1 = arith.constant 0 : i32
    %c0_i32_2 = arith.constant 0 : i32
    return %c0_i32, %c0_i32_0, %c0_i32_1 : i32, i32, i32
  }
  func.func @transform_19(%arg0: i32) -> (i32, i32, i32) {
    %c0_i32 = arith.constant 0 : i32
    %c0_i32_0 = arith.constant 0 : i32
    %c0_i32_1 = arith.constant 0 : i32
    %c0_i32_2 = arith.constant 0 : i32
    return %c0_i32, %c0_i32_0, %c0_i32_1 : i32, i32, i32
  }
  func.func @transform_20(%arg0: i32) -> (i32, i32) {
    %c0_i32 = arith.constant 0 : i32
    %c0_i32_0 = arith.constant 0 : i32
    %c0_i32_1 = arith.constant 0 : i32
    return %c0_i32, %c0_i32_0 : i32, i32
  }
  func.func @transform_21(%arg0: i32) -> (i32, i32) {
    %c0_i32 = arith.constant 0 : i32
    %c0_i32_0 = arith.constant 0 : i32
    %c0_i32_1 = arith.constant 0 : i32
    return %c0_i32, %c0_i32_0 : i32, i32
  }
  func.func @transform_22(%arg0: i32) -> (i32, i32) {
    %c0_i32 = arith.constant 0 : i32
    %c0_i32_0 = arith.constant 0 : i32
    return %arg0, %c0_i32 : i32, i32
  }
}

</mosaic_0001>

<llo_original>
// kernel: tpu_custom_call.1
$region0: #{tpu_custom_call.1}
  #allocation0 [shape = 'u32[]', space=smem, size = 0x4, offset = 0x4, fixed_abs, tag = 'smem constant byte address 0x4 - core index']
  #allocation1 [shape = 'u32[144,128]{1,0:T(1,128)}', space=vmem, size = 0x12000, scoped, tag = 'internal scratch']
  %s0 = inlined_call_operand.vmem [shape: f32[2,8,4], index: 0, kind: input, shape index: {}]
  %s1 = inlined_call_operand.vmem [shape: f32[2,8,32], index: 1, kind: input, shape index: {}]
  %s2 = inlined_call_operand.vmem [shape: f32[4,32], index: 2, kind: input, shape index: {}]
  %s3 = inlined_call_operand.vmem [shape: f32[1,32], index: 3, kind: input, shape index: {}]
  %s4 = inlined_call_operand.vmem [shape: f32[2,32,32], index: 4, kind: input, shape index: {}]
  %s5 = inlined_call_operand.vmem [shape: f32[2,32,32], index: 5, kind: input, shape index: {}]
  %s6 = inlined_call_operand.vmem [shape: f32[2,32,32], index: 6, kind: input, shape index: {}]
  %s7 = inlined_call_operand.vmem [shape: f32[2,1,32], index: 7, kind: input, shape index: {}]
  %s8 = inlined_call_operand.vmem [shape: f32[2,1,32], index: 8, kind: input, shape index: {}]
  %s9 = inlined_call_operand.vmem [shape: f32[2,1,32], index: 9, kind: input, shape index: {}]
  %s10 = inlined_call_operand.hbm [shape: f32[2,32,32], index: 10, kind: input, shape index: {}]
  %s11 = inlined_call_operand.vmem [shape: f32[2,1,32], index: 11, kind: input, shape index: {}]
  %s12 = inlined_call_operand.vmem [shape: f32[2,1,32], index: 12, kind: input, shape index: {}]
  %s13 = inlined_call_operand.vmem [shape: f32[2,1,32], index: 13, kind: input, shape index: {}]
  %s14 = inlined_call_operand.hbm [shape: f32[2,32,64], index: 14, kind: input, shape index: {}]
  %s15 = inlined_call_operand.vmem [shape: f32[2,1,64], index: 15, kind: input, shape index: {}]
  %s16 = inlined_call_operand.vmem [shape: f32[2,64,32], index: 16, kind: input, shape index: {}]
  %s17 = inlined_call_operand.vmem [shape: f32[2,1,32], index: 17, kind: input, shape index: {}]
  %s18 = inlined_call_operand.vmem [shape: f32[2,1,32], index: 18, kind: input, shape index: {}]
  %s19 = inlined_call_operand.vmem [shape: f32[2,1,32], index: 19, kind: input, shape index: {}]
  %s20 = inlined_call_operand.vmem [shape: f32[32,3], index: 20, kind: input, shape index: {}]
  %s21 = inlined_call_operand.vmem [shape: f32[1,3], index: 21, kind: input, shape index: {}]
  %s22 = inlined_call_operand.hbm [shape: f32[2,3], index: 22, kind: output, shape index: {}]
  %s23 = sld [smem:[#allocation0]]
  $region106: #{tpu_custom_call.1} parent=0
    _
  %s25 = ssub.s32 1, %s23
  %s26 = scalar_select 0, %s25, %s23
  $region1: #{tpu_custom_call.1} parent=0
    #allocation2 [shape = 'u8[32768]{0}', space=vmem, size = 0x8000, scoped, tag = 'input window, operand 10, single buffered']
    #allocation3 [shape = 's32[1]{0}', space=sflag, size = 0x4, scoped, tag = 'scoped memory for tpu_custom_call.1']
    #allocation4 [shape = 's32[1]{0}', space=sflag, size = 0x4, scoped, tag = 'scoped memory for tpu_custom_call.1']
    #allocation5 [shape = 'u8[32768]{0}', space=vmem, size = 0x8000, scoped, tag = 'input window, operand 14, single buffered']
    #allocation6 [shape = 's32[1]{0}', space=sflag, size = 0x4, scoped, tag = 'scoped memory for tpu_custom_call.1']
    #allocation7 [shape = 'u8[1024]{0}', space=vmem, size = 0x400, scoped, tag = 'output window, operand 0, single buffered']
    %27 = vsyncpa [#allocation3], 0
    %28 = vsyncpa [#allocation6], 0
    %29 = vsyncpa [#allocation4], 0
    // Predicated region
    $region2: #{tpu_custom_call.1} parent=1 // pred_check
      _
    $region3: #{tpu_custom_call.1} parent=1 // pred_check_branch
      %31 = sbr.rel (0) target = $region5
    $region4: #{tpu_custom_call.1} parent=1 // pred_region
      _
    $region5: #{tpu_custom_call.1} parent=1 // pred_fallthru
      _
    // Predicated region
    $region6: #{tpu_custom_call.1} parent=1 // pred_check
      _
    $region7: #{tpu_custom_call.1} parent=1 // pred_check_branch
      %33 = sbr.rel (0) target = $region9
    $region8: #{tpu_custom_call.1} parent=1 // pred_region
      _
    $region9: #{tpu_custom_call.1} parent=1 // pred_fallthru
      _
    // Predicated region
    $region10: #{tpu_custom_call.1} parent=1 // pred_check
      _
    $region11: #{tpu_custom_call.1} parent=1 // pred_check_branch
      %35 = sbr.rel (0) target = $region13
    $region12: #{tpu_custom_call.1} parent=1 // pred_region
      _
    $region13: #{tpu_custom_call.1} parent=1 // pred_fallthru
      _
    // Predicated region
    $region14: #{tpu_custom_call.1} parent=1 // pred_check
      _
    $region15: #{tpu_custom_call.1} parent=1 // pred_check_branch
      %37 = sbr.rel (0) target = $region17
    $region16: #{tpu_custom_call.1} parent=1 // pred_region
      _
    $region17: #{tpu_custom_call.1} parent=1 // pred_fallthru
      _
    // Predicated region
    $region18: #{tpu_custom_call.1} parent=1 // pred_check
      _
    $region19: #{tpu_custom_call.1} parent=1 // pred_check_branch
      %39 = sbr.rel (0) target = $region21
    $region20: #{tpu_custom_call.1} parent=1 // pred_region
      _
    $region21: #{tpu_custom_call.1} parent=1 // pred_fallthru
      _
    // Predicated region
    $region22: #{tpu_custom_call.1} parent=1 // pred_check
      _
    $region23: #{tpu_custom_call.1} parent=1 // pred_check_branch
      %41 = sbr.rel (0) target = $region25
    $region24: #{tpu_custom_call.1} parent=1 // pred_region
      _
    $region25: #{tpu_custom_call.1} parent=1 // pred_fallthru
      _
    // Predicated region
    $region26: #{tpu_custom_call.1} parent=1 // pred_check
      _
    $region27: #{tpu_custom_call.1} parent=1 // pred_check_branch
      %43 = sbr.rel (0) target = $region29
    $region28: #{tpu_custom_call.1} parent=1 // pred_region
      _
    $region29: #{tpu_custom_call.1} parent=1 // pred_fallthru
      _
    // Predicated region
    $region30: #{tpu_custom_call.1} parent=1 // pred_check
      _
    $region31: #{tpu_custom_call.1} parent=1 // pred_check_branch
      %45 = sbr.rel (0) target = $region33
    $region32: #{tpu_custom_call.1} parent=1 // pred_region
      _
    $region33: #{tpu_custom_call.1} parent=1 // pred_fallthru
      _
    // Predicated region
    $region34: #{tpu_custom_call.1} parent=1 // pred_check
      _
    $region35: #{tpu_custom_call.1} parent=1 // pred_check_branch
      %47 = sbr.rel (0) target = $region37
    $region36: #{tpu_custom_call.1} parent=1 // pred_region
      _
    $region37: #{tpu_custom_call.1} parent=1 // pred_fallthru
      _
    // Predicated region
    $region38: #{tpu_custom_call.1} parent=1 // pred_check
      _
    $region39: #{tpu_custom_call.1} parent=1 // pred_check_branch
      %49 = sbr.rel (0) target = $region41
    $region40: #{tpu_custom_call.1} parent=1 // pred_region
      _
    $region41: #{tpu_custom_call.1} parent=1 // pred_fallthru
      _
    // Predicated region
    $region42: #{tpu_custom_call.1} parent=1 // pred_check
      _
    $region43: #{tpu_custom_call.1} parent=1 // pred_check_branch
      %51 = sbr.rel (0) target = $region45
    $region44: #{tpu_custom_call.1} parent=1 // pred_region
      %s53 = ssub.s32 1024, 1024
      %54 = vsyncadd [#allocation3], %s53
      %s55 = sshll.u32 [#allocation2], 4
      %s56 = int_to_ptr.vmem [resolvable:$true] %s55
      %61 = dma.hbm_to_vmem [thread:$0]  %s10, 1024, %s56, [#allocation3], 128, 128, 8
    $region45: #{tpu_custom_call.1} parent=1 // pred_fallthru
      _
    // Predicated region
    $region46: #{tpu_custom_call.1} parent=1 // pred_check
      _
    $region47: #{tpu_custom_call.1} parent=1 // pred_check_branch
      %63 = sbr.rel (0) target = $region49
    $region48: #{tpu_custom_call.1} parent=1 // pred_region
      _
    $region49: #{tpu_custom_call.1} parent=1 // pred_fallthru
      _
    // Predicated region
    $region50: #{tpu_custom_call.1} parent=1 // pred_check
      _
    $region51: #{tpu_custom_call.1} parent=1 // pred_check_branch
      %65 = sbr.rel (0) target = $region53
    $region52: #{tpu_custom_call.1} parent=1 // pred_region
      _
    $region53: #{tpu_custom_call.1} parent=1 // pred_fallthru
      _
    // Predicated region
    $region54: #{tpu_custom_call.1} parent=1 // pred_check
      _
    $region55: #{tpu_custom_call.1} parent=1 // pred_check_branch
      %67 = sbr.rel (0) target = $region57
    $region56: #{tpu_custom_call.1} parent=1 // pred_region
      _
    $region57: #{tpu_custom_call.1} parent=1 // pred_fallthru
      _
    // Predicated region
    $region58: #{tpu_custom_call.1} parent=1 // pred_check
      _
    $region59: #{tpu_custom_call.1} parent=1 // pred_check_branch
      %69 = sbr.rel (0) target = $region61
    $region60: #{tpu_custom_call.1} parent=1 // pred_region
      %s71 = ssub.s32 1024, 1024
      %72 = vsyncadd [#allocation6], %s71
      %s73 = sshll.u32 [#allocation5], 4
      %s74 = int_to_ptr.vmem [resolvable:$true] %s73
      %79 = dma.hbm_to_vmem [thread:$0]  %s14, 1024, %s74, [#allocation6], 128, 128, 8
    $region61: #{tpu_custom_call.1} parent=1 // pred_fallthru
      _
    // Predicated region
    $region62: #{tpu_custom_call.1} parent=1 // pred_check
      _
    $region63: #{tpu_custom_call.1} parent=1 // pred_check_branch
      %81 = sbr.rel (0) target = $region65
    $region64: #{tpu_custom_call.1} parent=1 // pred_region
      _
    $region65: #{tpu_custom_call.1} parent=1 // pred_fallthru
      _
    // Predicated region
    $region66: #{tpu_custom_call.1} parent=1 // pred_check
      _
    $region67: #{tpu_custom_call.1} parent=1 // pred_check_branch
      %83 = sbr.rel (0) target = $region69
    $region68: #{tpu_custom_call.1} parent=1 // pred_region
      _
    $region69: #{tpu_custom_call.1} parent=1 // pred_fallthru
      _
    // Predicated region
    $region70: #{tpu_custom_call.1} parent=1 // pred_check
      _
    $region71: #{tpu_custom_call.1} parent=1 // pred_check_branch
      %85 = sbr.rel (0) target = $region73
    $region72: #{tpu_custom_call.1} parent=1 // pred_region
      _
    $region73: #{tpu_custom_call.1} parent=1 // pred_fallthru
      _
    // Predicated region
    $region74: #{tpu_custom_call.1} parent=1 // pred_check
      _
    $region75: #{tpu_custom_call.1} parent=1 // pred_check_branch
      %87 = sbr.rel (0) target = $region77
    $region76: #{tpu_custom_call.1} parent=1 // pred_region
      _
    $region77: #{tpu_custom_call.1} parent=1 // pred_fallthru
      _
    // Predicated region
    $region78: #{tpu_custom_call.1} parent=1 // pred_check
      _
    $region79: #{tpu_custom_call.1} parent=1 // pred_check_branch
      %89 = sbr.rel (0) target = $region81
    $region80: #{tpu_custom_call.1} parent=1 // pred_region
      _
    $region81: #{tpu_custom_call.1} parent=1 // pred_fallthru
      _
    // Predicated region
    $region82: #{tpu_custom_call.1} parent=1 // pred_check
      _
    $region83: #{tpu_custom_call.1} parent=1 // pred_check_branch
      %91 = sbr.rel (0) target = $region85
    $region84: #{tpu_custom_call.1} parent=1 // pred_region
      _
    $region85: #{tpu_custom_call.1} parent=1 // pred_fallthru
      _
    // Predicated region
    $region86: #{tpu_custom_call.1} parent=1 // pred_check
      _
    $region87: #{tpu_custom_call.1} parent=1 // pred_check_branch
      %93 = sbr.rel (0) target = $region89
    $region88: #{tpu_custom_call.1} parent=1 // pred_region
      _
    $region89: #{tpu_custom_call.1} parent=1 // pred_fallthru
      _
    // Predicated region
    $region90: #{tpu_custom_call.1} parent=1 // pred_check
      _
    $region91: #{tpu_custom_call.1} parent=1 // pred_check_branch
      %95 = sbr.rel (0) target = $region93
    $region92: #{tpu_custom_call.1} parent=1 // pred_region
      %96 = dma.done [#allocation3], 1024
    $region93: #{tpu_custom_call.1} parent=1 // pred_fallthru
      _
    // Predicated region
    $region94: #{tpu_custom_call.1} parent=1 // pred_check
      _
    $region95: #{tpu_custom_call.1} parent=1 // pred_check_branch
      %98 = sbr.rel (0) target = $region97
    $region96: #{tpu_custom_call.1} parent=1 // pred_region
      %99 = dma.done [#allocation6], 1024
    $region97: #{tpu_custom_call.1} parent=1 // pred_fallthru
      _
    %v100 = vld [vmem:[%s0] sm:$0xff]
    %v101 = vld [vmem:[%s0 + $0x8] sm:$0xff]
    %v102 = vld [vmem:[%s2] sm:$0xf]
    %v103 = vld [vmem:[%s3] sm:$0x1]
    %v105 = vlaneseq
    %v106 = vshrl.u32 %v105, 7
    %v107 = vsub.s32 0, %v106
    %v108 = vrot.slane %v103, %v107
    %vm110 = vcmask 31744
    %v112 = vsel %vm110, %v100, 0
    %v115 = vsel %vm110, %v101, 0
    %vm117 = vcmask 1043456
    %v119 = vsel %vm117, %v102, 0
    %121 = vmatprep.subr.mxu0 0.0
    %122 = vmatpush1.msra.mxu0 %v119
    %123 = vmatprep.subr.mxu0 0.0
    %124 = vmatpush1.msra.mxu0 0.0
    %125 = vmatprep.subr.mxu0 0.0
    %126 = vmatpush1.msra.mxu0 0.0
    %127 = vmatprep.subr.mxu0 0.0
    %128 = vmatpush1.msra.mxu0 0.0
    %129 = vmatprep.subr.mxu0 0.0
    %130 = vmatpush1.msra.mxu0 0.0
    %131 = vmatprep.subr.mxu0 0.0
    %132 = vmatpush1.msra.mxu0 0.0
    %133 = vmatprep.subr.mxu0 0.0
    %134 = vmatpush1.msra.mxu0 0.0
    %135 = vmatprep.subr.mxu0 0.0
    %136 = vmatpush1.msra.mxu0 0.0
    %137 = vmatprep.subr.mxu0 0.0
    %138 = vmatpush1.msra.mxu0 0.0
    %139 = vmatprep.subr.mxu0 0.0
    %140 = vmatpush1.msra.mxu0 0.0
    %141 = vmatprep.subr.mxu0 0.0
    %142 = vmatpush1.msra.mxu0 0.0
    %143 = vmatprep.subr.mxu0 0.0
    %144 = vmatpush1.msra.mxu0 0.0
    %145 = vmatprep.subr.mxu0 0.0
    %146 = vmatpush1.msra.mxu0 0.0
    %147 = vmatprep.subr.mxu0 0.0
    %148 = vmatpush1.msra.mxu0 0.0
    %149 = vmatprep.subr.mxu0 0.0
    %150 = vmatpush1.msra.mxu0 0.0
    %151 = vmatprep.subr.mxu0 0.0
    %152 = vmatpush1.msra.mxu0 0.0
    %153 = vmatprep.subr.mxu0 0.0
    %154 = vmatpush1.msra.mxu0 0.0
    %155 = vmatprep.subr.mxu0 0.0
    %156 = vmatpush1.msra.mxu0 0.0
    %157 = vmatprep.subr.mxu0 0.0
    %158 = vmatpush1.msra.mxu0 0.0
    %159 = vmatprep.subr.mxu0 0.0
    %160 = vmatpush1.msra.mxu0 0.0
    %161 = vmatprep.subr.mxu0 0.0
    %162 = vmatpush1.msra.mxu0 0.0
    %163 = vmatprep.subr.mxu0 0.0
    %164 = vmatpush1.msra.mxu0 0.0
    %165 = vmatprep.subr.mxu0 0.0
    %166 = vmatpush1.msra.mxu0 0.0
    %167 = vmatprep.subr.mxu0 0.0
    %168 = vmatpush1.msra.mxu0 0.0
    %169 = vmatprep.subr.mxu0 0.0
    %170 = vmatpush1.msra.mxu0 0.0
    %171 = vmatprep.subr.mxu0 0.0
    %172 = vmatpush1.msra.mxu0 0.0
    %173 = vmatprep.subr.mxu0 0.0
    %174 = vmatpush1.msra.mxu0 0.0
    %175 = vmatprep.subr.mxu0 0.0
    %176 = vmatpush1.msra.mxu0 0.0
    %177 = vmatprep.subr.mxu0 0.0
    %178 = vmatpush1.msra.mxu0 0.0
    %179 = vmatprep.subr.mxu0 0.0
    %180 = vmatpush1.msra.mxu0 0.0
    %181 = vmatprep.subr.mxu0 0.0
    %182 = vmatpush1.msra.mxu0 0.0
    %183 = vmatprep.subr.mxu0 0.0
    %184 = vmatpush1.msra.mxu0 0.0
    %185 = vmatprep.mubr.f32.mxu0 0.0
    %186 = vmatmul.mubr.f32.gmra.mrb[0].mxu0 %v112
    %v187 = vpop.f32.mrb[0].mxu0
    %v188 = vadd.f32 %v108, %v187
    %v189 = vpop.f32.mrb[0].mxu0
    %190 = vmatprep.mubr.f32.mxu0 0.0
    %191 = vmatmul.mubr.f32.gmra.mrb[0].mxu0 %v115
    %v192 = vpop.f32.mrb[0].mxu0
    %v193 = vadd.f32 %v108, %v192
    %v194 = vpop.f32.mrb[0].mxu0
    %195 = vdwg.mxu0
    %v196 = vld [vmem:[%s1] sm:$0xff]
    %v197 = vld [vmem:[%s1 + $0x8] sm:$0xff]
    %v198 = vadd.f32 %v188, %v196
    %v199 = vadd.f32 %v193, %v197
    %v200 = vld [vmem:[%s4] sm:$0xff]
    %v201 = vld [vmem:[%s4 + $0x8] sm:$0xff]
    %v202 = vld [vmem:[%s4 + $0x10] sm:$0xff]
    %v203 = vld [vmem:[%s4 + $0x18] sm:$0xff]
    %v204 = vld [vmem:[%s7] sm:$0x1]
    %v206 = vlaneseq
    %v207 = vshrl.u32 %v206, 7
    %v208 = vsub.s32 0, %v207
    %v209 = vrot.slane %v204, %v208
    %vm211 = vcmask 261120
    %v213 = vsel %vm211, %v198, 0
    %v216 = vsel %vm211, %v199, 0
    %218 = vmatprep.subr.mxu0 0.0
    %219 = vmatpush1.msra.mxu0 %v200
    %220 = vmatprep.subr.mxu0 0.0
    %221 = vmatpush1.msra.mxu0 %v201
    %222 = vmatprep.subr.mxu0 0.0
    %223 = vmatpush1.msra.mxu0 %v202
    %224 = vmatprep.subr.mxu0 0.0
    %225 = vmatpush1.msra.mxu0 %v203
    %226 = vmatprep.subr.mxu0 0.0
    %227 = vmatpush1.msra.mxu0 0.0
    %228 = vmatprep.subr.mxu0 0.0
    %229 = vmatpush1.msra.mxu0 0.0
    %230 = vmatprep.subr.mxu0 0.0
    %231 = vmatpush1.msra.mxu0 0.0
    %232 = vmatprep.subr.mxu0 0.0
    %233 = vmatpush1.msra.mxu0 0.0
    %234 = vmatprep.subr.mxu0 0.0
    %235 = vmatpush1.msra.mxu0 0.0
    %236 = vmatprep.subr.mxu0 0.0
    %237 = vmatpush1.msra.mxu0 0.0
    %238 = vmatprep.subr.mxu0 0.0
    %239 = vmatpush1.msra.mxu0 0.0
    %240 = vmatprep.subr.mxu0 0.0
    %241 = vmatpush1.msra.mxu0 0.0
    %242 = vmatprep.subr.mxu0 0.0
    %243 = vmatpush1.msra.mxu0 0.0
    %244 = vmatprep.subr.mxu0 0.0
    %245 = vmatpush1.msra.mxu0 0.0
    %246 = vmatprep.subr.mxu0 0.0
    %247 = vmatpush1.msra.mxu0 0.0
    %248 = vmatprep.subr.mxu0 0.0
    %249 = vmatpush1.msra.mxu0 0.0
    %250 = vmatprep.subr.mxu0 0.0
    %251 = vmatpush1.msra.mxu0 0.0
    %252 = vmatprep.subr.mxu0 0.0
    %253 = vmatpush1.msra.mxu0 0.0
    %254 = vmatprep.subr.mxu0 0.0
    %255 = vmatpush1.msra.mxu0 0.0
    %256 = vmatprep.subr.mxu0 0.0
    %257 = vmatpush1.msra.mxu0 0.0
    %258 = vmatprep.subr.mxu0 0.0
    %259 = vmatpush1.msra.mxu0 0.0
    %260 = vmatprep.subr.mxu0 0.0
    %261 = vmatpush1.msra.mxu0 0.0
    %262 = vmatprep.subr.mxu0 0.0
    %263 = vmatpush1.msra.mxu0 0.0
    %264 = vmatprep.subr.mxu0 0.0
    %265 = vmatpush1.msra.mxu0 0.0
    %266 = vmatprep.subr.mxu0 0.0
    %267 = vmatpush1.msra.mxu0 0.0
    %268 = vmatprep.subr.mxu0 0.0
    %269 = vmatpush1.msra.mxu0 0.0
    %270 = vmatprep.subr.mxu0 0.0
    %271 = vmatpush1.msra.mxu0 0.0
    %272 = vmatprep.subr.mxu0 0.0
    %273 = vmatpush1.msra.mxu0 0.0
    %274 = vmatprep.subr.mxu0 0.0
    %275 = vmatpush1.msra.mxu0 0.0
    %276 = vmatprep.subr.mxu0 0.0
    %277 = vmatpush1.msra.mxu0 0.0
    %278 = vmatprep.subr.mxu0 0.0
    %279 = vmatpush1.msra.mxu0 0.0
    %280 = vmatprep.subr.mxu0 0.0
    %281 = vmatpush1.msra.mxu0 0.0
    %282 = vmatprep.mubr.f32.mxu0 0.0
    %283 = vmatmul.mubr.f32.gmra.mrb[0].mxu0 %v213
    %v284 = vpop.f32.mrb[0].mxu0
    %v285 = vadd.f32 %v209, %v284
    %v286 = vpop.f32.mrb[0].mxu0
    %287 = vmatprep.mubr.f32.mxu0 0.0
    %288 = vmatmul.mubr.f32.gmra.mrb[0].mxu0 %v216
    %v289 = vpop.f32.mrb[0].mxu0
    %v290 = vadd.f32 %v209, %v289
    %v291 = vpop.f32.mrb[0].mxu0
    %292 = vdwg.mxu0
    %v293 = vld [vmem:[%s5] sm:$0xff]
    %v294 = vld [vmem:[%s5 + $0x8] sm:$0xff]
    %v295 = vld [vmem:[%s5 + $0x10] sm:$0xff]
    %v296 = vld [vmem:[%s5 + $0x18] sm:$0xff]
    %v297 = vld [vmem:[%s8] sm:$0x1]
    %v299 = vlaneseq
    %v300 = vshrl.u32 %v299, 7
    %v301 = vsub.s32 0, %v300
    %v302 = vrot.slane %v297, %v301
    %304 = vmatprep.subr.mxu0 0.0
    %305 = vmatpush1.msra.mxu0 %v293
    %306 = vmatprep.subr.mxu0 0.0
    %307 = vmatpush1.msra.mxu0 %v294
    %308 = vmatprep.subr.mxu0 0.0
    %309 = vmatpush1.msra.mxu0 %v295
    %310 = vmatprep.subr.mxu0 0.0
    %311 = vmatpush1.msra.mxu0 %v296
    %312 = vmatprep.subr.mxu0 0.0
    %313 = vmatpush1.msra.mxu0 0.0
    %314 = vmatprep.subr.mxu0 0.0
    %315 = vmatpush1.msra.mxu0 0.0
    %316 = vmatprep.subr.mxu0 0.0
    %317 = vmatpush1.msra.mxu0 0.0
    %318 = vmatprep.subr.mxu0 0.0
    %319 = vmatpush1.msra.mxu0 0.0
    %320 = vmatprep.subr.mxu0 0.0
    %321 = vmatpush1.msra.mxu0 0.0
    %322 = vmatprep.subr.mxu0 0.0
    %323 = vmatpush1.msra.mxu0 0.0
    %324 = vmatprep.subr.mxu0 0.0
    %325 = vmatpush1.msra.mxu0 0.0
    %326 = vmatprep.subr.mxu0 0.0
    %327 = vmatpush1.msra.mxu0 0.0
    %328 = vmatprep.subr.mxu0 0.0
    %329 = vmatpush1.msra.mxu0 0.0
    %330 = vmatprep.subr.mxu0 0.0
    %331 = vmatpush1.msra.mxu0 0.0
    %332 = vmatprep.subr.mxu0 0.0
    %333 = vmatpush1.msra.mxu0 0.0
    %334 = vmatprep.subr.mxu0 0.0
    %335 = vmatpush1.msra.mxu0 0.0
    %336 = vmatprep.subr.mxu0 0.0
    %337 = vmatpush1.msra.mxu0 0.0
    %338 = vmatprep.subr.mxu0 0.0
    %339 = vmatpush1.msra.mxu0 0.0
    %340 = vmatprep.subr.mxu0 0.0
    %341 = vmatpush1.msra.mxu0 0.0
    %342 = vmatprep.subr.mxu0 0.0
    %343 = vmatpush1.msra.mxu0 0.0
    %344 = vmatprep.subr.mxu0 0.0
    %345 = vmatpush1.msra.mxu0 0.0
    %346 = vmatprep.subr.mxu0 0.0
    %347 = vmatpush1.msra.mxu0 0.0
    %348 = vmatprep.subr.mxu0 0.0
    %349 = vmatpush1.msra.mxu0 0.0
    %350 = vmatprep.subr.mxu0 0.0
    %351 = vmatpush1.msra.mxu0 0.0
    %352 = vmatprep.subr.mxu0 0.0
    %353 = vmatpush1.msra.mxu0 0.0
    %354 = vmatprep.subr.mxu0 0.0
    %355 = vmatpush1.msra.mxu0 0.0
    %356 = vmatprep.subr.mxu0 0.0
    %357 = vmatpush1.msra.mxu0 0.0
    %358 = vmatprep.subr.mxu0 0.0
    %359 = vmatpush1.msra.mxu0 0.0
    %360 = vmatprep.subr.mxu0 0.0
    %361 = vmatpush1.msra.mxu0 0.0
    %362 = vmatprep.subr.mxu0 0.0
    %363 = vmatpush1.msra.mxu0 0.0
    %364 = vmatprep.subr.mxu0 0.0
    %365 = vmatpush1.msra.mxu0 0.0
    %366 = vmatprep.subr.mxu0 0.0
    %367 = vmatpush1.msra.mxu0 0.0
    %368 = vmatprep.mubr.f32.mxu0 0.0
    %369 = vmatmul.mubr.f32.gmra.mrb[0].mxu0 %v213
    %v370 = vpop.f32.mrb[0].mxu0
    %v371 = vadd.f32 %v302, %v370
    %v372 = vpop.f32.mrb[0].mxu0
    %373 = vmatprep.mubr.f32.mxu0 0.0
    %374 = vmatmul.mubr.f32.gmra.mrb[0].mxu0 %v216
    %v375 = vpop.f32.mrb[0].mxu0
    %v376 = vadd.f32 %v302, %v375
    %v377 = vpop.f32.mrb[0].mxu0
    %378 = vdwg.mxu0
    %v379 = vld [vmem:[%s6] sm:$0xff]
    %v380 = vld [vmem:[%s6 + $0x8] sm:$0xff]
    %v381 = vld [vmem:[%s6 + $0x10] sm:$0xff]
    %v382 = vld [vmem:[%s6 + $0x18] sm:$0xff]
    %v383 = vld [vmem:[%s9] sm:$0x1]
    %v385 = vlaneseq
    %v386 = vshrl.u32 %v385, 7
    %v387 = vsub.s32 0, %v386
    %v388 = vrot.slane %v383, %v387
    %390 = vmatprep.subr.mxu0 0.0
    %391 = vmatpush1.msra.mxu0 %v379
    %392 = vmatprep.subr.mxu0 0.0
    %393 = vmatpush1.msra.mxu0 %v380
    %394 = vmatprep.subr.mxu0 0.0
    %395 = vmatpush1.msra.mxu0 %v381
    %396 = vmatprep.subr.mxu0 0.0
    %397 = vmatpush1.msra.mxu0 %v382
    %398 = vmatprep.subr.mxu0 0.0
    %399 = vmatpush1.msra.mxu0 0.0
    %400 = vmatprep.subr.mxu0 0.0
    %401 = vmatpush1.msra.mxu0 0.0
    %402 = vmatprep.subr.mxu0 0.0
    %403 = vmatpush1.msra.mxu0 0.0
    %404 = vmatprep.subr.mxu0 0.0
    %405 = vmatpush1.msra.mxu0 0.0
    %406 = vmatprep.subr.mxu0 0.0
    %407 = vmatpush1.msra.mxu0 0.0
    %408 = vmatprep.subr.mxu0 0.0
    %409 = vmatpush1.msra.mxu0 0.0
    %410 = vmatprep.subr.mxu0 0.0
    %411 = vmatpush1.msra.mxu0 0.0
    %412 = vmatprep.subr.mxu0 0.0
    %413 = vmatpush1.msra.mxu0 0.0
    %414 = vmatprep.subr.mxu0 0.0
    %415 = vmatpush1.msra.mxu0 0.0
    %416 = vmatprep.subr.mxu0 0.0
    %417 = vmatpush1.msra.mxu0 0.0
    %418 = vmatprep.subr.mxu0 0.0
    %419 = vmatpush1.msra.mxu0 0.0
    %420 = vmatprep.subr.mxu0 0.0
    %421 = vmatpush1.msra.mxu0 0.0
    %422 = vmatprep.subr.mxu0 0.0
    %423 = vmatpush1.msra.mxu0 0.0
    %424 = vmatprep.subr.mxu0 0.0
    %425 = vmatpush1.msra.mxu0 0.0
    %426 = vmatprep.subr.mxu0 0.0
    %427 = vmatpush1.msra.mxu0 0.0
    %428 = vmatprep.subr.mxu0 0.0
    %429 = vmatpush1.msra.mxu0 0.0
    %430 = vmatprep.subr.mxu0 0.0
    %431 = vmatpush1.msra.mxu0 0.0
    %432 = vmatprep.subr.mxu0 0.0
    %433 = vmatpush1.msra.mxu0 0.0
    %434 = vmatprep.subr.mxu0 0.0
    %435 = vmatpush1.msra.mxu0 0.0
    %436 = vmatprep.subr.mxu0 0.0
    %437 = vmatpush1.msra.mxu0 0.0
    %438 = vmatprep.subr.mxu0 0.0
    %439 = vmatpush1.msra.mxu0 0.0
    %440 = vmatprep.subr.mxu0 0.0
    %441 = vmatpush1.msra.mxu0 0.0
    %442 = vmatprep.subr.mxu0 0.0
    %443 = vmatpush1.msra.mxu0 0.0
    %444 = vmatprep.subr.mxu0 0.0
    %445 = vmatpush1.msra.mxu0 0.0
    %446 = vmatprep.subr.mxu0 0.0
    %447 = vmatpush1.msra.mxu0 0.0
    %448 = vmatprep.subr.mxu0 0.0
    %449 = vmatpush1.msra.mxu0 0.0
    %450 = vmatprep.subr.mxu0 0.0
    %451 = vmatpush1.msra.mxu0 0.0
    %452 = vmatprep.subr.mxu0 0.0
    %453 = vmatpush1.msra.mxu0 0.0
    %454 = vmatprep.mubr.f32.mxu0 0.0
    %455 = vmatmul.mubr.f32.gmra.mrb[0].mxu0 %v213
    %v456 = vpop.f32.mrb[0].mxu0
    %v457 = vadd.f32 %v388, %v456
    %v458 = vpop.f32.mrb[0].mxu0
    %459 = vmatprep.mubr.f32.mxu0 0.0
    %460 = vmatmul.mubr.f32.gmra.mrb[0].mxu0 %v216
    %v461 = vpop.f32.mrb[0].mxu0
    %v462 = vadd.f32 %v388, %v461
    %v463 = vpop.f32.mrb[0].mxu0
    %464 = vdwg.mxu0
    %v465 = vld [vmem:[#allocation2] sm:$0xff]
    %v466 = vld [vmem:[#allocation2 + $0x8] sm:$0xff]
    %v467 = vld [vmem:[#allocation2 + $0x10] sm:$0xff]
    %v468 = vld [vmem:[#allocation2 + $0x18] sm:$0xff]
    %vm469 = vcmask 64512
    %v471 = vsel %vm469, %v285, 0
    %v474 = vsel %vm469, %v371, 0
    %476 = vmatprep.subr.mxu0 0.0
    %477 = vmatpush1.xpose.msra.mxu0 %v474
    %478 = vmatprep.subr.mxu0 0.0
    %479 = vmatpush1.xpose.msra.mxu0 0.0
    %480 = vmatprep.subr.mxu0 0.0
    %481 = vmatpush1.xpose.msra.mxu0 0.0
    %482 = vmatprep.subr.mxu0 0.0
    %483 = vmatpush1.xpose.msra.mxu0 0.0
    %484 = vmatprep.subr.mxu0 0.0
    %485 = vmatpush1.xpose.msra.mxu0 0.0
    %486 = vmatprep.subr.mxu0 0.0
    %487 = vmatpush1.xpose.msra.mxu0 0.0
    %488 = vmatprep.subr.mxu0 0.0
    %489 = vmatpush1.xpose.msra.mxu0 0.0
    %490 = vmatprep.subr.mxu0 0.0
    %491 = vmatpush1.xpose.msra.mxu0 0.0
    %492 = vmatprep.subr.mxu0 0.0
    %493 = vmatpush1.xpose.msra.mxu0 0.0
    %494 = vmatprep.subr.mxu0 0.0
    %495 = vmatpush1.xpose.msra.mxu0 0.0
    %496 = vmatprep.subr.mxu0 0.0
    %497 = vmatpush1.xpose.msra.mxu0 0.0
    %498 = vmatprep.subr.mxu0 0.0
    %499 = vmatpush1.xpose.msra.mxu0 0.0
    %500 = vmatprep.subr.mxu0 0.0
    %501 = vmatpush1.xpose.msra.mxu0 0.0
    %502 = vmatprep.subr.mxu0 0.0
    %503 = vmatpush1.xpose.msra.mxu0 0.0
    %504 = vmatprep.subr.mxu0 0.0
    %505 = vmatpush1.xpose.msra.mxu0 0.0
    %506 = vmatprep.subr.mxu0 0.0
    %507 = vmatpush1.xpose.msra.mxu0 0.0
    %508 = vmatprep.subr.mxu0 0.0
    %509 = vmatpush1.xpose.msra.mxu0 0.0
    %510 = vmatprep.subr.mxu0 0.0
    %511 = vmatpush1.xpose.msra.mxu0 0.0
    %512 = vmatprep.subr.mxu0 0.0
    %513 = vmatpush1.xpose.msra.mxu0 0.0
    %514 = vmatprep.subr.mxu0 0.0
    %515 = vmatpush1.xpose.msra.mxu0 0.0
    %516 = vmatprep.subr.mxu0 0.0
    %517 = vmatpush1.xpose.msra.mxu0 0.0
    %518 = vmatprep.subr.mxu0 0.0
    %519 = vmatpush1.xpose.msra.mxu0 0.0
    %520 = vmatprep.subr.mxu0 0.0
    %521 = vmatpush1.xpose.msra.mxu0 0.0
    %522 = vmatprep.subr.mxu0 0.0
    %523 = vmatpush1.xpose.msra.mxu0 0.0
    %524 = vmatprep.subr.mxu0 0.0
    %525 = vmatpush1.xpose.msra.mxu0 0.0
    %526 = vmatprep.subr.mxu0 0.0
    %527 = vmatpush1.xpose.msra.mxu0 0.0
    %528 = vmatprep.subr.mxu0 0.0
    %529 = vmatpush1.xpose.msra.mxu0 0.0
    %530 = vmatprep.subr.mxu0 0.0
    %531 = vmatpush1.xpose.msra.mxu0 0.0
    %532 = vmatprep.subr.mxu0 0.0
    %533 = vmatpush1.xpose.msra.mxu0 0.0
    %534 = vmatprep.subr.mxu0 0.0
    %535 = vmatpush1.xpose.msra.mxu0 0.0
    %536 = vmatprep.subr.mxu0 0.0
    %537 = vmatpush1.xpose.msra.mxu0 0.0
    %538 = vmatprep.subr.mxu0 0.0
    %539 = vmatpush1.xpose.msra.mxu0 0.0
    %540 = vmatprep.mubr.f32.mxu0 0.0
    %541 = vmatmul.mubr.f32.gmra.mrb[0].mxu0 %v471
    %v542 = vpop.f32.mrb[0].mxu0
    %v543 = vadd.f32 0.0, %v542
    %v544 = vpop.f32.mrb[0].mxu0
    %545 = vdwg.mxu0
    %v547 = vsel %vm469, %v290, 0
    %v550 = vsel %vm469, %v376, 0
    %552 = vmatprep.subr.mxu0 0.0
    %553 = vmatpush1.xpose.msra.mxu0 %v550
    %554 = vmatprep.subr.mxu0 0.0
    %555 = vmatpush1.xpose.msra.mxu0 0.0
    %556 = vmatprep.subr.mxu0 0.0
    %557 = vmatpush1.xpose.msra.mxu0 0.0
    %558 = vmatprep.subr.mxu0 0.0
    %559 = vmatpush1.xpose.msra.mxu0 0.0
    %560 = vmatprep.subr.mxu0 0.0
    %561 = vmatpush1.xpose.msra.mxu0 0.0
    %562 = vmatprep.subr.mxu0 0.0
    %563 = vmatpush1.xpose.msra.mxu0 0.0
    %564 = vmatprep.subr.mxu0 0.0
    %565 = vmatpush1.xpose.msra.mxu0 0.0
    %566 = vmatprep.subr.mxu0 0.0
    %567 = vmatpush1.xpose.msra.mxu0 0.0
    %568 = vmatprep.subr.mxu0 0.0
    %569 = vmatpush1.xpose.msra.mxu0 0.0
    %570 = vmatprep.subr.mxu0 0.0
    %571 = vmatpush1.xpose.msra.mxu0 0.0
    %572 = vmatprep.subr.mxu0 0.0
    %573 = vmatpush1.xpose.msra.mxu0 0.0
    %574 = vmatprep.subr.mxu0 0.0
    %575 = vmatpush1.xpose.msra.mxu0 0.0
    %576 = vmatprep.subr.mxu0 0.0
    %577 = vmatpush1.xpose.msra.mxu0 0.0
    %578 = vmatprep.subr.mxu0 0.0
    %579 = vmatpush1.xpose.msra.mxu0 0.0
    %580 = vmatprep.subr.mxu0 0.0
    %581 = vmatpush1.xpose.msra.mxu0 0.0
    %582 = vmatprep.subr.mxu0 0.0
    %583 = vmatpush1.xpose.msra.mxu0 0.0
    %584 = vmatprep.subr.mxu0 0.0
    %585 = vmatpush1.xpose.msra.mxu0 0.0
    %586 = vmatprep.subr.mxu0 0.0
    %587 = vmatpush1.xpose.msra.mxu0 0.0
    %588 = vmatprep.subr.mxu0 0.0
    %589 = vmatpush1.xpose.msra.mxu0 0.0
    %590 = vmatprep.subr.mxu0 0.0
    %591 = vmatpush1.xpose.msra.mxu0 0.0
    %592 = vmatprep.subr.mxu0 0.0
    %593 = vmatpush1.xpose.msra.mxu0 0.0
    %594 = vmatprep.subr.mxu0 0.0
    %595 = vmatpush1.xpose.msra.mxu0 0.0
    %596 = vmatprep.subr.mxu0 0.0
    %597 = vmatpush1.xpose.msra.mxu0 0.0
    %598 = vmatprep.subr.mxu0 0.0
    %599 = vmatpush1.xpose.msra.mxu0 0.0
    %600 = vmatprep.subr.mxu0 0.0
    %601 = vmatpush1.xpose.msra.mxu0 0.0
    %602 = vmatprep.subr.mxu0 0.0
    %603 = vmatpush1.xpose.msra.mxu0 0.0
    %604 = vmatprep.subr.mxu0 0.0
    %605 = vmatpush1.xpose.msra.mxu0 0.0
    %606 = vmatprep.subr.mxu0 0.0
    %607 = vmatpush1.xpose.msra.mxu0 0.0
    %608 = vmatprep.subr.mxu0 0.0
    %609 = vmatpush1.xpose.msra.mxu0 0.0
    %610 = vmatprep.subr.mxu0 0.0
    %611 = vmatpush1.xpose.msra.mxu0 0.0
    %612 = vmatprep.subr.mxu0 0.0
    %613 = vmatpush1.xpose.msra.mxu0 0.0
    %614 = vmatprep.subr.mxu0 0.0
    %615 = vmatpush1.xpose.msra.mxu0 0.0
    %616 = vmatprep.mubr.f32.mxu0 0.0
    %617 = vmatmul.mubr.f32.gmra.mrb[0].mxu0 %v547
    %v618 = vpop.f32.mrb[0].mxu0
    %v619 = vadd.f32 0.0, %v618
    %v620 = vpop.f32.mrb[0].mxu0
    %621 = vdwg.mxu0
    %v622 = vmul.f32 %v543, 0.35355338
    %v623 = vmul.f32 %v619, 0.35355338
    %v624 = vsel %vm469, %v622, -inf
    %625 = vmax.xlane.f32.xlu0 %v624
    %v626 = vpop.xlane.xlu0 %625
    %v627 = vsel %vm469, %v623, -inf
    %628 = vmax.xlane.f32.xlu0 %v627
    %v629 = vpop.xlane.xlu0 %628
    %v630 = vsub.f32 %v622, %v626
    %v631 = vsub.f32 %v623, %v629
    %v632 = vmul.f32 %v630, 1.442695
    %v633 = vpow.pop %v632
    %v634 = vmul.f32 %v631, 1.442695
    %v635 = vpow.pop %v634
    %v636 = vsel %vm469, %v633, 0.0
    %637 = vadd.xlane.f32.xlu0 %v636
    %v638 = vpop.xlane.xlu0 %637
    %v639 = vsel %vm469, %v635, 0.0
    %640 = vadd.xlane.f32.xlu0 %v639
    %v641 = vpop.xlane.xlu0 %640
    %v642 = vrcp.pop %v638
    %v643 = vrcp.pop %v641
    %v644 = vmul.f32 %v633, %v642
    %v645 = vmul.f32 %v635, %v643
    %v647 = vsel %vm469, %v644, 0
    %649 = vmatprep.subr.mxu0 0.0
    %650 = vmatpush1.msra.mxu0 %v457
    %651 = vmatprep.subr.mxu0 0.0
    %652 = vmatpush1.msra.mxu0 0.0
    %653 = vmatprep.subr.mxu0 0.0
    %654 = vmatpush1.msra.mxu0 0.0
    %655 = vmatprep.subr.mxu0 0.0
    %656 = vmatpush1.msra.mxu0 0.0
    %657 = vmatprep.subr.mxu0 0.0
    %658 = vmatpush1.msra.mxu0 0.0
    %659 = vmatprep.subr.mxu0 0.0
    %660 = vmatpush1.msra.mxu0 0.0
    %661 = vmatprep.subr.mxu0 0.0
    %662 = vmatpush1.msra.mxu0 0.0
    %663 = vmatprep.subr.mxu0 0.0
    %664 = vmatpush1.msra.mxu0 0.0
    %665 = vmatprep.subr.mxu0 0.0
    %666 = vmatpush1.msra.mxu0 0.0
    %667 = vmatprep.subr.mxu0 0.0
    %668 = vmatpush1.msra.mxu0 0.0
    %669 = vmatprep.subr.mxu0 0.0
    %670 = vmatpush1.msra.mxu0 0.0
    %671 = vmatprep.subr.mxu0 0.0
    %672 = vmatpush1.msra.mxu0 0.0
    %673 = vmatprep.subr.mxu0 0.0
    %674 = vmatpush1.msra.mxu0 0.0
    %675 = vmatprep.subr.mxu0 0.0
    %676 = vmatpush1.msra.mxu0 0.0
    %677 = vmatprep.subr.mxu0 0.0
    %678 = vmatpush1.msra.mxu0 0.0
    %679 = vmatprep.subr.mxu0 0.0
    %680 = vmatpush1.msra.mxu0 0.0
    %681 = vmatprep.subr.mxu0 0.0
    %682 = vmatpush1.msra.mxu0 0.0
    %683 = vmatprep.subr.mxu0 0.0
    %684 = vmatpush1.msra.mxu0 0.0
    %685 = vmatprep.subr.mxu0 0.0
    %686 = vmatpush1.msra.mxu0 0.0
    %687 = vmatprep.subr.mxu0 0.0
    %688 = vmatpush1.msra.mxu0 0.0
    %689 = vmatprep.subr.mxu0 0.0
    %690 = vmatpush1.msra.mxu0 0.0
    %691 = vmatprep.subr.mxu0 0.0
    %692 = vmatpush1.msra.mxu0 0.0
    %693 = vmatprep.subr.mxu0 0.0
    %694 = vmatpush1.msra.mxu0 0.0
    %695 = vmatprep.subr.mxu0 0.0
    %696 = vmatpush1.msra.mxu0 0.0
    %697 = vmatprep.subr.mxu0 0.0
    %698 = vmatpush1.msra.mxu0 0.0
    %699 = vmatprep.subr.mxu0 0.0
    %700 = vmatpush1.msra.mxu0 0.0
    %701 = vmatprep.subr.mxu0 0.0
    %702 = vmatpush1.msra.mxu0 0.0
    %703 = vmatprep.subr.mxu0 0.0
    %704 = vmatpush1.msra.mxu0 0.0
    %705 = vmatprep.subr.mxu0 0.0
    %706 = vmatpush1.msra.mxu0 0.0
    %707 = vmatprep.subr.mxu0 0.0
    %708 = vmatpush1.msra.mxu0 0.0
    %709 = vmatprep.subr.mxu0 0.0
    %710 = vmatpush1.msra.mxu0 0.0
    %711 = vmatprep.subr.mxu0 0.0
    %712 = vmatpush1.msra.mxu0 0.0
    %713 = vmatprep.mubr.f32.mxu0 0.0
    %714 = vmatmul.mubr.f32.gmra.mrb[0].mxu0 %v647
    %v715 = vpop.f32.mrb[0].mxu0
    %v716 = vadd.f32 0.0, %v715
    %v717 = vpop.f32.mrb[0].mxu0
    %718 = vdwg.mxu0
    %v720 = vsel %vm469, %v645, 0
    %722 = vmatprep.subr.mxu0 0.0
    %723 = vmatpush1.msra.mxu0 %v462
    %724 = vmatprep.subr.mxu0 0.0
    %725 = vmatpush1.msra.mxu0 0.0
    %726 = vmatprep.subr.mxu0 0.0
    %727 = vmatpush1.msra.mxu0 0.0
    %728 = vmatprep.subr.mxu0 0.0
    %729 = vmatpush1.msra.mxu0 0.0
    %730 = vmatprep.subr.mxu0 0.0
    %731 = vmatpush1.msra.mxu0 0.0
    %732 = vmatprep.subr.mxu0 0.0
    %733 = vmatpush1.msra.mxu0 0.0
    %734 = vmatprep.subr.mxu0 0.0
    %735 = vmatpush1.msra.mxu0 0.0
    %736 = vmatprep.subr.mxu0 0.0
    %737 = vmatpush1.msra.mxu0 0.0
    %738 = vmatprep.subr.mxu0 0.0
    %739 = vmatpush1.msra.mxu0 0.0
    %740 = vmatprep.subr.mxu0 0.0
    %741 = vmatpush1.msra.mxu0 0.0
    %742 = vmatprep.subr.mxu0 0.0
    %743 = vmatpush1.msra.mxu0 0.0
    %744 = vmatprep.subr.mxu0 0.0
    %745 = vmatpush1.msra.mxu0 0.0
    %746 = vmatprep.subr.mxu0 0.0
    %747 = vmatpush1.msra.mxu0 0.0
    %748 = vmatprep.subr.mxu0 0.0
    %749 = vmatpush1.msra.mxu0 0.0
    %750 = vmatprep.subr.mxu0 0.0
    %751 = vmatpush1.msra.mxu0 0.0
    %752 = vmatprep.subr.mxu0 0.0
    %753 = vmatpush1.msra.mxu0 0.0
    %754 = vmatprep.subr.mxu0 0.0
    %755 = vmatpush1.msra.mxu0 0.0
    %756 = vmatprep.subr.mxu0 0.0
    %757 = vmatpush1.msra.mxu0 0.0
    %758 = vmatprep.subr.mxu0 0.0
    %759 = vmatpush1.msra.mxu0 0.0
    %760 = vmatprep.subr.mxu0 0.0
    %761 = vmatpush1.msra.mxu0 0.0
    %762 = vmatprep.subr.mxu0 0.0
    %763 = vmatpush1.msra.mxu0 0.0
    %764 = vmatprep.subr.mxu0 0.0
    %765 = vmatpush1.msra.mxu0 0.0
    %766 = vmatprep.subr.mxu0 0.0
    %767 = vmatpush1.msra.mxu0 0.0
    %768 = vmatprep.subr.mxu0 0.0
    %769 = vmatpush1.msra.mxu0 0.0
    %770 = vmatprep.subr.mxu0 0.0
    %771 = vmatpush1.msra.mxu0 0.0
    %772 = vmatprep.subr.mxu0 0.0
    %773 = vmatpush1.msra.mxu0 0.0
    %774 = vmatprep.subr.mxu0 0.0
    %775 = vmatpush1.msra.mxu0 0.0
    %776 = vmatprep.subr.mxu0 0.0
    %777 = vmatpush1.msra.mxu0 0.0
    %778 = vmatprep.subr.mxu0 0.0
    %779 = vmatpush1.msra.mxu0 0.0
    %780 = vmatprep.subr.mxu0 0.0
    %781 = vmatpush1.msra.mxu0 0.0
    %782 = vmatprep.subr.mxu0 0.0
    %783 = vmatpush1.msra.mxu0 0.0
    %784 = vmatprep.subr.mxu0 0.0
    %785 = vmatpush1.msra.mxu0 0.0
    %786 = vmatprep.mubr.f32.mxu0 0.0
    %787 = vmatmul.mubr.f32.gmra.mrb[0].mxu0 %v720
    %v788 = vpop.f32.mrb[0].mxu0
    %v789 = vadd.f32 0.0, %v788
    %v790 = vpop.f32.mrb[0].mxu0
    %791 = vdwg.mxu0
    %792 = vrot.lane.b32.xlu0 %v285, 120
    %v793 = vpop.permute.xlu0 %792
    %794 = vrot.lane.b32.xlu0 %v371, 120
    %v795 = vpop.permute.xlu0 %794
    %v796 = vsel %vm469, %v793, 0
    %v798 = vsel %vm469, %v795, 0
    %800 = vmatprep.subr.mxu0 0.0
    %801 = vmatpush1.xpose.msra.mxu0 %v798
    %802 = vmatprep.subr.mxu0 0.0
    %803 = vmatpush1.xpose.msra.mxu0 0.0
    %804 = vmatprep.subr.mxu0 0.0
    %805 = vmatpush1.xpose.msra.mxu0 0.0
    %806 = vmatprep.subr.mxu0 0.0
    %807 = vmatpush1.xpose.msra.mxu0 0.0
    %808 = vmatprep.subr.mxu0 0.0
    %809 = vmatpush1.xpose.msra.mxu0 0.0
    %810 = vmatprep.subr.mxu0 0.0
    %811 = vmatpush1.xpose.msra.mxu0 0.0
    %812 = vmatprep.subr.mxu0 0.0
    %813 = vmatpush1.xpose.msra.mxu0 0.0
    %814 = vmatprep.subr.mxu0 0.0
    %815 = vmatpush1.xpose.msra.mxu0 0.0
    %816 = vmatprep.subr.mxu0 0.0
    %817 = vmatpush1.xpose.msra.mxu0 0.0
    %818 = vmatprep.subr.mxu0 0.0
    %819 = vmatpush1.xpose.msra.mxu0 0.0
    %820 = vmatprep.subr.mxu0 0.0
    %821 = vmatpush1.xpose.msra.mxu0 0.0
    %822 = vmatprep.subr.mxu0 0.0
    %823 = vmatpush1.xpose.msra.mxu0 0.0
    %824 = vmatprep.subr.mxu0 0.0
    %825 = vmatpush1.xpose.msra.mxu0 0.0
    %826 = vmatprep.subr.mxu0 0.0
    %827 = vmatpush1.xpose.msra.mxu0 0.0
    %828 = vmatprep.subr.mxu0 0.0
    %829 = vmatpush1.xpose.msra.mxu0 0.0
    %830 = vmatprep.subr.mxu0 0.0
    %831 = vmatpush1.xpose.msra.mxu0 0.0
    %832 = vmatprep.subr.mxu0 0.0
    %833 = vmatpush1.xpose.msra.mxu0 0.0
    %834 = vmatprep.subr.mxu0 0.0
    %835 = vmatpush1.xpose.msra.mxu0 0.0
    %836 = vmatprep.subr.mxu0 0.0
    %837 = vmatpush1.xpose.msra.mxu0 0.0
    %838 = vmatprep.subr.mxu0 0.0
    %839 = vmatpush1.xpose.msra.mxu0 0.0
    %840 = vmatprep.subr.mxu0 0.0
    %841 = vmatpush1.xpose.msra.mxu0 0.0
    %842 = vmatprep.subr.mxu0 0.0
    %843 = vmatpush1.xpose.msra.mxu0 0.0
    %844 = vmatprep.subr.mxu0 0.0
    %845 = vmatpush1.xpose.msra.mxu0 0.0
    %846 = vmatprep.subr.mxu0 0.0
    %847 = vmatpush1.xpose.msra.mxu0 0.0
    %848 = vmatprep.subr.mxu0 0.0
    %849 = vmatpush1.xpose.msra.mxu0 0.0
    %850 = vmatprep.subr.mxu0 0.0
    %851 = vmatpush1.xpose.msra.mxu0 0.0
    %852 = vmatprep.subr.mxu0 0.0
    %853 = vmatpush1.xpose.msra.mxu0 0.0
    %854 = vmatprep.subr.mxu0 0.0
    %855 = vmatpush1.xpose.msra.mxu0 0.0
    %856 = vmatprep.subr.mxu0 0.0
    %857 = vmatpush1.xpose.msra.mxu0 0.0
    %858 = vmatprep.subr.mxu0 0.0
    %859 = vmatpush1.xpose.msra.mxu0 0.0
    %860 = vmatprep.subr.mxu0 0.0
    %861 = vmatpush1.xpose.msra.mxu0 0.0
    %862 = vmatprep.subr.mxu0 0.0
    %863 = vmatpush1.xpose.msra.mxu0 0.0
    %864 = vmatprep.mubr.f32.mxu0 0.0
    %865 = vmatmul.mubr.f32.gmra.mrb[0].mxu0 %v796
    %v866 = vpop.f32.mrb[0].mxu0
    %v867 = vadd.f32 0.0, %v866
    %v868 = vpop.f32.mrb[0].mxu0
    %869 = vdwg.mxu0
    %870 = vrot.lane.b32.xlu0 %v290, 120
    %v871 = vpop.permute.xlu0 %870
    %872 = vrot.lane.b32.xlu0 %v376, 120
    %v873 = vpop.permute.xlu0 %872
    %v874 = vsel %vm469, %v871, 0
    %v876 = vsel %vm469, %v873, 0
    %878 = vmatprep.subr.mxu0 0.0
    %879 = vmatpush1.xpose.msra.mxu0 %v876
    %880 = vmatprep.subr.mxu0 0.0
    %881 = vmatpush1.xpose.msra.mxu0 0.0
    %882 = vmatprep.subr.mxu0 0.0
    %883 = vmatpush1.xpose.msra.mxu0 0.0
    %884 = vmatprep.subr.mxu0 0.0
    %885 = vmatpush1.xpose.msra.mxu0 0.0
    %886 = vmatprep.subr.mxu0 0.0
    %887 = vmatpush1.xpose.msra.mxu0 0.0
    %888 = vmatprep.subr.mxu0 0.0
    %889 = vmatpush1.xpose.msra.mxu0 0.0
    %890 = vmatprep.subr.mxu0 0.0
    %891 = vmatpush1.xpose.msra.mxu0 0.0
    %892 = vmatprep.subr.mxu0 0.0
    %893 = vmatpush1.xpose.msra.mxu0 0.0
    %894 = vmatprep.subr.mxu0 0.0
    %895 = vmatpush1.xpose.msra.mxu0 0.0
    %896 = vmatprep.subr.mxu0 0.0
    %897 = vmatpush1.xpose.msra.mxu0 0.0
    %898 = vmatprep.subr.mxu0 0.0
    %899 = vmatpush1.xpose.msra.mxu0 0.0
    %900 = vmatprep.subr.mxu0 0.0
    %901 = vmatpush1.xpose.msra.mxu0 0.0
    %902 = vmatprep.subr.mxu0 0.0
    %903 = vmatpush1.xpose.msra.mxu0 0.0
    %904 = vmatprep.subr.mxu0 0.0
    %905 = vmatpush1.xpose.msra.mxu0 0.0
    %906 = vmatprep.subr.mxu0 0.0
    %907 = vmatpush1.xpose.msra.mxu0 0.0
    %908 = vmatprep.subr.mxu0 0.0
    %909 = vmatpush1.xpose.msra.mxu0 0.0
    %910 = vmatprep.subr.mxu0 0.0
    %911 = vmatpush1.xpose.msra.mxu0 0.0
    %912 = vmatprep.subr.mxu0 0.0
    %913 = vmatpush1.xpose.msra.mxu0 0.0
    %914 = vmatprep.subr.mxu0 0.0
    %915 = vmatpush1.xpose.msra.mxu0 0.0
    %916 = vmatprep.subr.mxu0 0.0
    %917 = vmatpush1.xpose.msra.mxu0 0.0
    %918 = vmatprep.subr.mxu0 0.0
    %919 = vmatpush1.xpose.msra.mxu0 0.0
    %920 = vmatprep.subr.mxu0 0.0
    %921 = vmatpush1.xpose.msra.mxu0 0.0
    %922 = vmatprep.subr.mxu0 0.0
    %923 = vmatpush1.xpose.msra.mxu0 0.0
    %924 = vmatprep.subr.mxu0 0.0
    %925 = vmatpush1.xpose.msra.mxu0 0.0
    %926 = vmatprep.subr.mxu0 0.0
    %927 = vmatpush1.xpose.msra.mxu0 0.0
    %928 = vmatprep.subr.mxu0 0.0
    %929 = vmatpush1.xpose.msra.mxu0 0.0
    %930 = vmatprep.subr.mxu0 0.0
    %931 = vmatpush1.xpose.msra.mxu0 0.0
    %932 = vmatprep.subr.mxu0 0.0
    %933 = vmatpush1.xpose.msra.mxu0 0.0
    %934 = vmatprep.subr.mxu0 0.0
    %935 = vmatpush1.xpose.msra.mxu0 0.0
    %936 = vmatprep.subr.mxu0 0.0
    %937 = vmatpush1.xpose.msra.mxu0 0.0
    %938 = vmatprep.subr.mxu0 0.0
    %939 = vmatpush1.xpose.msra.mxu0 0.0
    %940 = vmatprep.subr.mxu0 0.0
    %941 = vmatpush1.xpose.msra.mxu0 0.0
    %942 = vmatprep.mubr.f32.mxu0 0.0
    %943 = vmatmul.mubr.f32.gmra.mrb[0].mxu0 %v874
    %v944 = vpop.f32.mrb[0].mxu0
    %v945 = vadd.f32 0.0, %v944
    %v946 = vpop.f32.mrb[0].mxu0
    %947 = vdwg.mxu0
    %v948 = vmul.f32 %v867, 0.35355338
    %v949 = vmul.f32 %v945, 0.35355338
    %v950 = vsel %vm469, %v948, -inf
    %951 = vmax.xlane.f32.xlu0 %v950
    %v952 = vpop.xlane.xlu0 %951
    %v953 = vsel %vm469, %v949, -inf
    %954 = vmax.xlane.f32.xlu0 %v953
    %v955 = vpop.xlane.xlu0 %954
    %v956 = vsub.f32 %v948, %v952
    %v957 = vsub.f32 %v949, %v955
    %v958 = vmul.f32 %v956, 1.442695
    %v959 = vpow.pop %v958
    %v960 = vmul.f32 %v957, 1.442695
    %v961 = vpow.pop %v960
    %v962 = vsel %vm469, %v959, 0.0
    %963 = vadd.xlane.f32.xlu0 %v962
    %v964 = vpop.xlane.xlu0 %963
    %v965 = vsel %vm469, %v961, 0.0
    %966 = vadd.xlane.f32.xlu0 %v965
    %v967 = vpop.xlane.xlu0 %966
    %v968 = vrcp.pop %v964
    %v969 = vrcp.pop %v967
    %v970 = vmul.f32 %v959, %v968
    %v971 = vmul.f32 %v961, %v969
    %973 = vrot.lane.b32.xlu0 %v457, 120
    %v974 = vpop.permute.xlu0 %973
    %v977 = vsel %vm469, %v970, 0
    %979 = vmatprep.subr.mxu0 0.0
    %980 = vmatpush1.msra.mxu0 %v974
    %981 = vmatprep.subr.mxu0 0.0
    %982 = vmatpush1.msra.mxu0 0.0
    %983 = vmatprep.subr.mxu0 0.0
    %984 = vmatpush1.msra.mxu0 0.0
    %985 = vmatprep.subr.mxu0 0.0
    %986 = vmatpush1.msra.mxu0 0.0
    %987 = vmatprep.subr.mxu0 0.0
    %988 = vmatpush1.msra.mxu0 0.0
    %989 = vmatprep.subr.mxu0 0.0
    %990 = vmatpush1.msra.mxu0 0.0
    %991 = vmatprep.subr.mxu0 0.0
    %992 = vmatpush1.msra.mxu0 0.0
    %993 = vmatprep.subr.mxu0 0.0
    %994 = vmatpush1.msra.mxu0 0.0
    %995 = vmatprep.subr.mxu0 0.0
    %996 = vmatpush1.msra.mxu0 0.0
    %997 = vmatprep.subr.mxu0 0.0
    %998 = vmatpush1.msra.mxu0 0.0
    %999 = vmatprep.subr.mxu0 0.0
    %1000 = vmatpush1.msra.mxu0 0.0
    %1001 = vmatprep.subr.mxu0 0.0
    %1002 = vmatpush1.msra.mxu0 0.0
    %1003 = vmatprep.subr.mxu0 0.0
    %1004 = vmatpush1.msra.mxu0 0.0
    %1005 = vmatprep.subr.mxu0 0.0
    %1006 = vmatpush1.msra.mxu0 0.0
    %1007 = vmatprep.subr.mxu0 0.0
    %1008 = vmatpush1.msra.mxu0 0.0
    %1009 = vmatprep.subr.mxu0 0.0
    %1010 = vmatpush1.msra.mxu0 0.0
    %1011 = vmatprep.subr.mxu0 0.0
    %1012 = vmatpush1.msra.mxu0 0.0
    %1013 = vmatprep.subr.mxu0 0.0
    %1014 = vmatpush1.msra.mxu0 0.0
    %1015 = vmatprep.subr.mxu0 0.0
    %1016 = vmatpush1.msra.mxu0 0.0
    %1017 = vmatprep.subr.mxu0 0.0
    %1018 = vmatpush1.msra.mxu0 0.0
    %1019 = vmatprep.subr.mxu0 0.0
    %1020 = vmatpush1.msra.mxu0 0.0
    %1021 = vmatprep.subr.mxu0 0.0
    %1022 = vmatpush1.msra.mxu0 0.0
    %1023 = vmatprep.subr.mxu0 0.0
    %1024 = vmatpush1.msra.mxu0 0.0
    %1025 = vmatprep.subr.mxu0 0.0
    %1026 = vmatpush1.msra.mxu0 0.0
    %1027 = vmatprep.subr.mxu0 0.0
    %1028 = vmatpush1.msra.mxu0 0.0
    %1029 = vmatprep.subr.mxu0 0.0
    %1030 = vmatpush1.msra.mxu0 0.0
    %1031 = vmatprep.subr.mxu0 0.0
    %1032 = vmatpush1.msra.mxu0 0.0
    %1033 = vmatprep.subr.mxu0 0.0
    %1034 = vmatpush1.msra.mxu0 0.0
    %1035 = vmatprep.subr.mxu0 0.0
    %1036 = vmatpush1.msra.mxu0 0.0
    %1037 = vmatprep.subr.mxu0 0.0
    %1038 = vmatpush1.msra.mxu0 0.0
    %1039 = vmatprep.subr.mxu0 0.0
    %1040 = vmatpush1.msra.mxu0 0.0
    %1041 = vmatprep.subr.mxu0 0.0
    %1042 = vmatpush1.msra.mxu0 0.0
    %1043 = vmatprep.mubr.f32.mxu0 0.0
    %1044 = vmatmul.mubr.f32.gmra.mrb[0].mxu0 %v977
    %v1045 = vpop.f32.mrb[0].mxu0
    %v1046 = vadd.f32 0.0, %v1045
    %v1047 = vpop.f32.mrb[0].mxu0
    %1048 = vdwg.mxu0
    %1050 = vrot.lane.b32.xlu0 %v462, 120
    %v1051 = vpop.permute.xlu0 %1050
    %v1054 = vsel %vm469, %v971, 0
    %1056 = vmatprep.subr.mxu0 0.0
    %1057 = vmatpush1.msra.mxu0 %v1051
    %1058 = vmatprep.subr.mxu0 0.0
    %1059 = vmatpush1.msra.mxu0 0.0
    %1060 = vmatprep.subr.mxu0 0.0
    %1061 = vmatpush1.msra.mxu0 0.0
    %1062 = vmatprep.subr.mxu0 0.0
    %1063 = vmatpush1.msra.mxu0 0.0
    %1064 = vmatprep.subr.mxu0 0.0
    %1065 = vmatpush1.msra.mxu0 0.0
    %1066 = vmatprep.subr.mxu0 0.0
    %1067 = vmatpush1.msra.mxu0 0.0
    %1068 = vmatprep.subr.mxu0 0.0
    %1069 = vmatpush1.msra.mxu0 0.0
    %1070 = vmatprep.subr.mxu0 0.0
    %1071 = vmatpush1.msra.mxu0 0.0
    %1072 = vmatprep.subr.mxu0 0.0
    %1073 = vmatpush1.msra.mxu0 0.0
    %1074 = vmatprep.subr.mxu0 0.0
    %1075 = vmatpush1.msra.mxu0 0.0
    %1076 = vmatprep.subr.mxu0 0.0
    %1077 = vmatpush1.msra.mxu0 0.0
    %1078 = vmatprep.subr.mxu0 0.0
    %1079 = vmatpush1.msra.mxu0 0.0
    %1080 = vmatprep.subr.mxu0 0.0
    %1081 = vmatpush1.msra.mxu0 0.0
    %1082 = vmatprep.subr.mxu0 0.0
    %1083 = vmatpush1.msra.mxu0 0.0
    %1084 = vmatprep.subr.mxu0 0.0
    %1085 = vmatpush1.msra.mxu0 0.0
    %1086 = vmatprep.subr.mxu0 0.0
    %1087 = vmatpush1.msra.mxu0 0.0
    %1088 = vmatprep.subr.mxu0 0.0
    %1089 = vmatpush1.msra.mxu0 0.0
    %1090 = vmatprep.subr.mxu0 0.0
    %1091 = vmatpush1.msra.mxu0 0.0
    %1092 = vmatprep.subr.mxu0 0.0
    %1093 = vmatpush1.msra.mxu0 0.0
    %1094 = vmatprep.subr.mxu0 0.0
    %1095 = vmatpush1.msra.mxu0 0.0
    %1096 = vmatprep.subr.mxu0 0.0
    %1097 = vmatpush1.msra.mxu0 0.0
    %1098 = vmatprep.subr.mxu0 0.0
    %1099 = vmatpush1.msra.mxu0 0.0
    %1100 = vmatprep.subr.mxu0 0.0
    %1101 = vmatpush1.msra.mxu0 0.0
    %1102 = vmatprep.subr.mxu0 0.0
    %1103 = vmatpush1.msra.mxu0 0.0
    %1104 = vmatprep.subr.mxu0 0.0
    %1105 = vmatpush1.msra.mxu0 0.0
    %1106 = vmatprep.subr.mxu0 0.0
    %1107 = vmatpush1.msra.mxu0 0.0
    %1108 = vmatprep.subr.mxu0 0.0
    %1109 = vmatpush1.msra.mxu0 0.0
    %1110 = vmatprep.subr.mxu0 0.0
    %1111 = vmatpush1.msra.mxu0 0.0
    %1112 = vmatprep.subr.mxu0 0.0
    %1113 = vmatpush1.msra.mxu0 0.0
    %1114 = vmatprep.subr.mxu0 0.0
    %1115 = vmatpush1.msra.mxu0 0.0
    %1116 = vmatprep.subr.mxu0 0.0
    %1117 = vmatpush1.msra.mxu0 0.0
    %1118 = vmatprep.subr.mxu0 0.0
    %1119 = vmatpush1.msra.mxu0 0.0
    %1120 = vmatprep.mubr.f32.mxu0 0.0
    %1121 = vmatmul.mubr.f32.gmra.mrb[0].mxu0 %v1054
    %v1122 = vpop.f32.mrb[0].mxu0
    %v1123 = vadd.f32 0.0, %v1122
    %v1124 = vpop.f32.mrb[0].mxu0
    %1125 = vdwg.mxu0
    %v1127 = vsel %vm469, %v1046, 0
    %v1130 = vsel %vm469, %v1123, 0
    %1132 = vmatprep.subr.mxu0 0.0
    %1133 = vmatpush1.msra.mxu0 %v466
    %1134 = vmatprep.subr.mxu0 0.0
    %1135 = vmatpush1.msra.mxu0 0.0
    %1136 = vmatprep.subr.mxu0 0.0
    %1137 = vmatpush1.msra.mxu0 0.0
    %1138 = vmatprep.subr.mxu0 0.0
    %1139 = vmatpush1.msra.mxu0 0.0
    %1140 = vmatprep.subr.mxu0 0.0
    %1141 = vmatpush1.msra.mxu0 0.0
    %1142 = vmatprep.subr.mxu0 0.0
    %1143 = vmatpush1.msra.mxu0 0.0
    %1144 = vmatprep.subr.mxu0 0.0
    %1145 = vmatpush1.msra.mxu0 0.0
    %1146 = vmatprep.subr.mxu0 0.0
    %1147 = vmatpush1.msra.mxu0 0.0
    %1148 = vmatprep.subr.mxu0 0.0
    %1149 = vmatpush1.msra.mxu0 0.0
    %1150 = vmatprep.subr.mxu0 0.0
    %1151 = vmatpush1.msra.mxu0 0.0
    %1152 = vmatprep.subr.mxu0 0.0
    %1153 = vmatpush1.msra.mxu0 0.0
    %1154 = vmatprep.subr.mxu0 0.0
    %1155 = vmatpush1.msra.mxu0 0.0
    %1156 = vmatprep.subr.mxu0 0.0
    %1157 = vmatpush1.msra.mxu0 0.0
    %1158 = vmatprep.subr.mxu0 0.0
    %1159 = vmatpush1.msra.mxu0 0.0
    %1160 = vmatprep.subr.mxu0 0.0
    %1161 = vmatpush1.msra.mxu0 0.0
    %1162 = vmatprep.subr.mxu0 0.0
    %1163 = vmatpush1.msra.mxu0 0.0
    %1164 = vmatprep.subr.mxu0 0.0
    %1165 = vmatpush1.msra.mxu0 0.0
    %1166 = vmatprep.subr.mxu0 0.0
    %1167 = vmatpush1.msra.mxu0 0.0
    %1168 = vmatprep.subr.mxu0 0.0
    %1169 = vmatpush1.msra.mxu0 0.0
    %1170 = vmatprep.subr.mxu0 0.0
    %1171 = vmatpush1.msra.mxu0 0.0
    %1172 = vmatprep.subr.mxu0 0.0
    %1173 = vmatpush1.msra.mxu0 0.0
    %1174 = vmatprep.subr.mxu0 0.0
    %1175 = vmatpush1.msra.mxu0 0.0
    %1176 = vmatprep.subr.mxu0 0.0
    %1177 = vmatpush1.msra.mxu0 0.0
    %1178 = vmatprep.subr.mxu0 0.0
    %1179 = vmatpush1.msra.mxu0 0.0
    %1180 = vmatprep.subr.mxu0 0.0
    %1181 = vmatpush1.msra.mxu0 0.0
    %1182 = vmatprep.subr.mxu0 0.0
    %1183 = vmatpush1.msra.mxu0 0.0
    %1184 = vmatprep.subr.mxu0 0.0
    %1185 = vmatpush1.msra.mxu0 0.0
    %1186 = vmatprep.subr.mxu0 0.0
    %1187 = vmatpush1.msra.mxu0 0.0
    %1188 = vmatprep.subr.mxu0 0.0
    %1189 = vmatpush1.msra.mxu0 0.0
    %1190 = vmatprep.subr.mxu0 0.0
    %1191 = vmatpush1.msra.mxu0 0.0
    %1192 = vmatprep.subr.mxu0 0.0
    %1193 = vmatpush1.msra.mxu0 0.0
    %1194 = vmatprep.subr.mxu0 0.0
    %1195 = vmatpush1.msra.mxu0 0.0
    %1196 = vmatprep.mubr.f32.mxu0 0.0
    %1197 = vmatmul.mubr.f32.gmra.mrb[0].mxu0 %v1127
    %v1198 = vpop.f32.mrb[0].mxu0
    %v1199 = vadd.f32 0.0, %v1198
    %v1200 = vpop.f32.mrb[0].mxu0
    %1201 = vmatprep.mubr.f32.mxu0 0.0
    %1202 = vmatmul.mubr.f32.gmra.mrb[0].mxu0 %v1130
    %v1203 = vpop.f32.mrb[0].mxu0
    %v1204 = vadd.f32 0.0, %v1203
    %v1205 = vpop.f32.mrb[0].mxu0
    %1206 = vdwg.mxu0
    %v1208 = vsel %vm469, %v716, 0
    %v1211 = vsel %vm469, %v789, 0
    %1213 = vmatprep.subr.mxu0 0.0
    %1214 = vmatpush1.msra.mxu0 %v465
    %1215 = vmatprep.subr.mxu0 0.0
    %1216 = vmatpush1.msra.mxu0 0.0
    %1217 = vmatprep.subr.mxu0 0.0
    %1218 = vmatpush1.msra.mxu0 0.0
    %1219 = vmatprep.subr.mxu0 0.0
    %1220 = vmatpush1.msra.mxu0 0.0
    %1221 = vmatprep.subr.mxu0 0.0
    %1222 = vmatpush1.msra.mxu0 0.0
    %1223 = vmatprep.subr.mxu0 0.0
    %1224 = vmatpush1.msra.mxu0 0.0
    %1225 = vmatprep.subr.mxu0 0.0
    %1226 = vmatpush1.msra.mxu0 0.0
    %1227 = vmatprep.subr.mxu0 0.0
    %1228 = vmatpush1.msra.mxu0 0.0
    %1229 = vmatprep.subr.mxu0 0.0
    %1230 = vmatpush1.msra.mxu0 0.0
    %1231 = vmatprep.subr.mxu0 0.0
    %1232 = vmatpush1.msra.mxu0 0.0
    %1233 = vmatprep.subr.mxu0 0.0
    %1234 = vmatpush1.msra.mxu0 0.0
    %1235 = vmatprep.subr.mxu0 0.0
    %1236 = vmatpush1.msra.mxu0 0.0
    %1237 = vmatprep.subr.mxu0 0.0
    %1238 = vmatpush1.msra.mxu0 0.0
    %1239 = vmatprep.subr.mxu0 0.0
    %1240 = vmatpush1.msra.mxu0 0.0
    %1241 = vmatprep.subr.mxu0 0.0
    %1242 = vmatpush1.msra.mxu0 0.0
    %1243 = vmatprep.subr.mxu0 0.0
    %1244 = vmatpush1.msra.mxu0 0.0
    %1245 = vmatprep.subr.mxu0 0.0
    %1246 = vmatpush1.msra.mxu0 0.0
    %1247 = vmatprep.subr.mxu0 0.0
    %1248 = vmatpush1.msra.mxu0 0.0
    %1249 = vmatprep.subr.mxu0 0.0
    %1250 = vmatpush1.msra.mxu0 0.0
    %1251 = vmatprep.subr.mxu0 0.0
    %1252 = vmatpush1.msra.mxu0 0.0
    %1253 = vmatprep.subr.mxu0 0.0
    %1254 = vmatpush1.msra.mxu0 0.0
    %1255 = vmatprep.subr.mxu0 0.0
    %1256 = vmatpush1.msra.mxu0 0.0
    %1257 = vmatprep.subr.mxu0 0.0
    %1258 = vmatpush1.msra.mxu0 0.0
    %1259 = vmatprep.subr.mxu0 0.0
    %1260 = vmatpush1.msra.mxu0 0.0
    %1261 = vmatprep.subr.mxu0 0.0
    %1262 = vmatpush1.msra.mxu0 0.0
    %1263 = vmatprep.subr.mxu0 0.0
    %1264 = vmatpush1.msra.mxu0 0.0
    %1265 = vmatprep.subr.mxu0 0.0
    %1266 = vmatpush1.msra.mxu0 0.0
    %1267 = vmatprep.subr.mxu0 0.0
    %1268 = vmatpush1.msra.mxu0 0.0
    %1269 = vmatprep.subr.mxu0 0.0
    %1270 = vmatpush1.msra.mxu0 0.0
    %1271 = vmatprep.subr.mxu0 0.0
    %1272 = vmatpush1.msra.mxu0 0.0
    %1273 = vmatprep.subr.mxu0 0.0
    %1274 = vmatpush1.msra.mxu0 0.0
    %1275 = vmatprep.subr.mxu0 0.0
    %1276 = vmatpush1.msra.mxu0 0.0
    %1277 = vmatprep.mubr.f32.mxu0 0.0
    %1278 = vmatmul.mubr.f32.gmra.mrb[0].mxu0 %v1208
    %v1279 = vpop.f32.mrb[0].mxu0
    %v1280 = vadd.f32 %v1199, %v1279
    %v1281 = vpop.f32.mrb[0].mxu0
    %1282 = vmatprep.mubr.f32.mxu0 0.0
    %1283 = vmatmul.mubr.f32.gmra.mrb[0].mxu0 %v1211
    %v1284 = vpop.f32.mrb[0].mxu0
    %v1285 = vadd.f32 %v1204, %v1284
    %v1286 = vpop.f32.mrb[0].mxu0
    %1287 = vdwg.mxu0
    %1288 = vrot.lane.b32.xlu0 %v285, 112
    %v1289 = vpop.permute.xlu0 %1288
    %1290 = vrot.lane.b32.xlu0 %v371, 112
    %v1291 = vpop.permute.xlu0 %1290
    %v1292 = vsel %vm469, %v1289, 0
    %v1294 = vsel %vm469, %v1291, 0
    %1296 = vmatprep.subr.mxu0 0.0
    %1297 = vmatpush1.xpose.msra.mxu0 %v1294
    %1298 = vmatprep.subr.mxu0 0.0
    %1299 = vmatpush1.xpose.msra.mxu0 0.0
    %1300 = vmatprep.subr.mxu0 0.0
    %1301 = vmatpush1.xpose.msra.mxu0 0.0
    %1302 = vmatprep.subr.mxu0 0.0
    %1303 = vmatpush1.xpose.msra.mxu0 0.0
    %1304 = vmatprep.subr.mxu0 0.0
    %1305 = vmatpush1.xpose.msra.mxu0 0.0
    %1306 = vmatprep.subr.mxu0 0.0
    %1307 = vmatpush1.xpose.msra.mxu0 0.0
    %1308 = vmatprep.subr.mxu0 0.0
    %1309 = vmatpush1.xpose.msra.mxu0 0.0
    %1310 = vmatprep.subr.mxu0 0.0
    %1311 = vmatpush1.xpose.msra.mxu0 0.0
    %1312 = vmatprep.subr.mxu0 0.0
    %1313 = vmatpush1.xpose.msra.mxu0 0.0
    %1314 = vmatprep.subr.mxu0 0.0
    %1315 = vmatpush1.xpose.msra.mxu0 0.0
    %1316 = vmatprep.subr.mxu0 0.0
    %1317 = vmatpush1.xpose.msra.mxu0 0.0
    %1318 = vmatprep.subr.mxu0 0.0
    %1319 = vmatpush1.xpose.msra.mxu0 0.0
    %1320 = vmatprep.subr.mxu0 0.0
    %1321 = vmatpush1.xpose.msra.mxu0 0.0
    %1322 = vmatprep.subr.mxu0 0.0
    %1323 = vmatpush1.xpose.msra.mxu0 0.0
    %1324 = vmatprep.subr.mxu0 0.0
    %1325 = vmatpush1.xpose.msra.mxu0 0.0
    %1326 = vmatprep.subr.mxu0 0.0
    %1327 = vmatpush1.xpose.msra.mxu0 0.0
    %1328 = vmatprep.subr.mxu0 0.0
    %1329 = vmatpush1.xpose.msra.mxu0 0.0
    %1330 = vmatprep.subr.mxu0 0.0
    %1331 = vmatpush1.xpose.msra.mxu0 0.0
    %1332 = vmatprep.subr.mxu0 0.0
    %1333 = vmatpush1.xpose.msra.mxu0 0.0
    %1334 = vmatprep.subr.mxu0 0.0
    %1335 = vmatpush1.xpose.msra.mxu0 0.0
    %1336 = vmatprep.subr.mxu0 0.0
    %1337 = vmatpush1.xpose.msra.mxu0 0.0
    %1338 = vmatprep.subr.mxu0 0.0
    %1339 = vmatpush1.xpose.msra.mxu0 0.0
    %1340 = vmatprep.subr.mxu0 0.0
    %1341 = vmatpush1.xpose.msra.mxu0 0.0
    %1342 = vmatprep.subr.mxu0 0.0
    %1343 = vmatpush1.xpose.msra.mxu0 0.0
    %1344 = vmatprep.subr.mxu0 0.0
    %1345 = vmatpush1.xpose.msra.mxu0 0.0
    %1346 = vmatprep.subr.mxu0 0.0
    %1347 = vmatpush1.xpose.msra.mxu0 0.0
    %1348 = vmatprep.subr.mxu0 0.0
    %1349 = vmatpush1.xpose.msra.mxu0 0.0
    %1350 = vmatprep.subr.mxu0 0.0
    %1351 = vmatpush1.xpose.msra.mxu0 0.0
    %1352 = vmatprep.subr.mxu0 0.0
    %1353 = vmatpush1.xpose.msra.mxu0 0.0
    %1354 = vmatprep.subr.mxu0 0.0
    %1355 = vmatpush1.xpose.msra.mxu0 0.0
    %1356 = vmatprep.subr.mxu0 0.0
    %1357 = vmatpush1.xpose.msra.mxu0 0.0
    %1358 = vmatprep.subr.mxu0 0.0
    %1359 = vmatpush1.xpose.msra.mxu0 0.0
    %1360 = vmatprep.mubr.f32.mxu0 0.0
    %1361 = vmatmul.mubr.f32.gmra.mrb[0].mxu0 %v1292
    %v1362 = vpop.f32.mrb[0].mxu0
    %v1363 = vadd.f32 0.0, %v1362
    %v1364 = vpop.f32.mrb[0].mxu0
    %1365 = vdwg.mxu0
    %1366 = vrot.lane.b32.xlu0 %v290, 112
    %v1367 = vpop.permute.xlu0 %1366
    %1368 = vrot.lane.b32.xlu0 %v376, 112
    %v1369 = vpop.permute.xlu0 %1368
    %v1370 = vsel %vm469, %v1367, 0
    %v1372 = vsel %vm469, %v1369, 0
    %1374 = vmatprep.subr.mxu0 0.0
    %1375 = vmatpush1.xpose.msra.mxu0 %v1372
    %1376 = vmatprep.subr.mxu0 0.0
    %1377 = vmatpush1.xpose.msra.mxu0 0.0
    %1378 = vmatprep.subr.mxu0 0.0
    %1379 = vmatpush1.xpose.msra.mxu0 0.0
    %1380 = vmatprep.subr.mxu0 0.0
    %1381 = vmatpush1.xpose.msra.mxu0 0.0
    %1382 = vmatprep.subr.mxu0 0.0
    %1383 = vmatpush1.xpose.msra.mxu0 0.0
    %1384 = vmatprep.subr.mxu0 0.0
    %1385 = vmatpush1.xpose.msra.mxu0 0.0
    %1386 = vmatprep.subr.mxu0 0.0
    %1387 = vmatpush1.xpose.msra.mxu0 0.0
    %1388 = vmatprep.subr.mxu0 0.0
    %1389 = vmatpush1.xpose.msra.mxu0 0.0
    %1390 = vmatprep.subr.mxu0 0.0
    %1391 = vmatpush1.xpose.msra.mxu0 0.0
    %1392 = vmatprep.subr.mxu0 0.0
    %1393 = vmatpush1.xpose.msra.mxu0 0.0
    %1394 = vmatprep.subr.mxu0 0.0
    %1395 = vmatpush1.xpose.msra.mxu0 0.0
    %1396 = vmatprep.subr.mxu0 0.0
    %1397 = vmatpush1.xpose.msra.mxu0 0.0
    %1398 = vmatprep.subr.mxu0 0.0
    %1399 = vmatpush1.xpose.msra.mxu0 0.0
    %1400 = vmatprep.subr.mxu0 0.0
    %1401 = vmatpush1.xpose.msra.mxu0 0.0
    %1402 = vmatprep.subr.mxu0 0.0
    %1403 = vmatpush1.xpose.msra.mxu0 0.0
    %1404 = vmatprep.subr.mxu0 0.0
    %1405 = vmatpush1.xpose.msra.mxu0 0.0
    %1406 = vmatprep.subr.mxu0 0.0
    %1407 = vmatpush1.xpose.msra.mxu0 0.0
    %1408 = vmatprep.subr.mxu0 0.0
    %1409 = vmatpush1.xpose.msra.mxu0 0.0
    %1410 = vmatprep.subr.mxu0 0.0
    %1411 = vmatpush1.xpose.msra.mxu0 0.0
    %1412 = vmatprep.subr.mxu0 0.0
    %1413 = vmatpush1.xpose.msra.mxu0 0.0
    %1414 = vmatprep.subr.mxu0 0.0
    %1415 = vmatpush1.xpose.msra.mxu0 0.0
    %1416 = vmatprep.subr.mxu0 0.0
    %1417 = vmatpush1.xpose.msra.mxu0 0.0
    %1418 = vmatprep.subr.mxu0 0.0
    %1419 = vmatpush1.xpose.msra.mxu0 0.0
    %1420 = vmatprep.subr.mxu0 0.0
    %1421 = vmatpush1.xpose.msra.mxu0 0.0
    %1422 = vmatprep.subr.mxu0 0.0
    %1423 = vmatpush1.xpose.msra.mxu0 0.0
    %1424 = vmatprep.subr.mxu0 0.0
    %1425 = vmatpush1.xpose.msra.mxu0 0.0
    %1426 = vmatprep.subr.mxu0 0.0
    %1427 = vmatpush1.xpose.msra.mxu0 0.0
    %1428 = vmatprep.subr.mxu0 0.0
    %1429 = vmatpush1.xpose.msra.mxu0 0.0
    %1430 = vmatprep.subr.mxu0 0.0
    %1431 = vmatpush1.xpose.msra.mxu0 0.0
    %1432 = vmatprep.subr.mxu0 0.0
    %1433 = vmatpush1.xpose.msra.mxu0 0.0
    %1434 = vmatprep.subr.mxu0 0.0
    %1435 = vmatpush1.xpose.msra.mxu0 0.0
    %1436 = vmatprep.subr.mxu0 0.0
    %1437 = vmatpush1.xpose.msra.mxu0 0.0
    %1438 = vmatprep.mubr.f32.mxu0 0.0
    %1439 = vmatmul.mubr.f32.gmra.mrb[0].mxu0 %v1370
    %v1440 = vpop.f32.mrb[0].mxu0
    %v1441 = vadd.f32 0.0, %v1440
    %v1442 = vpop.f32.mrb[0].mxu0
    %1443 = vdwg.mxu0
    %v1444 = vmul.f32 %v1363, 0.35355338
    %v1445 = vmul.f32 %v1441, 0.35355338
    %v1446 = vsel %vm469, %v1444, -inf
    %1447 = vmax.xlane.f32.xlu0 %v1446
    %v1448 = vpop.xlane.xlu0 %1447
    %v1449 = vsel %vm469, %v1445, -inf
    %1450 = vmax.xlane.f32.xlu0 %v1449
    %v1451 = vpop.xlane.xlu0 %1450
    %v1452 = vsub.f32 %v1444, %v1448
    %v1453 = vsub.f32 %v1445, %v1451
    %v1454 = vmul.f32 %v1452, 1.442695
    %v1455 = vpow.pop %v1454
    %v1456 = vmul.f32 %v1453, 1.442695
    %v1457 = vpow.pop %v1456
    %v1458 = vsel %vm469, %v1455, 0.0
    %1459 = vadd.xlane.f32.xlu0 %v1458
    %v1460 = vpop.xlane.xlu0 %1459
    %v1461 = vsel %vm469, %v1457, 0.0
    %1462 = vadd.xlane.f32.xlu0 %v1461
    %v1463 = vpop.xlane.xlu0 %1462
    %v1464 = vrcp.pop %v1460
    %v1465 = vrcp.pop %v1463
    %v1466 = vmul.f32 %v1455, %v1464
    %v1467 = vmul.f32 %v1457, %v1465
    %1468 = vrot.lane.b32.xlu0 %v457, 112
    %v1469 = vpop.permute.xlu0 %1468
    %v1472 = vsel %vm469, %v1466, 0
    %1474 = vmatprep.subr.mxu0 0.0
    %1475 = vmatpush1.msra.mxu0 %v1469
    %1476 = vmatprep.subr.mxu0 0.0
    %1477 = vmatpush1.msra.mxu0 0.0
    %1478 = vmatprep.subr.mxu0 0.0
    %1479 = vmatpush1.msra.mxu0 0.0
    %1480 = vmatprep.subr.mxu0 0.0
    %1481 = vmatpush1.msra.mxu0 0.0
    %1482 = vmatprep.subr.mxu0 0.0
    %1483 = vmatpush1.msra.mxu0 0.0
    %1484 = vmatprep.subr.mxu0 0.0
    %1485 = vmatpush1.msra.mxu0 0.0
    %1486 = vmatprep.subr.mxu0 0.0
    %1487 = vmatpush1.msra.mxu0 0.0
    %1488 = vmatprep.subr.mxu0 0.0
    %1489 = vmatpush1.msra.mxu0 0.0
    %1490 = vmatprep.subr.mxu0 0.0
    %1491 = vmatpush1.msra.mxu0 0.0
    %1492 = vmatprep.subr.mxu0 0.0
    %1493 = vmatpush1.msra.mxu0 0.0
    %1494 = vmatprep.subr.mxu0 0.0
    %1495 = vmatpush1.msra.mxu0 0.0
    %1496 = vmatprep.subr.mxu0 0.0
    %1497 = vmatpush1.msra.mxu0 0.0
    %1498 = vmatprep.subr.mxu0 0.0
    %1499 = vmatpush1.msra.mxu0 0.0
    %1500 = vmatprep.subr.mxu0 0.0
    %1501 = vmatpush1.msra.mxu0 0.0
    %1502 = vmatprep.subr.mxu0 0.0
    %1503 = vmatpush1.msra.mxu0 0.0
    %1504 = vmatprep.subr.mxu0 0.0
    %1505 = vmatpush1.msra.mxu0 0.0
    %1506 = vmatprep.subr.mxu0 0.0
    %1507 = vmatpush1.msra.mxu0 0.0
    %1508 = vmatprep.subr.mxu0 0.0
    %1509 = vmatpush1.msra.mxu0 0.0
    %1510 = vmatprep.subr.mxu0 0.0
    %1511 = vmatpush1.msra.mxu0 0.0
    %1512 = vmatprep.subr.mxu0 0.0
    %1513 = vmatpush1.msra.mxu0 0.0
    %1514 = vmatprep.subr.mxu0 0.0
    %1515 = vmatpush1.msra.mxu0 0.0
    %1516 = vmatprep.subr.mxu0 0.0
    %1517 = vmatpush1.msra.mxu0 0.0
    %1518 = vmatprep.subr.mxu0 0.0
    %1519 = vmatpush1.msra.mxu0 0.0
    %1520 = vmatprep.subr.mxu0 0.0
    %1521 = vmatpush1.msra.mxu0 0.0
    %1522 = vmatprep.subr.mxu0 0.0
    %1523 = vmatpush1.msra.mxu0 0.0
    %1524 = vmatprep.subr.mxu0 0.0
    %1525 = vmatpush1.msra.mxu0 0.0
    %1526 = vmatprep.subr.mxu0 0.0
    %1527 = vmatpush1.msra.mxu0 0.0
    %1528 = vmatprep.subr.mxu0 0.0
    %1529 = vmatpush1.msra.mxu0 0.0
    %1530 = vmatprep.subr.mxu0 0.0
    %1531 = vmatpush1.msra.mxu0 0.0
    %1532 = vmatprep.subr.mxu0 0.0
    %1533 = vmatpush1.msra.mxu0 0.0
    %1534 = vmatprep.subr.mxu0 0.0
    %1535 = vmatpush1.msra.mxu0 0.0
    %1536 = vmatprep.subr.mxu0 0.0
    %1537 = vmatpush1.msra.mxu0 0.0
    %1538 = vmatprep.mubr.f32.mxu0 0.0
    %1539 = vmatmul.mubr.f32.gmra.mrb[0].mxu0 %v1472
    %v1540 = vpop.f32.mrb[0].mxu0
    %v1541 = vadd.f32 0.0, %v1540
    %v1542 = vpop.f32.mrb[0].mxu0
    %1543 = vdwg.mxu0
    %1544 = vrot.lane.b32.xlu0 %v462, 112
    %v1545 = vpop.permute.xlu0 %1544
    %v1548 = vsel %vm469, %v1467, 0
    %1550 = vmatprep.subr.mxu0 0.0
    %1551 = vmatpush1.msra.mxu0 %v1545
    %1552 = vmatprep.subr.mxu0 0.0
    %1553 = vmatpush1.msra.mxu0 0.0
    %1554 = vmatprep.subr.mxu0 0.0
    %1555 = vmatpush1.msra.mxu0 0.0
    %1556 = vmatprep.subr.mxu0 0.0
    %1557 = vmatpush1.msra.mxu0 0.0
    %1558 = vmatprep.subr.mxu0 0.0
    %1559 = vmatpush1.msra.mxu0 0.0
    %1560 = vmatprep.subr.mxu0 0.0
    %1561 = vmatpush1.msra.mxu0 0.0
    %1562 = vmatprep.subr.mxu0 0.0
    %1563 = vmatpush1.msra.mxu0 0.0
    %1564 = vmatprep.subr.mxu0 0.0
    %1565 = vmatpush1.msra.mxu0 0.0
    %1566 = vmatprep.subr.mxu0 0.0
    %1567 = vmatpush1.msra.mxu0 0.0
    %1568 = vmatprep.subr.mxu0 0.0
    %1569 = vmatpush1.msra.mxu0 0.0
    %1570 = vmatprep.subr.mxu0 0.0
    %1571 = vmatpush1.msra.mxu0 0.0
    %1572 = vmatprep.subr.mxu0 0.0
    %1573 = vmatpush1.msra.mxu0 0.0
    %1574 = vmatprep.subr.mxu0 0.0
    %1575 = vmatpush1.msra.mxu0 0.0
    %1576 = vmatprep.subr.mxu0 0.0
    %1577 = vmatpush1.msra.mxu0 0.0
    %1578 = vmatprep.subr.mxu0 0.0
    %1579 = vmatpush1.msra.mxu0 0.0
    %1580 = vmatprep.subr.mxu0 0.0
    %1581 = vmatpush1.msra.mxu0 0.0
    %1582 = vmatprep.subr.mxu0 0.0
    %1583 = vmatpush1.msra.mxu0 0.0
    %1584 = vmatprep.subr.mxu0 0.0
    %1585 = vmatpush1.msra.mxu0 0.0
    %1586 = vmatprep.subr.mxu0 0.0
    %1587 = vmatpush1.msra.mxu0 0.0
    %1588 = vmatprep.subr.mxu0 0.0
    %1589 = vmatpush1.msra.mxu0 0.0
    %1590 = vmatprep.subr.mxu0 0.0
    %1591 = vmatpush1.msra.mxu0 0.0
    %1592 = vmatprep.subr.mxu0 0.0
    %1593 = vmatpush1.msra.mxu0 0.0
    %1594 = vmatprep.subr.mxu0 0.0
    %1595 = vmatpush1.msra.mxu0 0.0
    %1596 = vmatprep.subr.mxu0 0.0
    %1597 = vmatpush1.msra.mxu0 0.0
    %1598 = vmatprep.subr.mxu0 0.0
    %1599 = vmatpush1.msra.mxu0 0.0
    %1600 = vmatprep.subr.mxu0 0.0
    %1601 = vmatpush1.msra.mxu0 0.0
    %1602 = vmatprep.subr.mxu0 0.0
    %1603 = vmatpush1.msra.mxu0 0.0
    %1604 = vmatprep.subr.mxu0 0.0
    %1605 = vmatpush1.msra.mxu0 0.0
    %1606 = vmatprep.subr.mxu0 0.0
    %1607 = vmatpush1.msra.mxu0 0.0
    %1608 = vmatprep.subr.mxu0 0.0
    %1609 = vmatpush1.msra.mxu0 0.0
    %1610 = vmatprep.subr.mxu0 0.0
    %1611 = vmatpush1.msra.mxu0 0.0
    %1612 = vmatprep.subr.mxu0 0.0
    %1613 = vmatpush1.msra.mxu0 0.0
    %1614 = vmatprep.mubr.f32.mxu0 0.0
    %1615 = vmatmul.mubr.f32.gmra.mrb[0].mxu0 %v1548
    %v1616 = vpop.f32.mrb[0].mxu0
    %v1617 = vadd.f32 0.0, %v1616
    %v1618 = vpop.f32.mrb[0].mxu0
    %1619 = vdwg.mxu0
    %v1621 = vsel %vm469, %v1541, 0
    %v1624 = vsel %vm469, %v1617, 0
    %1626 = vmatprep.subr.mxu0 0.0
    %1627 = vmatpush1.msra.mxu0 %v467
    %1628 = vmatprep.subr.mxu0 0.0
    %1629 = vmatpush1.msra.mxu0 0.0
    %1630 = vmatprep.subr.mxu0 0.0
    %1631 = vmatpush1.msra.mxu0 0.0
    %1632 = vmatprep.subr.mxu0 0.0
    %1633 = vmatpush1.msra.mxu0 0.0
    %1634 = vmatprep.subr.mxu0 0.0
    %1635 = vmatpush1.msra.mxu0 0.0
    %1636 = vmatprep.subr.mxu0 0.0
    %1637 = vmatpush1.msra.mxu0 0.0
    %1638 = vmatprep.subr.mxu0 0.0
    %1639 = vmatpush1.msra.mxu0 0.0
    %1640 = vmatprep.subr.mxu0 0.0
    %1641 = vmatpush1.msra.mxu0 0.0
    %1642 = vmatprep.subr.mxu0 0.0
    %1643 = vmatpush1.msra.mxu0 0.0
    %1644 = vmatprep.subr.mxu0 0.0
    %1645 = vmatpush1.msra.mxu0 0.0
    %1646 = vmatprep.subr.mxu0 0.0
    %1647 = vmatpush1.msra.mxu0 0.0
    %1648 = vmatprep.subr.mxu0 0.0
    %1649 = vmatpush1.msra.mxu0 0.0
    %1650 = vmatprep.subr.mxu0 0.0
    %1651 = vmatpush1.msra.mxu0 0.0
    %1652 = vmatprep.subr.mxu0 0.0
    %1653 = vmatpush1.msra.mxu0 0.0
    %1654 = vmatprep.subr.mxu0 0.0
    %1655 = vmatpush1.msra.mxu0 0.0
    %1656 = vmatprep.subr.mxu0 0.0
    %1657 = vmatpush1.msra.mxu0 0.0
    %1658 = vmatprep.subr.mxu0 0.0
    %1659 = vmatpush1.msra.mxu0 0.0
    %1660 = vmatprep.subr.mxu0 0.0
    %1661 = vmatpush1.msra.mxu0 0.0
    %1662 = vmatprep.subr.mxu0 0.0
    %1663 = vmatpush1.msra.mxu0 0.0
    %1664 = vmatprep.subr.mxu0 0.0
    %1665 = vmatpush1.msra.mxu0 0.0
    %1666 = vmatprep.subr.mxu0 0.0
    %1667 = vmatpush1.msra.mxu0 0.0
    %1668 = vmatprep.subr.mxu0 0.0
    %1669 = vmatpush1.msra.mxu0 0.0
    %1670 = vmatprep.subr.mxu0 0.0
    %1671 = vmatpush1.msra.mxu0 0.0
    %1672 = vmatprep.subr.mxu0 0.0
    %1673 = vmatpush1.msra.mxu0 0.0
    %1674 = vmatprep.subr.mxu0 0.0
    %1675 = vmatpush1.msra.mxu0 0.0
    %1676 = vmatprep.subr.mxu0 0.0
    %1677 = vmatpush1.msra.mxu0 0.0
    %1678 = vmatprep.subr.mxu0 0.0
    %1679 = vmatpush1.msra.mxu0 0.0
    %1680 = vmatprep.subr.mxu0 0.0
    %1681 = vmatpush1.msra.mxu0 0.0
    %1682 = vmatprep.subr.mxu0 0.0
    %1683 = vmatpush1.msra.mxu0 0.0
    %1684 = vmatprep.subr.mxu0 0.0
    %1685 = vmatpush1.msra.mxu0 0.0
    %1686 = vmatprep.subr.mxu0 0.0
    %1687 = vmatpush1.msra.mxu0 0.0
    %1688 = vmatprep.subr.mxu0 0.0
    %1689 = vmatpush1.msra.mxu0 0.0
    %1690 = vmatprep.mubr.f32.mxu0 0.0
    %1691 = vmatmul.mubr.f32.gmra.mrb[0].mxu0 %v1621
    %v1692 = vpop.f32.mrb[0].mxu0
    %v1693 = vadd.f32 0.0, %v1692
    %v1694 = vpop.f32.mrb[0].mxu0
    %1695 = vmatprep.mubr.f32.mxu0 0.0
    %1696 = vmatmul.mubr.f32.gmra.mrb[0].mxu0 %v1624
    %v1697 = vpop.f32.mrb[0].mxu0
    %v1698 = vadd.f32 0.0, %v1697
    %v1699 = vpop.f32.mrb[0].mxu0
    %1700 = vdwg.mxu0
    %v1701 = vadd.f32 %v1280, %v1693
    %v1702 = vadd.f32 %v1285, %v1698
    %1703 = vrot.lane.b32.xlu0 %v285, 104
    %v1704 = vpop.permute.xlu0 %1703
    %1705 = vrot.lane.b32.xlu0 %v371, 104
    %v1706 = vpop.permute.xlu0 %1705
    %v1707 = vsel %vm469, %v1704, 0
    %v1709 = vsel %vm469, %v1706, 0
    %1711 = vmatprep.subr.mxu0 0.0
    %1712 = vmatpush1.xpose.msra.mxu0 %v1709
    %1713 = vmatprep.subr.mxu0 0.0
    %1714 = vmatpush1.xpose.msra.mxu0 0.0
    %1715 = vmatprep.subr.mxu0 0.0
    %1716 = vmatpush1.xpose.msra.mxu0 0.0
    %1717 = vmatprep.subr.mxu0 0.0
    %1718 = vmatpush1.xpose.msra.mxu0 0.0
    %1719 = vmatprep.subr.mxu0 0.0
    %1720 = vmatpush1.xpose.msra.mxu0 0.0
    %1721 = vmatprep.subr.mxu0 0.0
    %1722 = vmatpush1.xpose.msra.mxu0 0.0
    %1723 = vmatprep.subr.mxu0 0.0
    %1724 = vmatpush1.xpose.msra.mxu0 0.0
    %1725 = vmatprep.subr.mxu0 0.0
    %1726 = vmatpush1.xpose.msra.mxu0 0.0
    %1727 = vmatprep.subr.mxu0 0.0
    %1728 = vmatpush1.xpose.msra.mxu0 0.0
    %1729 = vmatprep.subr.mxu0 0.0
    %1730 = vmatpush1.xpose.msra.mxu0 0.0
    %1731 = vmatprep.subr.mxu0 0.0
    %1732 = vmatpush1.xpose.msra.mxu0 0.0
    %1733 = vmatprep.subr.mxu0 0.0
    %1734 = vmatpush1.xpose.msra.mxu0 0.0
    %1735 = vmatprep.subr.mxu0 0.0
    %1736 = vmatpush1.xpose.msra.mxu0 0.0
    %1737 = vmatprep.subr.mxu0 0.0
    %1738 = vmatpush1.xpose.msra.mxu0 0.0
    %1739 = vmatprep.subr.mxu0 0.0
    %1740 = vmatpush1.xpose.msra.mxu0 0.0
    %1741 = vmatprep.subr.mxu0 0.0
    %1742 = vmatpush1.xpose.msra.mxu0 0.0
    %1743 = vmatprep.subr.mxu0 0.0
    %1744 = vmatpush1.xpose.msra.mxu0 0.0
    %1745 = vmatprep.subr.mxu0 0.0
    %1746 = vmatpush1.xpose.msra.mxu0 0.0
    %1747 = vmatprep.subr.mxu0 0.0
    %1748 = vmatpush1.xpose.msra.mxu0 0.0
    %1749 = vmatprep.subr.mxu0 0.0
    %1750 = vmatpush1.xpose.msra.mxu0 0.0
    %1751 = vmatprep.subr.mxu0 0.0
    %1752 = vmatpush1.xpose.msra.mxu0 0.0
    %1753 = vmatprep.subr.mxu0 0.0
    %1754 = vmatpush1.xpose.msra.mxu0 0.0
    %1755 = vmatprep.subr.mxu0 0.0
    %1756 = vmatpush1.xpose.msra.mxu0 0.0
    %1757 = vmatprep.subr.mxu0 0.0
    %1758 = vmatpush1.xpose.msra.mxu0 0.0
    %1759 = vmatprep.subr.mxu0 0.0
    %1760 = vmatpush1.xpose.msra.mxu0 0.0
    %1761 = vmatprep.subr.mxu0 0.0
    %1762 = vmatpush1.xpose.msra.mxu0 0.0
    %1763 = vmatprep.subr.mxu0 0.0
    %1764 = vmatpush1.xpose.msra.mxu0 0.0
    %1765 = vmatprep.subr.mxu0 0.0
    %1766 = vmatpush1.xpose.msra.mxu0 0.0
    %1767 = vmatprep.subr.mxu0 0.0
    %1768 = vmatpush1.xpose.msra.mxu0 0.0
    %1769 = vmatprep.subr.mxu0 0.0
    %1770 = vmatpush1.xpose.msra.mxu0 0.0
    %1771 = vmatprep.subr.mxu0 0.0
    %1772 = vmatpush1.xpose.msra.mxu0 0.0
    %1773 = vmatprep.subr.mxu0 0.0
    %1774 = vmatpush1.xpose.msra.mxu0 0.0
    %1775 = vmatprep.mubr.f32.mxu0 0.0
    %1776 = vmatmul.mubr.f32.gmra.mrb[0].mxu0 %v1707
    %v1777 = vpop.f32.mrb[0].mxu0
    %v1778 = vadd.f32 0.0, %v1777
    %v1779 = vpop.f32.mrb[0].mxu0
    %1780 = vdwg.mxu0
    %1781 = vrot.lane.b32.xlu0 %v290, 104
    %v1782 = vpop.permute.xlu0 %1781
    %1783 = vrot.lane.b32.xlu0 %v376, 104
    %v1784 = vpop.permute.xlu0 %1783
    %v1785 = vsel %vm469, %v1782, 0
    %v1787 = vsel %vm469, %v1784, 0
    %1789 = vmatprep.subr.mxu0 0.0
    %1790 = vmatpush1.xpose.msra.mxu0 %v1787
    %1791 = vmatprep.subr.mxu0 0.0
    %1792 = vmatpush1.xpose.msra.mxu0 0.0
    %1793 = vmatprep.subr.mxu0 0.0
    %1794 = vmatpush1.xpose.msra.mxu0 0.0
    %1795 = vmatprep.subr.mxu0 0.0
    %1796 = vmatpush1.xpose.msra.mxu0 0.0
    %1797 = vmatprep.subr.mxu0 0.0
    %1798 = vmatpush1.xpose.msra.mxu0 0.0
    %1799 = vmatprep.subr.mxu0 0.0
    %1800 = vmatpush1.xpose.msra.mxu0 0.0
    %1801 = vmatprep.subr.mxu0 0.0
    %1802 = vmatpush1.xpose.msra.mxu0 0.0
    %1803 = vmatprep.subr.mxu0 0.0
    %1804 = vmatpush1.xpose.msra.mxu0 0.0
    %1805 = vmatprep.subr.mxu0 0.0
    %1806 = vmatpush1.xpose.msra.mxu0 0.0
    %1807 = vmatprep.subr.mxu0 0.0
    %1808 = vmatpush1.xpose.msra.mxu0 0.0
    %1809 = vmatprep.subr.mxu0 0.0
    %1810 = vmatpush1.xpose.msra.mxu0 0.0
    %1811 = vmatprep.subr.mxu0 0.0
    %1812 = vmatpush1.xpose.msra.mxu0 0.0
    %1813 = vmatprep.subr.mxu0 0.0
    %1814 = vmatpush1.xpose.msra.mxu0 0.0
    %1815 = vmatprep.subr.mxu0 0.0
    %1816 = vmatpush1.xpose.msra.mxu0 0.0
    %1817 = vmatprep.subr.mxu0 0.0
    %1818 = vmatpush1.xpose.msra.mxu0 0.0
    %1819 = vmatprep.subr.mxu0 0.0
    %1820 = vmatpush1.xpose.msra.mxu0 0.0
    %1821 = vmatprep.subr.mxu0 0.0
    %1822 = vmatpush1.xpose.msra.mxu0 0.0
    %1823 = vmatprep.subr.mxu0 0.0
    %1824 = vmatpush1.xpose.msra.mxu0 0.0
    %1825 = vmatprep.subr.mxu0 0.0
    %1826 = vmatpush1.xpose.msra.mxu0 0.0
    %1827 = vmatprep.subr.mxu0 0.0
    %1828 = vmatpush1.xpose.msra.mxu0 0.0
    %1829 = vmatprep.subr.mxu0 0.0
    %1830 = vmatpush1.xpose.msra.mxu0 0.0
    %1831 = vmatprep.subr.mxu0 0.0
    %1832 = vmatpush1.xpose.msra.mxu0 0.0
    %1833 = vmatprep.subr.mxu0 0.0
    %1834 = vmatpush1.xpose.msra.mxu0 0.0
    %1835 = vmatprep.subr.mxu0 0.0
    %1836 = vmatpush1.xpose.msra.mxu0 0.0
    %1837 = vmatprep.subr.mxu0 0.0
    %1838 = vmatpush1.xpose.msra.mxu0 0.0
    %1839 = vmatprep.subr.mxu0 0.0
    %1840 = vmatpush1.xpose.msra.mxu0 0.0
    %1841 = vmatprep.subr.mxu0 0.0
    %1842 = vmatpush1.xpose.msra.mxu0 0.0
    %1843 = vmatprep.subr.mxu0 0.0
    %1844 = vmatpush1.xpose.msra.mxu0 0.0
    %1845 = vmatprep.subr.mxu0 0.0
    %1846 = vmatpush1.xpose.msra.mxu0 0.0
    %1847 = vmatprep.subr.mxu0 0.0
    %1848 = vmatpush1.xpose.msra.mxu0 0.0
    %1849 = vmatprep.subr.mxu0 0.0
    %1850 = vmatpush1.xpose.msra.mxu0 0.0
    %1851 = vmatprep.subr.mxu0 0.0
    %1852 = vmatpush1.xpose.msra.mxu0 0.0
    %1853 = vmatprep.mubr.f32.mxu0 0.0
    %1854 = vmatmul.mubr.f32.gmra.mrb[0].mxu0 %v1785
    %v1855 = vpop.f32.mrb[0].mxu0
    %v1856 = vadd.f32 0.0, %v1855
    %v1857 = vpop.f32.mrb[0].mxu0
    %1858 = vdwg.mxu0
    %v1859 = vmul.f32 %v1778, 0.35355338
    %v1860 = vmul.f32 %v1856, 0.35355338
    %v1861 = vsel %vm469, %v1859, -inf
    %1862 = vmax.xlane.f32.xlu0 %v1861
    %v1863 = vpop.xlane.xlu0 %1862
    %v1864 = vsel %vm469, %v1860, -inf
    %1865 = vmax.xlane.f32.xlu0 %v1864
    %v1866 = vpop.xlane.xlu0 %1865
    %v1867 = vsub.f32 %v1859, %v1863
    %v1868 = vsub.f32 %v1860, %v1866
    %v1869 = vmul.f32 %v1867, 1.442695
    %v1870 = vpow.pop %v1869
    %v1871 = vmul.f32 %v1868, 1.442695
    %v1872 = vpow.pop %v1871
    %v1873 = vsel %vm469, %v1870, 0.0
    %1874 = vadd.xlane.f32.xlu0 %v1873
    %v1875 = vpop.xlane.xlu0 %1874
    %v1876 = vsel %vm469, %v1872, 0.0
    %1877 = vadd.xlane.f32.xlu0 %v1876
    %v1878 = vpop.xlane.xlu0 %1877
    %v1879 = vrcp.pop %v1875
    %v1880 = vrcp.pop %v1878
    %v1881 = vmul.f32 %v1870, %v1879
    %v1882 = vmul.f32 %v1872, %v1880
    %1883 = vrot.lane.b32.xlu0 %v457, 104
    %v1884 = vpop.permute.xlu0 %1883
    %v1887 = vsel %vm469, %v1881, 0
    %1889 = vmatprep.subr.mxu0 0.0
    %1890 = vmatpush1.msra.mxu0 %v1884
    %1891 = vmatprep.subr.mxu0 0.0
    %1892 = vmatpush1.msra.mxu0 0.0
    %1893 = vmatprep.subr.mxu0 0.0
    %1894 = vmatpush1.msra.mxu0 0.0
    %1895 = vmatprep.subr.mxu0 0.0
    %1896 = vmatpush1.msra.mxu0 0.0
    %1897 = vmatprep.subr.mxu0 0.0
    %1898 = vmatpush1.msra.mxu0 0.0
    %1899 = vmatprep.subr.mxu0 0.0
    %1900 = vmatpush1.msra.mxu0 0.0
    %1901 = vmatprep.subr.mxu0 0.0
    %1902 = vmatpush1.msra.mxu0 0.0
    %1903 = vmatprep.subr.mxu0 0.0
    %1904 = vmatpush1.msra.mxu0 0.0
    %1905 = vmatprep.subr.mxu0 0.0
    %1906 = vmatpush1.msra.mxu0 0.0
    %1907 = vmatprep.subr.mxu0 0.0
    %1908 = vmatpush1.msra.mxu0 0.0
    %1909 = vmatprep.subr.mxu0 0.0
    %1910 = vmatpush1.msra.mxu0 0.0
    %1911 = vmatprep.subr.mxu0 0.0
    %1912 = vmatpush1.msra.mxu0 0.0
    %1913 = vmatprep.subr.mxu0 0.0
    %1914 = vmatpush1.msra.mxu0 0.0
    %1915 = vmatprep.subr.mxu0 0.0
    %1916 = vmatpush1.msra.mxu0 0.0
    %1917 = vmatprep.subr.mxu0 0.0
    %1918 = vmatpush1.msra.mxu0 0.0
    %1919 = vmatprep.subr.mxu0 0.0
    %1920 = vmatpush1.msra.mxu0 0.0
    %1921 = vmatprep.subr.mxu0 0.0
    %1922 = vmatpush1.msra.mxu0 0.0
    %1923 = vmatprep.subr.mxu0 0.0
    %1924 = vmatpush1.msra.mxu0 0.0
    %1925 = vmatprep.subr.mxu0 0.0
    %1926 = vmatpush1.msra.mxu0 0.0
    %1927 = vmatprep.subr.mxu0 0.0
    %1928 = vmatpush1.msra.mxu0 0.0
    %1929 = vmatprep.subr.mxu0 0.0
    %1930 = vmatpush1.msra.mxu0 0.0
    %1931 = vmatprep.subr.mxu0 0.0
    %1932 = vmatpush1.msra.mxu0 0.0
    %1933 = vmatprep.subr.mxu0 0.0
    %1934 = vmatpush1.msra.mxu0 0.0
    %1935 = vmatprep.subr.mxu0 0.0
    %1936 = vmatpush1.msra.mxu0 0.0
    %1937 = vmatprep.subr.mxu0 0.0
    %1938 = vmatpush1.msra.mxu0 0.0
    %1939 = vmatprep.subr.mxu0 0.0
    %1940 = vmatpush1.msra.mxu0 0.0
    %1941 = vmatprep.subr.mxu0 0.0
    %1942 = vmatpush1.msra.mxu0 0.0
    %1943 = vmatprep.subr.mxu0 0.0
    %1944 = vmatpush1.msra.mxu0 0.0
    %1945 = vmatprep.subr.mxu0 0.0
    %1946 = vmatpush1.msra.mxu0 0.0
    %1947 = vmatprep.subr.mxu0 0.0
    %1948 = vmatpush1.msra.mxu0 0.0
    %1949 = vmatprep.subr.mxu0 0.0
    %1950 = vmatpush1.msra.mxu0 0.0
    %1951 = vmatprep.subr.mxu0 0.0
    %1952 = vmatpush1.msra.mxu0 0.0
    %1953 = vmatprep.mubr.f32.mxu0 0.0
    %1954 = vmatmul.mubr.f32.gmra.mrb[0].mxu0 %v1887
    %v1955 = vpop.f32.mrb[0].mxu0
    %v1956 = vadd.f32 0.0, %v1955
    %v1957 = vpop.f32.mrb[0].mxu0
    %1958 = vdwg.mxu0
    %1959 = vrot.lane.b32.xlu0 %v462, 104
    %v1960 = vpop.permute.xlu0 %1959
    %v1963 = vsel %vm469, %v1882, 0
    %1965 = vmatprep.subr.mxu0 0.0
    %1966 = vmatpush1.msra.mxu0 %v1960
    %1967 = vmatprep.subr.mxu0 0.0
    %1968 = vmatpush1.msra.mxu0 0.0
    %1969 = vmatprep.subr.mxu0 0.0
    %1970 = vmatpush1.msra.mxu0 0.0
    %1971 = vmatprep.subr.mxu0 0.0
    %1972 = vmatpush1.msra.mxu0 0.0
    %1973 = vmatprep.subr.mxu0 0.0
    %1974 = vmatpush1.msra.mxu0 0.0
    %1975 = vmatprep.subr.mxu0 0.0
    %1976 = vmatpush1.msra.mxu0 0.0
    %1977 = vmatprep.subr.mxu0 0.0
    %1978 = vmatpush1.msra.mxu0 0.0
    %1979 = vmatprep.subr.mxu0 0.0
    %1980 = vmatpush1.msra.mxu0 0.0
    %1981 = vmatprep.subr.mxu0 0.0
    %1982 = vmatpush1.msra.mxu0 0.0
    %1983 = vmatprep.subr.mxu0 0.0
    %1984 = vmatpush1.msra.mxu0 0.0
    %1985 = vmatprep.subr.mxu0 0.0
    %1986 = vmatpush1.msra.mxu0 0.0
    %1987 = vmatprep.subr.mxu0 0.0
    %1988 = vmatpush1.msra.mxu0 0.0
    %1989 = vmatprep.subr.mxu0 0.0
    %1990 = vmatpush1.msra.mxu0 0.0
    %1991 = vmatprep.subr.mxu0 0.0
    %1992 = vmatpush1.msra.mxu0 0.0
    %1993 = vmatprep.subr.mxu0 0.0
    %1994 = vmatpush1.msra.mxu0 0.0
    %1995 = vmatprep.subr.mxu0 0.0
    %1996 = vmatpush1.msra.mxu0 0.0
    %1997 = vmatprep.subr.mxu0 0.0
    %1998 = vmatpush1.msra.mxu0 0.0
    %1999 = vmatprep.subr.mxu0 0.0
    %2000 = vmatpush1.msra.mxu0 0.0
    %2001 = vmatprep.subr.mxu0 0.0
    %2002 = vmatpush1.msra.mxu0 0.0
    %2003 = vmatprep.subr.mxu0 0.0
    %2004 = vmatpush1.msra.mxu0 0.0
    %2005 = vmatprep.subr.mxu0 0.0
    %2006 = vmatpush1.msra.mxu0 0.0
    %2007 = vmatprep.subr.mxu0 0.0
    %2008 = vmatpush1.msra.mxu0 0.0
    %2009 = vmatprep.subr.mxu0 0.0
    %2010 = vmatpush1.msra.mxu0 0.0
    %2011 = vmatprep.subr.mxu0 0.0
    %2012 = vmatpush1.msra.mxu0 0.0
    %2013 = vmatprep.subr.mxu0 0.0
    %2014 = vmatpush1.msra.mxu0 0.0
    %2015 = vmatprep.subr.mxu0 0.0
    %2016 = vmatpush1.msra.mxu0 0.0
    %2017 = vmatprep.subr.mxu0 0.0
    %2018 = vmatpush1.msra.mxu0 0.0
    %2019 = vmatprep.subr.mxu0 0.0
    %2020 = vmatpush1.msra.mxu0 0.0
    %2021 = vmatprep.subr.mxu0 0.0
    %2022 = vmatpush1.msra.mxu0 0.0
    %2023 = vmatprep.subr.mxu0 0.0
    %2024 = vmatpush1.msra.mxu0 0.0
    %2025 = vmatprep.subr.mxu0 0.0
    %2026 = vmatpush1.msra.mxu0 0.0
    %2027 = vmatprep.subr.mxu0 0.0
    %2028 = vmatpush1.msra.mxu0 0.0
    %2029 = vmatprep.mubr.f32.mxu0 0.0
    %2030 = vmatmul.mubr.f32.gmra.mrb[0].mxu0 %v1963
    %v2031 = vpop.f32.mrb[0].mxu0
    %v2032 = vadd.f32 0.0, %v2031
    %v2033 = vpop.f32.mrb[0].mxu0
    %2034 = vdwg.mxu0
    %v2036 = vsel %vm469, %v1956, 0
    %v2039 = vsel %vm469, %v2032, 0
    %2041 = vmatprep.subr.mxu0 0.0
    %2042 = vmatpush1.msra.mxu0 %v468
    %2043 = vmatprep.subr.mxu0 0.0
    %2044 = vmatpush1.msra.mxu0 0.0
    %2045 = vmatprep.subr.mxu0 0.0
    %2046 = vmatpush1.msra.mxu0 0.0
    %2047 = vmatprep.subr.mxu0 0.0
    %2048 = vmatpush1.msra.mxu0 0.0
    %2049 = vmatprep.subr.mxu0 0.0
    %2050 = vmatpush1.msra.mxu0 0.0
    %2051 = vmatprep.subr.mxu0 0.0
    %2052 = vmatpush1.msra.mxu0 0.0
    %2053 = vmatprep.subr.mxu0 0.0
    %2054 = vmatpush1.msra.mxu0 0.0
    %2055 = vmatprep.subr.mxu0 0.0
    %2056 = vmatpush1.msra.mxu0 0.0
    %2057 = vmatprep.subr.mxu0 0.0
    %2058 = vmatpush1.msra.mxu0 0.0
    %2059 = vmatprep.subr.mxu0 0.0
    %2060 = vmatpush1.msra.mxu0 0.0
    %2061 = vmatprep.subr.mxu0 0.0
    %2062 = vmatpush1.msra.mxu0 0.0
    %2063 = vmatprep.subr.mxu0 0.0
    %2064 = vmatpush1.msra.mxu0 0.0
    %2065 = vmatprep.subr.mxu0 0.0
    %2066 = vmatpush1.msra.mxu0 0.0
    %2067 = vmatprep.subr.mxu0 0.0
    %2068 = vmatpush1.msra.mxu0 0.0
    %2069 = vmatprep.subr.mxu0 0.0
    %2070 = vmatpush1.msra.mxu0 0.0
    %2071 = vmatprep.subr.mxu0 0.0
    %2072 = vmatpush1.msra.mxu0 0.0
    %2073 = vmatprep.subr.mxu0 0.0
    %2074 = vmatpush1.msra.mxu0 0.0
    %2075 = vmatprep.subr.mxu0 0.0
    %2076 = vmatpush1.msra.mxu0 0.0
    %2077 = vmatprep.subr.mxu0 0.0
    %2078 = vmatpush1.msra.mxu0 0.0
    %2079 = vmatprep.subr.mxu0 0.0
    %2080 = vmatpush1.msra.mxu0 0.0
    %2081 = vmatprep.subr.mxu0 0.0
    %2082 = vmatpush1.msra.mxu0 0.0
    %2083 = vmatprep.subr.mxu0 0.0
    %2084 = vmatpush1.msra.mxu0 0.0
    %2085 = vmatprep.subr.mxu0 0.0
    %2086 = vmatpush1.msra.mxu0 0.0
    %2087 = vmatprep.subr.mxu0 0.0
    %2088 = vmatpush1.msra.mxu0 0.0
    %2089 = vmatprep.subr.mxu0 0.0
    %2090 = vmatpush1.msra.mxu0 0.0
    %2091 = vmatprep.subr.mxu0 0.0
    %2092 = vmatpush1.msra.mxu0 0.0
    %2093 = vmatprep.subr.mxu0 0.0
    %2094 = vmatpush1.msra.mxu0 0.0
    %2095 = vmatprep.subr.mxu0 0.0
    %2096 = vmatpush1.msra.mxu0 0.0
    %2097 = vmatprep.subr.mxu0 0.0
    %2098 = vmatpush1.msra.mxu0 0.0
    %2099 = vmatprep.subr.mxu0 0.0
    %2100 = vmatpush1.msra.mxu0 0.0
    %2101 = vmatprep.subr.mxu0 0.0
    %2102 = vmatpush1.msra.mxu0 0.0
    %2103 = vmatprep.subr.mxu0 0.0
    %2104 = vmatpush1.msra.mxu0 0.0
    %2105 = vmatprep.mubr.f32.mxu0 0.0
    %2106 = vmatmul.mubr.f32.gmra.mrb[0].mxu0 %v2036
    %v2107 = vpop.f32.mrb[0].mxu0
    %v2108 = vadd.f32 0.0, %v2107
    %v2109 = vpop.f32.mrb[0].mxu0
    %2110 = vmatprep.mubr.f32.mxu0 0.0
    %2111 = vmatmul.mubr.f32.gmra.mrb[0].mxu0 %v2039
    %v2112 = vpop.f32.mrb[0].mxu0
    %v2113 = vadd.f32 0.0, %v2112
    %v2114 = vpop.f32.mrb[0].mxu0
    %2115 = vdwg.mxu0
    %v2116 = vadd.f32 %v1701, %v2108
    %v2117 = vadd.f32 %v1702, %v2113
    %v2118 = vld [vmem:[%s11] sm:$0x1]
    %v2120 = vlaneseq
    %v2121 = vshrl.u32 %v2120, 7
    %v2122 = vsub.s32 0, %v2121
    %v2123 = vrot.slane %v2118, %v2122
    %v2125 = vadd.f32 %v2116, %v2123
    %v2126 = vadd.f32 %v2117, %v2123
    %v2127 = vadd.f32 %v198, %v2125
    %v2128 = vadd.f32 %v199, %v2126
    %v2129 = vld [vmem:[%s12] sm:$0x1]
    %v2130 = vld [vmem:[%s13] sm:$0x1]
    %v2131 = vsel %vm211, %v2127, 0.0
    %2132 = vadd.xlane.f32.xlu0 %v2131
    %v2133 = vpop.xlane.xlu0 %2132
    %v2134 = vsel %vm211, %v2128, 0.0
    %2135 = vadd.xlane.f32.xlu0 %v2134
    %v2136 = vpop.xlane.xlu0 %2135
    %v2137 = vrcp.pop 32.0
    %v2138 = vmul.f32 %v2133, %v2137
    %v2139 = vmul.f32 %v2136, %v2137
    %v2140 = vsub.f32 %v2127, %v2138
    %v2141 = vsub.f32 %v2128, %v2139
    %v2142 = vmul.f32 %v2140, %v2140
    %v2143 = vmul.f32 %v2141, %v2141
    %v2144 = vsel %vm211, %v2142, 0.0
    %2145 = vadd.xlane.f32.xlu0 %v2144
    %v2146 = vpop.xlane.xlu0 %2145
    %v2147 = vsel %vm211, %v2143, 0.0
    %2148 = vadd.xlane.f32.xlu0 %v2147
    %v2149 = vpop.xlane.xlu0 %2148
    %v2150 = vmul.f32 %v2146, %v2137
    %v2151 = vmul.f32 %v2149, %v2137
    %v2152 = vadd.f32 %v2150, 1e-05
    %v2153 = vadd.f32 %v2151, 1e-05
    %v2154 = vrsqrt.pop %v2152
    %v2155 = vrsqrt.pop %v2153
    %v2156 = vmul.f32 %v2140, %v2154
    %v2157 = vmul.f32 %v2141, %v2155
    %v2159 = vlaneseq
    %v2160 = vshrl.u32 %v2159, 7
    %v2161 = vsub.s32 0, %v2160
    %v2162 = vrot.slane %v2129, %v2161
    %v2164 = vmul.f32 %v2156, %v2162
    %v2165 = vmul.f32 %v2157, %v2162
    %v2167 = vlaneseq
    %v2168 = vshrl.u32 %v2167, 7
    %v2169 = vsub.s32 0, %v2168
    %v2170 = vrot.slane %v2130, %v2169
    %v2172 = vadd.f32 %v2164, %v2170
    %v2173 = vadd.f32 %v2165, %v2170
    %v2174 = vld [vmem:[#allocation5] sm:$0xff]
    %v2175 = vld [vmem:[#allocation5 + $0x8] sm:$0xff]
    %v2176 = vld [vmem:[#allocation5 + $0x10] sm:$0xff]
    %v2177 = vld [vmem:[#allocation5 + $0x18] sm:$0xff]
    %v2178 = vld [vmem:[%s15] sm:$0x1]
    %v2180 = vlaneseq
    %v2181 = vshrl.u32 %v2180, 7
    %v2182 = vsub.s32 0, %v2181
    %v2183 = vrot.slane %v2178, %v2182
    %v2186 = vsel %vm211, %v2172, 0
    %v2189 = vsel %vm211, %v2173, 0
    %2191 = vmatprep.subr.mxu0 0.0
    %2192 = vmatpush1.msra.mxu0 %v2174
    %2193 = vmatprep.subr.mxu0 0.0
    %2194 = vmatpush1.msra.mxu0 %v2175
    %2195 = vmatprep.subr.mxu0 0.0
    %2196 = vmatpush1.msra.mxu0 %v2176
    %2197 = vmatprep.subr.mxu0 0.0
    %2198 = vmatpush1.msra.mxu0 %v2177
    %2199 = vmatprep.subr.mxu0 0.0
    %2200 = vmatpush1.msra.mxu0 0.0
    %2201 = vmatprep.subr.mxu0 0.0
    %2202 = vmatpush1.msra.mxu0 0.0
    %2203 = vmatprep.subr.mxu0 0.0
    %2204 = vmatpush1.msra.mxu0 0.0
    %2205 = vmatprep.subr.mxu0 0.0
    %2206 = vmatpush1.msra.mxu0 0.0
    %2207 = vmatprep.subr.mxu0 0.0
    %2208 = vmatpush1.msra.mxu0 0.0
    %2209 = vmatprep.subr.mxu0 0.0
    %2210 = vmatpush1.msra.mxu0 0.0
    %2211 = vmatprep.subr.mxu0 0.0
    %2212 = vmatpush1.msra.mxu0 0.0
    %2213 = vmatprep.subr.mxu0 0.0
    %2214 = vmatpush1.msra.mxu0 0.0
    %2215 = vmatprep.subr.mxu0 0.0
    %2216 = vmatpush1.msra.mxu0 0.0
    %2217 = vmatprep.subr.mxu0 0.0
    %2218 = vmatpush1.msra.mxu0 0.0
    %2219 = vmatprep.subr.mxu0 0.0
    %2220 = vmatpush1.msra.mxu0 0.0
    %2221 = vmatprep.subr.mxu0 0.0
    %2222 = vmatpush1.msra.mxu0 0.0
    %2223 = vmatprep.subr.mxu0 0.0
    %2224 = vmatpush1.msra.mxu0 0.0
    %2225 = vmatprep.subr.mxu0 0.0
    %2226 = vmatpush1.msra.mxu0 0.0
    %2227 = vmatprep.subr.mxu0 0.0
    %2228 = vmatpush1.msra.mxu0 0.0
    %2229 = vmatprep.subr.mxu0 0.0
    %2230 = vmatpush1.msra.mxu0 0.0
    %2231 = vmatprep.subr.mxu0 0.0
    %2232 = vmatpush1.msra.mxu0 0.0
    %2233 = vmatprep.subr.mxu0 0.0
    %2234 = vmatpush1.msra.mxu0 0.0
    %2235 = vmatprep.subr.mxu0 0.0
    %2236 = vmatpush1.msra.mxu0 0.0
    %2237 = vmatprep.subr.mxu0 0.0
    %2238 = vmatpush1.msra.mxu0 0.0
    %2239 = vmatprep.subr.mxu0 0.0
    %2240 = vmatpush1.msra.mxu0 0.0
    %2241 = vmatprep.subr.mxu0 0.0
    %2242 = vmatpush1.msra.mxu0 0.0
    %2243 = vmatprep.subr.mxu0 0.0
    %2244 = vmatpush1.msra.mxu0 0.0
    %2245 = vmatprep.subr.mxu0 0.0
    %2246 = vmatpush1.msra.mxu0 0.0
    %2247 = vmatprep.subr.mxu0 0.0
    %2248 = vmatpush1.msra.mxu0 0.0
    %2249 = vmatprep.subr.mxu0 0.0
    %2250 = vmatpush1.msra.mxu0 0.0
    %2251 = vmatprep.subr.mxu0 0.0
    %2252 = vmatpush1.msra.mxu0 0.0
    %2253 = vmatprep.subr.mxu0 0.0
    %2254 = vmatpush1.msra.mxu0 0.0
    %2255 = vmatprep.mubr.f32.mxu0 0.0
    %2256 = vmatmul.mubr.f32.gmra.mrb[0].mxu0 %v2186
    %v2257 = vpop.f32.mrb[0].mxu0
    %v2258 = vadd.f32 %v2183, %v2257
    %v2259 = vpop.f32.mrb[0].mxu0
    %2260 = vmatprep.mubr.f32.mxu0 0.0
    %2261 = vmatmul.mubr.f32.gmra.mrb[0].mxu0 %v2189
    %v2262 = vpop.f32.mrb[0].mxu0
    %v2263 = vadd.f32 %v2183, %v2262
    %v2264 = vpop.f32.mrb[0].mxu0
    %2265 = vdwg.mxu0
    %v2266 = vmax.f32 %v2258, 0.0
    %v2267 = vmax.f32 %v2263, 0.0
    %v2268 = vld [vmem:[%s16] sm:$0xff]
    %v2269 = vld [vmem:[%s16 + $0x8] sm:$0xff]
    %v2270 = vld [vmem:[%s16 + $0x10] sm:$0xff]
    %v2271 = vld [vmem:[%s16 + $0x18] sm:$0xff]
    %v2272 = vld [vmem:[%s16 + $0x20] sm:$0xff]
    %v2273 = vld [vmem:[%s16 + $0x28] sm:$0xff]
    %v2274 = vld [vmem:[%s16 + $0x30] sm:$0xff]
    %v2275 = vld [vmem:[%s16 + $0x38] sm:$0xff]
    %v2276 = vld [vmem:[%s17] sm:$0x1]
    %v2278 = vlaneseq
    %v2279 = vshrl.u32 %v2278, 7
    %v2280 = vsub.s32 0, %v2279
    %v2281 = vrot.slane %v2276, %v2280
    %vm2283 = vcmask 523264
    %v2285 = vsel %vm2283, %v2266, 0
    %v2288 = vsel %vm2283, %v2267, 0
    %2290 = vmatprep.subr.mxu0 0.0
    %2291 = vmatpush1.msra.mxu0 %v2268
    %2292 = vmatprep.subr.mxu0 0.0
    %2293 = vmatpush1.msra.mxu0 %v2269
    %2294 = vmatprep.subr.mxu0 0.0
    %2295 = vmatpush1.msra.mxu0 %v2270
    %2296 = vmatprep.subr.mxu0 0.0
    %2297 = vmatpush1.msra.mxu0 %v2271
    %2298 = vmatprep.subr.mxu0 0.0
    %2299 = vmatpush1.msra.mxu0 %v2272
    %2300 = vmatprep.subr.mxu0 0.0
    %2301 = vmatpush1.msra.mxu0 %v2273
    %2302 = vmatprep.subr.mxu0 0.0
    %2303 = vmatpush1.msra.mxu0 %v2274
    %2304 = vmatprep.subr.mxu0 0.0
    %2305 = vmatpush1.msra.mxu0 %v2275
    %2306 = vmatprep.subr.mxu0 0.0
    %2307 = vmatpush1.msra.mxu0 0.0
    %2308 = vmatprep.subr.mxu0 0.0
    %2309 = vmatpush1.msra.mxu0 0.0
    %2310 = vmatprep.subr.mxu0 0.0
    %2311 = vmatpush1.msra.mxu0 0.0
    %2312 = vmatprep.subr.mxu0 0.0
    %2313 = vmatpush1.msra.mxu0 0.0
    %2314 = vmatprep.subr.mxu0 0.0
    %2315 = vmatpush1.msra.mxu0 0.0
    %2316 = vmatprep.subr.mxu0 0.0
    %2317 = vmatpush1.msra.mxu0 0.0
    %2318 = vmatprep.subr.mxu0 0.0
    %2319 = vmatpush1.msra.mxu0 0.0
    %2320 = vmatprep.subr.mxu0 0.0
    %2321 = vmatpush1.msra.mxu0 0.0
    %2322 = vmatprep.subr.mxu0 0.0
    %2323 = vmatpush1.msra.mxu0 0.0
    %2324 = vmatprep.subr.mxu0 0.0
    %2325 = vmatpush1.msra.mxu0 0.0
    %2326 = vmatprep.subr.mxu0 0.0
    %2327 = vmatpush1.msra.mxu0 0.0
    %2328 = vmatprep.subr.mxu0 0.0
    %2329 = vmatpush1.msra.mxu0 0.0
    %2330 = vmatprep.subr.mxu0 0.0
    %2331 = vmatpush1.msra.mxu0 0.0
    %2332 = vmatprep.subr.mxu0 0.0
    %2333 = vmatpush1.msra.mxu0 0.0
    %2334 = vmatprep.subr.mxu0 0.0
    %2335 = vmatpush1.msra.mxu0 0.0
    %2336 = vmatprep.subr.mxu0 0.0
    %2337 = vmatpush1.msra.mxu0 0.0
    %2338 = vmatprep.subr.mxu0 0.0
    %2339 = vmatpush1.msra.mxu0 0.0
    %2340 = vmatprep.subr.mxu0 0.0
    %2341 = vmatpush1.msra.mxu0 0.0
    %2342 = vmatprep.subr.mxu0 0.0
    %2343 = vmatpush1.msra.mxu0 0.0
    %2344 = vmatprep.subr.mxu0 0.0
    %2345 = vmatpush1.msra.mxu0 0.0
    %2346 = vmatprep.subr.mxu0 0.0
    %2347 = vmatpush1.msra.mxu0 0.0
    %2348 = vmatprep.subr.mxu0 0.0
    %2349 = vmatpush1.msra.mxu0 0.0
    %2350 = vmatprep.subr.mxu0 0.0
    %2351 = vmatpush1.msra.mxu0 0.0
    %2352 = vmatprep.subr.mxu0 0.0
    %2353 = vmatpush1.msra.mxu0 0.0
    %2354 = vmatprep.mubr.f32.mxu0 0.0
    %2355 = vmatmul.mubr.f32.gmra.mrb[0].mxu0 %v2285
    %v2356 = vpop.f32.mrb[0].mxu0
    %v2357 = vadd.f32 %v2281, %v2356
    %v2358 = vpop.f32.mrb[0].mxu0
    %2359 = vmatprep.mubr.f32.mxu0 0.0
    %2360 = vmatmul.mubr.f32.gmra.mrb[0].mxu0 %v2288
    %v2361 = vpop.f32.mrb[0].mxu0
    %v2362 = vadd.f32 %v2281, %v2361
    %v2363 = vpop.f32.mrb[0].mxu0
    %2364 = vdwg.mxu0
    %v2365 = vadd.f32 %v2172, %v2357
    %v2366 = vadd.f32 %v2173, %v2362
    %v2367 = vld [vmem:[%s18] sm:$0x1]
    %v2368 = vld [vmem:[%s19] sm:$0x1]
    %v2369 = vsel %vm211, %v2365, 0.0
    %2370 = vadd.xlane.f32.xlu0 %v2369
    %v2371 = vpop.xlane.xlu0 %2370
    %v2372 = vsel %vm211, %v2366, 0.0
    %2373 = vadd.xlane.f32.xlu0 %v2372
    %v2374 = vpop.xlane.xlu0 %2373
    %v2375 = vmul.f32 %v2371, %v2137
    %v2376 = vmul.f32 %v2374, %v2137
    %v2377 = vsub.f32 %v2365, %v2375
    %v2378 = vsub.f32 %v2366, %v2376
    %v2379 = vmul.f32 %v2377, %v2377
    %v2380 = vmul.f32 %v2378, %v2378
    %v2381 = vsel %vm211, %v2379, 0.0
    %2382 = vadd.xlane.f32.xlu0 %v2381
    %v2383 = vpop.xlane.xlu0 %2382
    %v2384 = vsel %vm211, %v2380, 0.0
    %2385 = vadd.xlane.f32.xlu0 %v2384
    %v2386 = vpop.xlane.xlu0 %2385
    %v2387 = vmul.f32 %v2383, %v2137
    %v2388 = vmul.f32 %v2386, %v2137
    %v2389 = vadd.f32 %v2387, 1e-05
    %v2390 = vadd.f32 %v2388, 1e-05
    %v2391 = vrsqrt.pop %v2389
    %v2392 = vrsqrt.pop %v2390
    %v2393 = vmul.f32 %v2377, %v2391
    %v2394 = vmul.f32 %v2378, %v2392
    %v2396 = vlaneseq
    %v2397 = vshrl.u32 %v2396, 7
    %v2398 = vsub.s32 0, %v2397
    %v2399 = vrot.slane %v2367, %v2398
    %v2401 = vmul.f32 %v2393, %v2399
    %v2402 = vmul.f32 %v2394, %v2399
    %v2404 = vlaneseq
    %v2405 = vshrl.u32 %v2404, 7
    %v2406 = vsub.s32 0, %v2405
    %v2407 = vrot.slane %v2368, %v2406
    %v2409 = vadd.f32 %v2401, %v2407
    %v2410 = vadd.f32 %v2402, %v2407
    %s2411 = scalar_lea.vmem %s4, 32
    %v2412 = vld [vmem:[%s2411] sm:$0xff]
    %v2413 = vld [vmem:[%s2411 + $0x8] sm:$0xff]
    %v2414 = vld [vmem:[%s2411 + $0x10] sm:$0xff]
    %v2415 = vld [vmem:[%s2411 + $0x18] sm:$0xff]
    %s2416 = scalar_lea.vmem %s7, 1
    %v2417 = vld [vmem:[%s2416] sm:$0x1]
    %v2419 = vlaneseq
    %v2420 = vshrl.u32 %v2419, 7
    %v2421 = vsub.s32 0, %v2420
    %v2422 = vrot.slane %v2417, %v2421
    %v2425 = vsel %vm211, %v2409, 0
    %v2428 = vsel %vm211, %v2410, 0
    %2430 = vmatprep.subr.mxu0 0.0
    %2431 = vmatpush1.msra.mxu0 %v2412
    %2432 = vmatprep.subr.mxu0 0.0
    %2433 = vmatpush1.msra.mxu0 %v2413
    %2434 = vmatprep.subr.mxu0 0.0
    %2435 = vmatpush1.msra.mxu0 %v2414
    %2436 = vmatprep.subr.mxu0 0.0
    %2437 = vmatpush1.msra.mxu0 %v2415
    %2438 = vmatprep.subr.mxu0 0.0
    %2439 = vmatpush1.msra.mxu0 0.0
    %2440 = vmatprep.subr.mxu0 0.0
    %2441 = vmatpush1.msra.mxu0 0.0
    %2442 = vmatprep.subr.mxu0 0.0
    %2443 = vmatpush1.msra.mxu0 0.0
    %2444 = vmatprep.subr.mxu0 0.0
    %2445 = vmatpush1.msra.mxu0 0.0
    %2446 = vmatprep.subr.mxu0 0.0
    %2447 = vmatpush1.msra.mxu0 0.0
    %2448 = vmatprep.subr.mxu0 0.0
    %2449 = vmatpush1.msra.mxu0 0.0
    %2450 = vmatprep.subr.mxu0 0.0
    %2451 = vmatpush1.msra.mxu0 0.0
    %2452 = vmatprep.subr.mxu0 0.0
    %2453 = vmatpush1.msra.mxu0 0.0
    %2454 = vmatprep.subr.mxu0 0.0
    %2455 = vmatpush1.msra.mxu0 0.0
    %2456 = vmatprep.subr.mxu0 0.0
    %2457 = vmatpush1.msra.mxu0 0.0
    %2458 = vmatprep.subr.mxu0 0.0
    %2459 = vmatpush1.msra.mxu0 0.0
    %2460 = vmatprep.subr.mxu0 0.0
    %2461 = vmatpush1.msra.mxu0 0.0
    %2462 = vmatprep.subr.mxu0 0.0
    %2463 = vmatpush1.msra.mxu0 0.0
    %2464 = vmatprep.subr.mxu0 0.0
    %2465 = vmatpush1.msra.mxu0 0.0
    %2466 = vmatprep.subr.mxu0 0.0
    %2467 = vmatpush1.msra.mxu0 0.0
    %2468 = vmatprep.subr.mxu0 0.0
    %2469 = vmatpush1.msra.mxu0 0.0
    %2470 = vmatprep.subr.mxu0 0.0
    %2471 = vmatpush1.msra.mxu0 0.0
    %2472 = vmatprep.subr.mxu0 0.0
    %2473 = vmatpush1.msra.mxu0 0.0
    %2474 = vmatprep.subr.mxu0 0.0
    %2475 = vmatpush1.msra.mxu0 0.0
    %2476 = vmatprep.subr.mxu0 0.0
    %2477 = vmatpush1.msra.mxu0 0.0
    %2478 = vmatprep.subr.mxu0 0.0
    %2479 = vmatpush1.msra.mxu0 0.0
    %2480 = vmatprep.subr.mxu0 0.0
    %2481 = vmatpush1.msra.mxu0 0.0
    %2482 = vmatprep.subr.mxu0 0.0
    %2483 = vmatpush1.msra.mxu0 0.0
    %2484 = vmatprep.subr.mxu0 0.0
    %2485 = vmatpush1.msra.mxu0 0.0
    %2486 = vmatprep.subr.mxu0 0.0
    %2487 = vmatpush1.msra.mxu0 0.0
    %2488 = vmatprep.subr.mxu0 0.0
    %2489 = vmatpush1.msra.mxu0 0.0
    %2490 = vmatprep.subr.mxu0 0.0
    %2491 = vmatpush1.msra.mxu0 0.0
    %2492 = vmatprep.subr.mxu0 0.0
    %2493 = vmatpush1.msra.mxu0 0.0
    %2494 = vmatprep.mubr.f32.mxu0 0.0
    %2495 = vmatmul.mubr.f32.gmra.mrb[0].mxu0 %v2425
    %v2496 = vpop.f32.mrb[0].mxu0
    %v2497 = vadd.f32 %v2422, %v2496
    %v2498 = vpop.f32.mrb[0].mxu0
    %2499 = vmatprep.mubr.f32.mxu0 0.0
    %2500 = vmatmul.mubr.f32.gmra.mrb[0].mxu0 %v2428
    %v2501 = vpop.f32.mrb[0].mxu0
    %v2502 = vadd.f32 %v2422, %v2501
    %v2503 = vpop.f32.mrb[0].mxu0
    %2504 = vdwg.mxu0
    %s2505 = scalar_lea.vmem %s5, 32
    %v2506 = vld [vmem:[%s2505] sm:$0xff]
    %v2507 = vld [vmem:[%s2505 + $0x8] sm:$0xff]
    %v2508 = vld [vmem:[%s2505 + $0x10] sm:$0xff]
    %v2509 = vld [vmem:[%s2505 + $0x18] sm:$0xff]
    %s2510 = scalar_lea.vmem %s8, 1
    %v2511 = vld [vmem:[%s2510] sm:$0x1]
    %v2513 = vlaneseq
    %v2514 = vshrl.u32 %v2513, 7
    %v2515 = vsub.s32 0, %v2514
    %v2516 = vrot.slane %v2511, %v2515
    %2518 = vmatprep.subr.mxu0 0.0
    %2519 = vmatpush1.msra.mxu0 %v2506
    %2520 = vmatprep.subr.mxu0 0.0
    %2521 = vmatpush1.msra.mxu0 %v2507
    %2522 = vmatprep.subr.mxu0 0.0
    %2523 = vmatpush1.msra.mxu0 %v2508
    %2524 = vmatprep.subr.mxu0 0.0
    %2525 = vmatpush1.msra.mxu0 %v2509
    %2526 = vmatprep.subr.mxu0 0.0
    %2527 = vmatpush1.msra.mxu0 0.0
    %2528 = vmatprep.subr.mxu0 0.0
    %2529 = vmatpush1.msra.mxu0 0.0
    %2530 = vmatprep.subr.mxu0 0.0
    %2531 = vmatpush1.msra.mxu0 0.0
    %2532 = vmatprep.subr.mxu0 0.0
    %2533 = vmatpush1.msra.mxu0 0.0
    %2534 = vmatprep.subr.mxu0 0.0
    %2535 = vmatpush1.msra.mxu0 0.0
    %2536 = vmatprep.subr.mxu0 0.0
    %2537 = vmatpush1.msra.mxu0 0.0
    %2538 = vmatprep.subr.mxu0 0.0
    %2539 = vmatpush1.msra.mxu0 0.0
    %2540 = vmatprep.subr.mxu0 0.0
    %2541 = vmatpush1.msra.mxu0 0.0
    %2542 = vmatprep.subr.mxu0 0.0
    %2543 = vmatpush1.msra.mxu0 0.0
    %2544 = vmatprep.subr.mxu0 0.0
    %2545 = vmatpush1.msra.mxu0 0.0
    %2546 = vmatprep.subr.mxu0 0.0
    %2547 = vmatpush1.msra.mxu0 0.0
    %2548 = vmatprep.subr.mxu0 0.0
    %2549 = vmatpush1.msra.mxu0 0.0
    %2550 = vmatprep.subr.mxu0 0.0
    %2551 = vmatpush1.msra.mxu0 0.0
    %2552 = vmatprep.subr.mxu0 0.0
    %2553 = vmatpush1.msra.mxu0 0.0
    %2554 = vmatprep.subr.mxu0 0.0
    %2555 = vmatpush1.msra.mxu0 0.0
    %2556 = vmatprep.subr.mxu0 0.0
    %2557 = vmatpush1.msra.mxu0 0.0
    %2558 = vmatprep.subr.mxu0 0.0
    %2559 = vmatpush1.msra.mxu0 0.0
    %2560 = vmatprep.subr.mxu0 0.0
    %2561 = vmatpush1.msra.mxu0 0.0
    %2562 = vmatprep.subr.mxu0 0.0
    %2563 = vmatpush1.msra.mxu0 0.0
    %2564 = vmatprep.subr.mxu0 0.0
    %2565 = vmatpush1.msra.mxu0 0.0
    %2566 = vmatprep.subr.mxu0 0.0
    %2567 = vmatpush1.msra.mxu0 0.0
    %2568 = vmatprep.subr.mxu0 0.0
    %2569 = vmatpush1.msra.mxu0 0.0
    %2570 = vmatprep.subr.mxu0 0.0
    %2571 = vmatpush1.msra.mxu0 0.0
    %2572 = vmatprep.subr.mxu0 0.0
    %2573 = vmatpush1.msra.mxu0 0.0
    %2574 = vmatprep.subr.mxu0 0.0
    %2575 = vmatpush1.msra.mxu0 0.0
    %2576 = vmatprep.subr.mxu0 0.0
    %2577 = vmatpush1.msra.mxu0 0.0
    %2578 = vmatprep.subr.mxu0 0.0
    %2579 = vmatpush1.msra.mxu0 0.0
    %2580 = vmatprep.subr.mxu0 0.0
    %2581 = vmatpush1.msra.mxu0 0.0
    %2582 = vmatprep.mubr.f32.mxu0 0.0
    %2583 = vmatmul.mubr.f32.gmra.mrb[0].mxu0 %v2425
    %v2584 = vpop.f32.mrb[0].mxu0
    %v2585 = vadd.f32 %v2516, %v2584
    %v2586 = vpop.f32.mrb[0].mxu0
    %2587 = vmatprep.mubr.f32.mxu0 0.0
    %2588 = vmatmul.mubr.f32.gmra.mrb[0].mxu0 %v2428
    %v2589 = vpop.f32.mrb[0].mxu0
    %v2590 = vadd.f32 %v2516, %v2589
    %v2591 = vpop.f32.mrb[0].mxu0
    %2592 = vdwg.mxu0
    %s2593 = scalar_lea.vmem %s6, 32
    %v2594 = vld [vmem:[%s2593] sm:$0xff]
    %v2595 = vld [vmem:[%s2593 + $0x8] sm:$0xff]
    %v2596 = vld [vmem:[%s2593 + $0x10] sm:$0xff]
    %v2597 = vld [vmem:[%s2593 + $0x18] sm:$0xff]
    %s2598 = scalar_lea.vmem %s9, 1
    %v2599 = vld [vmem:[%s2598] sm:$0x1]
    %v2601 = vlaneseq
    %v2602 = vshrl.u32 %v2601, 7
    %v2603 = vsub.s32 0, %v2602
    %v2604 = vrot.slane %v2599, %v2603
    %2606 = vmatprep.subr.mxu0 0.0
    %2607 = vmatpush1.msra.mxu0 %v2594
    %2608 = vmatprep.subr.mxu0 0.0
    %2609 = vmatpush1.msra.mxu0 %v2595
    %2610 = vmatprep.subr.mxu0 0.0
    %2611 = vmatpush1.msra.mxu0 %v2596
    %2612 = vmatprep.subr.mxu0 0.0
    %2613 = vmatpush1.msra.mxu0 %v2597
    %2614 = vmatprep.subr.mxu0 0.0
    %2615 = vmatpush1.msra.mxu0 0.0
    %2616 = vmatprep.subr.mxu0 0.0
    %2617 = vmatpush1.msra.mxu0 0.0
    %2618 = vmatprep.subr.mxu0 0.0
    %2619 = vmatpush1.msra.mxu0 0.0
    %2620 = vmatprep.subr.mxu0 0.0
    %2621 = vmatpush1.msra.mxu0 0.0
    %2622 = vmatprep.subr.mxu0 0.0
    %2623 = vmatpush1.msra.mxu0 0.0
    %2624 = vmatprep.subr.mxu0 0.0
    %2625 = vmatpush1.msra.mxu0 0.0
    %2626 = vmatprep.subr.mxu0 0.0
    %2627 = vmatpush1.msra.mxu0 0.0
    %2628 = vmatprep.subr.mxu0 0.0
    %2629 = vmatpush1.msra.mxu0 0.0
    %2630 = vmatprep.subr.mxu0 0.0
    %2631 = vmatpush1.msra.mxu0 0.0
    %2632 = vmatprep.subr.mxu0 0.0
    %2633 = vmatpush1.msra.mxu0 0.0
    %2634 = vmatprep.subr.mxu0 0.0
    %2635 = vmatpush1.msra.mxu0 0.0
    %2636 = vmatprep.subr.mxu0 0.0
    %2637 = vmatpush1.msra.mxu0 0.0
    %2638 = vmatprep.subr.mxu0 0.0
    %2639 = vmatpush1.msra.mxu0 0.0
    %2640 = vmatprep.subr.mxu0 0.0
    %2641 = vmatpush1.msra.mxu0 0.0
    %2642 = vmatprep.subr.mxu0 0.0
    %2643 = vmatpush1.msra.mxu0 0.0
    %2644 = vmatprep.subr.mxu0 0.0
    %2645 = vmatpush1.msra.mxu0 0.0
    %2646 = vmatprep.subr.mxu0 0.0
    %2647 = vmatpush1.msra.mxu0 0.0
    %2648 = vmatprep.subr.mxu0 0.0
    %2649 = vmatpush1.msra.mxu0 0.0
    %2650 = vmatprep.subr.mxu0 0.0
    %2651 = vmatpush1.msra.mxu0 0.0
    %2652 = vmatprep.subr.mxu0 0.0
    %2653 = vmatpush1.msra.mxu0 0.0
    %2654 = vmatprep.subr.mxu0 0.0
    %2655 = vmatpush1.msra.mxu0 0.0
    %2656 = vmatprep.subr.mxu0 0.0
    %2657 = vmatpush1.msra.mxu0 0.0
    %2658 = vmatprep.subr.mxu0 0.0
    %2659 = vmatpush1.msra.mxu0 0.0
    %2660 = vmatprep.subr.mxu0 0.0
    %2661 = vmatpush1.msra.mxu0 0.0
    %2662 = vmatprep.subr.mxu0 0.0
    %2663 = vmatpush1.msra.mxu0 0.0
    %2664 = vmatprep.subr.mxu0 0.0
    %2665 = vmatpush1.msra.mxu0 0.0
    %2666 = vmatprep.subr.mxu0 0.0
    %2667 = vmatpush1.msra.mxu0 0.0
    %2668 = vmatprep.subr.mxu0 0.0
    %2669 = vmatpush1.msra.mxu0 0.0
    %2670 = vmatprep.mubr.f32.mxu0 0.0
    %2671 = vmatmul.mubr.f32.gmra.mrb[0].mxu0 %v2425
    %v2672 = vpop.f32.mrb[0].mxu0
    %v2673 = vadd.f32 %v2604, %v2672
    %v2674 = vpop.f32.mrb[0].mxu0
    %2675 = vmatprep.mubr.f32.mxu0 0.0
    %2676 = vmatmul.mubr.f32.gmra.mrb[0].mxu0 %v2428
    %v2677 = vpop.f32.mrb[0].mxu0
    %v2678 = vadd.f32 %v2604, %v2677
    %v2679 = vpop.f32.mrb[0].mxu0
    %2680 = vdwg.mxu0
    %s2681 = scalar_lea.vmem [#allocation2], 32
    %v2682 = vld [vmem:[%s2681] sm:$0xff]
    %v2683 = vld [vmem:[%s2681 + $0x8] sm:$0xff]
    %v2684 = vld [vmem:[%s2681 + $0x10] sm:$0xff]
    %v2685 = vld [vmem:[%s2681 + $0x18] sm:$0xff]
    %v2687 = vsel %vm469, %v2497, 0
    %v2690 = vsel %vm469, %v2585, 0
    %2692 = vmatprep.subr.mxu0 0.0
    %2693 = vmatpush1.xpose.msra.mxu0 %v2690
    %2694 = vmatprep.subr.mxu0 0.0
    %2695 = vmatpush1.xpose.msra.mxu0 0.0
    %2696 = vmatprep.subr.mxu0 0.0
    %2697 = vmatpush1.xpose.msra.mxu0 0.0
    %2698 = vmatprep.subr.mxu0 0.0
    %2699 = vmatpush1.xpose.msra.mxu0 0.0
    %2700 = vmatprep.subr.mxu0 0.0
    %2701 = vmatpush1.xpose.msra.mxu0 0.0
    %2702 = vmatprep.subr.mxu0 0.0
    %2703 = vmatpush1.xpose.msra.mxu0 0.0
    %2704 = vmatprep.subr.mxu0 0.0
    %2705 = vmatpush1.xpose.msra.mxu0 0.0
    %2706 = vmatprep.subr.mxu0 0.0
    %2707 = vmatpush1.xpose.msra.mxu0 0.0
    %2708 = vmatprep.subr.mxu0 0.0
    %2709 = vmatpush1.xpose.msra.mxu0 0.0
    %2710 = vmatprep.subr.mxu0 0.0
    %2711 = vmatpush1.xpose.msra.mxu0 0.0
    %2712 = vmatprep.subr.mxu0 0.0
    %2713 = vmatpush1.xpose.msra.mxu0 0.0
    %2714 = vmatprep.subr.mxu0 0.0
    %2715 = vmatpush1.xpose.msra.mxu0 0.0
    %2716 = vmatprep.subr.mxu0 0.0
    %2717 = vmatpush1.xpose.msra.mxu0 0.0
    %2718 = vmatprep.subr.mxu0 0.0
    %2719 = vmatpush1.xpose.msra.mxu0 0.0
    %2720 = vmatprep.subr.mxu0 0.0
    %2721 = vmatpush1.xpose.msra.mxu0 0.0
    %2722 = vmatprep.subr.mxu0 0.0
    %2723 = vmatpush1.xpose.msra.mxu0 0.0
    %2724 = vmatprep.subr.mxu0 0.0
    %2725 = vmatpush1.xpose.msra.mxu0 0.0
    %2726 = vmatprep.subr.mxu0 0.0
    %2727 = vmatpush1.xpose.msra.mxu0 0.0
    %2728 = vmatprep.subr.mxu0 0.0
    %2729 = vmatpush1.xpose.msra.mxu0 0.0
    %2730 = vmatprep.subr.mxu0 0.0
    %2731 = vmatpush1.xpose.msra.mxu0 0.0
    %2732 = vmatprep.subr.mxu0 0.0
    %2733 = vmatpush1.xpose.msra.mxu0 0.0
    %2734 = vmatprep.subr.mxu0 0.0
    %2735 = vmatpush1.xpose.msra.mxu0 0.0
    %2736 = vmatprep.subr.mxu0 0.0
    %2737 = vmatpush1.xpose.msra.mxu0 0.0
    %2738 = vmatprep.subr.mxu0 0.0
    %2739 = vmatpush1.xpose.msra.mxu0 0.0
    %2740 = vmatprep.subr.mxu0 0.0
    %2741 = vmatpush1.xpose.msra.mxu0 0.0
    %2742 = vmatprep.subr.mxu0 0.0
    %2743 = vmatpush1.xpose.msra.mxu0 0.0
    %2744 = vmatprep.subr.mxu0 0.0
    %2745 = vmatpush1.xpose.msra.mxu0 0.0
    %2746 = vmatprep.subr.mxu0 0.0
    %2747 = vmatpush1.xpose.msra.mxu0 0.0
    %2748 = vmatprep.subr.mxu0 0.0
    %2749 = vmatpush1.xpose.msra.mxu0 0.0
    %2750 = vmatprep.subr.mxu0 0.0
    %2751 = vmatpush1.xpose.msra.mxu0 0.0
    %2752 = vmatprep.subr.mxu0 0.0
    %2753 = vmatpush1.xpose.msra.mxu0 0.0
    %2754 = vmatprep.subr.mxu0 0.0
    %2755 = vmatpush1.xpose.msra.mxu0 0.0
    %2756 = vmatprep.mubr.f32.mxu0 0.0
    %2757 = vmatmul.mubr.f32.gmra.mrb[0].mxu0 %v2687
    %v2758 = vpop.f32.mrb[0].mxu0
    %v2759 = vadd.f32 0.0, %v2758
    %v2760 = vpop.f32.mrb[0].mxu0
    %2761 = vdwg.mxu0
    %v2763 = vsel %vm469, %v2502, 0
    %v2766 = vsel %vm469, %v2590, 0
    %2768 = vmatprep.subr.mxu0 0.0
    %2769 = vmatpush1.xpose.msra.mxu0 %v2766
    %2770 = vmatprep.subr.mxu0 0.0
    %2771 = vmatpush1.xpose.msra.mxu0 0.0
    %2772 = vmatprep.subr.mxu0 0.0
    %2773 = vmatpush1.xpose.msra.mxu0 0.0
    %2774 = vmatprep.subr.mxu0 0.0
    %2775 = vmatpush1.xpose.msra.mxu0 0.0
    %2776 = vmatprep.subr.mxu0 0.0
    %2777 = vmatpush1.xpose.msra.mxu0 0.0
    %2778 = vmatprep.subr.mxu0 0.0
    %2779 = vmatpush1.xpose.msra.mxu0 0.0
    %2780 = vmatprep.subr.mxu0 0.0
    %2781 = vmatpush1.xpose.msra.mxu0 0.0
    %2782 = vmatprep.subr.mxu0 0.0
    %2783 = vmatpush1.xpose.msra.mxu0 0.0
    %2784 = vmatprep.subr.mxu0 0.0
    %2785 = vmatpush1.xpose.msra.mxu0 0.0
    %2786 = vmatprep.subr.mxu0 0.0
    %2787 = vmatpush1.xpose.msra.mxu0 0.0
    %2788 = vmatprep.subr.mxu0 0.0
    %2789 = vmatpush1.xpose.msra.mxu0 0.0
    %2790 = vmatprep.subr.mxu0 0.0
    %2791 = vmatpush1.xpose.msra.mxu0 0.0
    %2792 = vmatprep.subr.mxu0 0.0
    %2793 = vmatpush1.xpose.msra.mxu0 0.0
    %2794 = vmatprep.subr.mxu0 0.0
    %2795 = vmatpush1.xpose.msra.mxu0 0.0
    %2796 = vmatprep.subr.mxu0 0.0
    %2797 = vmatpush1.xpose.msra.mxu0 0.0
    %2798 = vmatprep.subr.mxu0 0.0
    %2799 = vmatpush1.xpose.msra.mxu0 0.0
    %2800 = vmatprep.subr.mxu0 0.0
    %2801 = vmatpush1.xpose.msra.mxu0 0.0
    %2802 = vmatprep.subr.mxu0 0.0
    %2803 = vmatpush1.xpose.msra.mxu0 0.0
    %2804 = vmatprep.subr.mxu0 0.0
    %2805 = vmatpush1.xpose.msra.mxu0 0.0
    %2806 = vmatprep.subr.mxu0 0.0
    %2807 = vmatpush1.xpose.msra.mxu0 0.0
    %2808 = vmatprep.subr.mxu0 0.0
    %2809 = vmatpush1.xpose.msra.mxu0 0.0
    %2810 = vmatprep.subr.mxu0 0.0
    %2811 = vmatpush1.xpose.msra.mxu0 0.0
    %2812 = vmatprep.subr.mxu0 0.0
    %2813 = vmatpush1.xpose.msra.mxu0 0.0
    %2814 = vmatprep.subr.mxu0 0.0
    %2815 = vmatpush1.xpose.msra.mxu0 0.0
    %2816 = vmatprep.subr.mxu0 0.0
    %2817 = vmatpush1.xpose.msra.mxu0 0.0
    %2818 = vmatprep.subr.mxu0 0.0
    %2819 = vmatpush1.xpose.msra.mxu0 0.0
    %2820 = vmatprep.subr.mxu0 0.0
    %2821 = vmatpush1.xpose.msra.mxu0 0.0
    %2822 = vmatprep.subr.mxu0 0.0
    %2823 = vmatpush1.xpose.msra.mxu0 0.0
    %2824 = vmatprep.subr.mxu0 0.0
    %2825 = vmatpush1.xpose.msra.mxu0 0.0
    %2826 = vmatprep.subr.mxu0 0.0
    %2827 = vmatpush1.xpose.msra.mxu0 0.0
    %2828 = vmatprep.subr.mxu0 0.0
    %2829 = vmatpush1.xpose.msra.mxu0 0.0
    %2830 = vmatprep.subr.mxu0 0.0
    %2831 = vmatpush1.xpose.msra.mxu0 0.0
    %2832 = vmatprep.mubr.f32.mxu0 0.0
    %2833 = vmatmul.mubr.f32.gmra.mrb[0].mxu0 %v2763
    %v2834 = vpop.f32.mrb[0].mxu0
    %v2835 = vadd.f32 0.0, %v2834
    %v2836 = vpop.f32.mrb[0].mxu0
    %2837 = vdwg.mxu0
    %v2838 = vmul.f32 %v2759, 0.35355338
    %v2839 = vmul.f32 %v2835, 0.35355338
    %v2840 = vsel %vm469, %v2838, -inf
    %2841 = vmax.xlane.f32.xlu0 %v2840
    %v2842 = vpop.xlane.xlu0 %2841
    %v2843 = vsel %vm469, %v2839, -inf
    %2844 = vmax.xlane.f32.xlu0 %v2843
    %v2845 = vpop.xlane.xlu0 %2844
    %v2846 = vsub.f32 %v2838, %v2842
    %v2847 = vsub.f32 %v2839, %v2845
    %v2848 = vmul.f32 %v2846, 1.442695
    %v2849 = vpow.pop %v2848
    %v2850 = vmul.f32 %v2847, 1.442695
    %v2851 = vpow.pop %v2850
    %v2852 = vsel %vm469, %v2849, 0.0
    %2853 = vadd.xlane.f32.xlu0 %v2852
    %v2854 = vpop.xlane.xlu0 %2853
    %v2855 = vsel %vm469, %v2851, 0.0
    %2856 = vadd.xlane.f32.xlu0 %v2855
    %v2857 = vpop.xlane.xlu0 %2856
    %v2858 = vrcp.pop %v2854
    %v2859 = vrcp.pop %v2857
    %v2860 = vmul.f32 %v2849, %v2858
    %v2861 = vmul.f32 %v2851, %v2859
    %v2863 = vsel %vm469, %v2860, 0
    %2865 = vmatprep.subr.mxu0 0.0
    %2866 = vmatpush1.msra.mxu0 %v2673
    %2867 = vmatprep.subr.mxu0 0.0
    %2868 = vmatpush1.msra.mxu0 0.0
    %2869 = vmatprep.subr.mxu0 0.0
    %2870 = vmatpush1.msra.mxu0 0.0
    %2871 = vmatprep.subr.mxu0 0.0
    %2872 = vmatpush1.msra.mxu0 0.0
    %2873 = vmatprep.subr.mxu0 0.0
    %2874 = vmatpush1.msra.mxu0 0.0
    %2875 = vmatprep.subr.mxu0 0.0
    %2876 = vmatpush1.msra.mxu0 0.0
    %2877 = vmatprep.subr.mxu0 0.0
    %2878 = vmatpush1.msra.mxu0 0.0
    %2879 = vmatprep.subr.mxu0 0.0
    %2880 = vmatpush1.msra.mxu0 0.0
    %2881 = vmatprep.subr.mxu0 0.0
    %2882 = vmatpush1.msra.mxu0 0.0
    %2883 = vmatprep.subr.mxu0 0.0
    %2884 = vmatpush1.msra.mxu0 0.0
    %2885 = vmatprep.subr.mxu0 0.0
    %2886 = vmatpush1.msra.mxu0 0.0
    %2887 = vmatprep.subr.mxu0 0.0
    %2888 = vmatpush1.msra.mxu0 0.0
    %2889 = vmatprep.subr.mxu0 0.0
    %2890 = vmatpush1.msra.mxu0 0.0
    %2891 = vmatprep.subr.mxu0 0.0
    %2892 = vmatpush1.msra.mxu0 0.0
    %2893 = vmatprep.subr.mxu0 0.0
    %2894 = vmatpush1.msra.mxu0 0.0
    %2895 = vmatprep.subr.mxu0 0.0
    %2896 = vmatpush1.msra.mxu0 0.0
    %2897 = vmatprep.subr.mxu0 0.0
    %2898 = vmatpush1.msra.mxu0 0.0
    %2899 = vmatprep.subr.mxu0 0.0
    %2900 = vmatpush1.msra.mxu0 0.0
    %2901 = vmatprep.subr.mxu0 0.0
    %2902 = vmatpush1.msra.mxu0 0.0
    %2903 = vmatprep.subr.mxu0 0.0
    %2904 = vmatpush1.msra.mxu0 0.0
    %2905 = vmatprep.subr.mxu0 0.0
    %2906 = vmatpush1.msra.mxu0 0.0
    %2907 = vmatprep.subr.mxu0 0.0
    %2908 = vmatpush1.msra.mxu0 0.0
    %2909 = vmatprep.subr.mxu0 0.0
    %2910 = vmatpush1.msra.mxu0 0.0
    %2911 = vmatprep.subr.mxu0 0.0
    %2912 = vmatpush1.msra.mxu0 0.0
    %2913 = vmatprep.subr.mxu0 0.0
    %2914 = vmatpush1.msra.mxu0 0.0
    %2915 = vmatprep.subr.mxu0 0.0
    %2916 = vmatpush1.msra.mxu0 0.0
    %2917 = vmatprep.subr.mxu0 0.0
    %2918 = vmatpush1.msra.mxu0 0.0
    %2919 = vmatprep.subr.mxu0 0.0
    %2920 = vmatpush1.msra.mxu0 0.0
    %2921 = vmatprep.subr.mxu0 0.0
    %2922 = vmatpush1.msra.mxu0 0.0
    %2923 = vmatprep.subr.mxu0 0.0
    %2924 = vmatpush1.msra.mxu0 0.0
    %2925 = vmatprep.subr.mxu0 0.0
    %2926 = vmatpush1.msra.mxu0 0.0
    %2927 = vmatprep.subr.mxu0 0.0
    %2928 = vmatpush1.msra.mxu0 0.0
    %2929 = vmatprep.mubr.f32.mxu0 0.0
    %2930 = vmatmul.mubr.f32.gmra.mrb[0].mxu0 %v2863
    %v2931 = vpop.f32.mrb[0].mxu0
    %v2932 = vadd.f32 0.0, %v2931
    %v2933 = vpop.f32.mrb[0].mxu0
    %2934 = vdwg.mxu0
    %v2936 = vsel %vm469, %v2861, 0
    %2938 = vmatprep.subr.mxu0 0.0
    %2939 = vmatpush1.msra.mxu0 %v2678
    %2940 = vmatprep.subr.mxu0 0.0
    %2941 = vmatpush1.msra.mxu0 0.0
    %2942 = vmatprep.subr.mxu0 0.0
    %2943 = vmatpush1.msra.mxu0 0.0
    %2944 = vmatprep.subr.mxu0 0.0
    %2945 = vmatpush1.msra.mxu0 0.0
    %2946 = vmatprep.subr.mxu0 0.0
    %2947 = vmatpush1.msra.mxu0 0.0
    %2948 = vmatprep.subr.mxu0 0.0
    %2949 = vmatpush1.msra.mxu0 0.0
    %2950 = vmatprep.subr.mxu0 0.0
    %2951 = vmatpush1.msra.mxu0 0.0
    %2952 = vmatprep.subr.mxu0 0.0
    %2953 = vmatpush1.msra.mxu0 0.0
    %2954 = vmatprep.subr.mxu0 0.0
    %2955 = vmatpush1.msra.mxu0 0.0
    %2956 = vmatprep.subr.mxu0 0.0
    %2957 = vmatpush1.msra.mxu0 0.0
    %2958 = vmatprep.subr.mxu0 0.0
    %2959 = vmatpush1.msra.mxu0 0.0
    %2960 = vmatprep.subr.mxu0 0.0
    %2961 = vmatpush1.msra.mxu0 0.0
    %2962 = vmatprep.subr.mxu0 0.0
    %2963 = vmatpush1.msra.mxu0 0.0
    %2964 = vmatprep.subr.mxu0 0.0
    %2965 = vmatpush1.msra.mxu0 0.0
    %2966 = vmatprep.subr.mxu0 0.0
    %2967 = vmatpush1.msra.mxu0 0.0
    %2968 = vmatprep.subr.mxu0 0.0
    %2969 = vmatpush1.msra.mxu0 0.0
    %2970 = vmatprep.subr.mxu0 0.0
    %2971 = vmatpush1.msra.mxu0 0.0
    %2972 = vmatprep.subr.mxu0 0.0
    %2973 = vmatpush1.msra.mxu0 0.0
    %2974 = vmatprep.subr.mxu0 0.0
    %2975 = vmatpush1.msra.mxu0 0.0
    %2976 = vmatprep.subr.mxu0 0.0
    %2977 = vmatpush1.msra.mxu0 0.0
    %2978 = vmatprep.subr.mxu0 0.0
    %2979 = vmatpush1.msra.mxu0 0.0
    %2980 = vmatprep.subr.mxu0 0.0
    %2981 = vmatpush1.msra.mxu0 0.0
    %2982 = vmatprep.subr.mxu0 0.0
    %2983 = vmatpush1.msra.mxu0 0.0
    %2984 = vmatprep.subr.mxu0 0.0
    %2985 = vmatpush1.msra.mxu0 0.0
    %2986 = vmatprep.subr.mxu0 0.0
    %2987 = vmatpush1.msra.mxu0 0.0
    %2988 = vmatprep.subr.mxu0 0.0
    %2989 = vmatpush1.msra.mxu0 0.0
    %2990 = vmatprep.subr.mxu0 0.0
    %2991 = vmatpush1.msra.mxu0 0.0
    %2992 = vmatprep.subr.mxu0 0.0
    %2993 = vmatpush1.msra.mxu0 0.0
    %2994 = vmatprep.subr.mxu0 0.0
    %2995 = vmatpush1.msra.mxu0 0.0
    %2996 = vmatprep.subr.mxu0 0.0
    %2997 = vmatpush1.msra.mxu0 0.0
    %2998 = vmatprep.subr.mxu0 0.0
    %2999 = vmatpush1.msra.mxu0 0.0
    %3000 = vmatprep.subr.mxu0 0.0
    %3001 = vmatpush1.msra.mxu0 0.0
    %3002 = vmatprep.mubr.f32.mxu0 0.0
    %3003 = vmatmul.mubr.f32.gmra.mrb[0].mxu0 %v2936
    %v3004 = vpop.f32.mrb[0].mxu0
    %v3005 = vadd.f32 0.0, %v3004
    %v3006 = vpop.f32.mrb[0].mxu0
    %3007 = vdwg.mxu0
    %3008 = vrot.lane.b32.xlu0 %v2497, 120
    %v3009 = vpop.permute.xlu0 %3008
    %3010 = vrot.lane.b32.xlu0 %v2585, 120
    %v3011 = vpop.permute.xlu0 %3010
    %v3012 = vsel %vm469, %v3009, 0
    %v3014 = vsel %vm469, %v3011, 0
    %3016 = vmatprep.subr.mxu0 0.0
    %3017 = vmatpush1.xpose.msra.mxu0 %v3014
    %3018 = vmatprep.subr.mxu0 0.0
    %3019 = vmatpush1.xpose.msra.mxu0 0.0
    %3020 = vmatprep.subr.mxu0 0.0
    %3021 = vmatpush1.xpose.msra.mxu0 0.0
    %3022 = vmatprep.subr.mxu0 0.0
    %3023 = vmatpush1.xpose.msra.mxu0 0.0
    %3024 = vmatprep.subr.mxu0 0.0
    %3025 = vmatpush1.xpose.msra.mxu0 0.0
    %3026 = vmatprep.subr.mxu0 0.0
    %3027 = vmatpush1.xpose.msra.mxu0 0.0
    %3028 = vmatprep.subr.mxu0 0.0
    %3029 = vmatpush1.xpose.msra.mxu0 0.0
    %3030 = vmatprep.subr.mxu0 0.0
    %3031 = vmatpush1.xpose.msra.mxu0 0.0
    %3032 = vmatprep.subr.mxu0 0.0
    %3033 = vmatpush1.xpose.msra.mxu0 0.0
    %3034 = vmatprep.subr.mxu0 0.0
    %3035 = vmatpush1.xpose.msra.mxu0 0.0
    %3036 = vmatprep.subr.mxu0 0.0
    %3037 = vmatpush1.xpose.msra.mxu0 0.0
    %3038 = vmatprep.subr.mxu0 0.0
    %3039 = vmatpush1.xpose.msra.mxu0 0.0
    %3040 = vmatprep.subr.mxu0 0.0
    %3041 = vmatpush1.xpose.msra.mxu0 0.0
    %3042 = vmatprep.subr.mxu0 0.0
    %3043 = vmatpush1.xpose.msra.mxu0 0.0
    %3044 = vmatprep.subr.mxu0 0.0
    %3045 = vmatpush1.xpose.msra.mxu0 0.0
    %3046 = vmatprep.subr.mxu0 0.0
    %3047 = vmatpush1.xpose.msra.mxu0 0.0
    %3048 = vmatprep.subr.mxu0 0.0
    %3049 = vmatpush1.xpose.msra.mxu0 0.0
    %3050 = vmatprep.subr.mxu0 0.0
    %3051 = vmatpush1.xpose.msra.mxu0 0.0
    %3052 = vmatprep.subr.mxu0 0.0
    %3053 = vmatpush1.xpose.msra.mxu0 0.0
    %3054 = vmatprep.subr.mxu0 0.0
    %3055 = vmatpush1.xpose.msra.mxu0 0.0
    %3056 = vmatprep.subr.mxu0 0.0
    %3057 = vmatpush1.xpose.msra.mxu0 0.0
    %3058 = vmatprep.subr.mxu0 0.0
    %3059 = vmatpush1.xpose.msra.mxu0 0.0
    %3060 = vmatprep.subr.mxu0 0.0
    %3061 = vmatpush1.xpose.msra.mxu0 0.0
    %3062 = vmatprep.subr.mxu0 0.0
    %3063 = vmatpush1.xpose.msra.mxu0 0.0
    %3064 = vmatprep.subr.mxu0 0.0
    %3065 = vmatpush1.xpose.msra.mxu0 0.0
    %3066 = vmatprep.subr.mxu0 0.0
    %3067 = vmatpush1.xpose.msra.mxu0 0.0
    %3068 = vmatprep.subr.mxu0 0.0
    %3069 = vmatpush1.xpose.msra.mxu0 0.0
    %3070 = vmatprep.subr.mxu0 0.0
    %3071 = vmatpush1.xpose.msra.mxu0 0.0
    %3072 = vmatprep.subr.mxu0 0.0
    %3073 = vmatpush1.xpose.msra.mxu0 0.0
    %3074 = vmatprep.subr.mxu0 0.0
    %3075 = vmatpush1.xpose.msra.mxu0 0.0
    %3076 = vmatprep.subr.mxu0 0.0
    %3077 = vmatpush1.xpose.msra.mxu0 0.0
    %3078 = vmatprep.subr.mxu0 0.0
    %3079 = vmatpush1.xpose.msra.mxu0 0.0
    %3080 = vmatprep.mubr.f32.mxu0 0.0
    %3081 = vmatmul.mubr.f32.gmra.mrb[0].mxu0 %v3012
    %v3082 = vpop.f32.mrb[0].mxu0
    %v3083 = vadd.f32 0.0, %v3082
    %v3084 = vpop.f32.mrb[0].mxu0
    %3085 = vdwg.mxu0
    %3086 = vrot.lane.b32.xlu0 %v2502, 120
    %v3087 = vpop.permute.xlu0 %3086
    %3088 = vrot.lane.b32.xlu0 %v2590, 120
    %v3089 = vpop.permute.xlu0 %3088
    %v3090 = vsel %vm469, %v3087, 0
    %v3092 = vsel %vm469, %v3089, 0
    %3094 = vmatprep.subr.mxu0 0.0
    %3095 = vmatpush1.xpose.msra.mxu0 %v3092
    %3096 = vmatprep.subr.mxu0 0.0
    %3097 = vmatpush1.xpose.msra.mxu0 0.0
    %3098 = vmatprep.subr.mxu0 0.0
    %3099 = vmatpush1.xpose.msra.mxu0 0.0
    %3100 = vmatprep.subr.mxu0 0.0
    %3101 = vmatpush1.xpose.msra.mxu0 0.0
    %3102 = vmatprep.subr.mxu0 0.0
    %3103 = vmatpush1.xpose.msra.mxu0 0.0
    %3104 = vmatprep.subr.mxu0 0.0
    %3105 = vmatpush1.xpose.msra.mxu0 0.0
    %3106 = vmatprep.subr.mxu0 0.0
    %3107 = vmatpush1.xpose.msra.mxu0 0.0
    %3108 = vmatprep.subr.mxu0 0.0
    %3109 = vmatpush1.xpose.msra.mxu0 0.0
    %3110 = vmatprep.subr.mxu0 0.0
    %3111 = vmatpush1.xpose.msra.mxu0 0.0
    %3112 = vmatprep.subr.mxu0 0.0
    %3113 = vmatpush1.xpose.msra.mxu0 0.0
    %3114 = vmatprep.subr.mxu0 0.0
    %3115 = vmatpush1.xpose.msra.mxu0 0.0
    %3116 = vmatprep.subr.mxu0 0.0
    %3117 = vmatpush1.xpose.msra.mxu0 0.0
    %3118 = vmatprep.subr.mxu0 0.0
    %3119 = vmatpush1.xpose.msra.mxu0 0.0
    %3120 = vmatprep.subr.mxu0 0.0
    %3121 = vmatpush1.xpose.msra.mxu0 0.0
    %3122 = vmatprep.subr.mxu0 0.0
    %3123 = vmatpush1.xpose.msra.mxu0 0.0
    %3124 = vmatprep.subr.mxu0 0.0
    %3125 = vmatpush1.xpose.msra.mxu0 0.0
    %3126 = vmatprep.subr.mxu0 0.0
    %3127 = vmatpush1.xpose.msra.mxu0 0.0
    %3128 = vmatprep.subr.mxu0 0.0
    %3129 = vmatpush1.xpose.msra.mxu0 0.0
    %3130 = vmatprep.subr.mxu0 0.0
    %3131 = vmatpush1.xpose.msra.mxu0 0.0
    %3132 = vmatprep.subr.mxu0 0.0
    %3133 = vmatpush1.xpose.msra.mxu0 0.0
    %3134 = vmatprep.subr.mxu0 0.0
    %3135 = vmatpush1.xpose.msra.mxu0 0.0
    %3136 = vmatprep.subr.mxu0 0.0
    %3137 = vmatpush1.xpose.msra.mxu0 0.0
    %3138 = vmatprep.subr.mxu0 0.0
    %3139 = vmatpush1.xpose.msra.mxu0 0.0
    %3140 = vmatprep.subr.mxu0 0.0
    %3141 = vmatpush1.xpose.msra.mxu0 0.0
    %3142 = vmatprep.subr.mxu0 0.0
    %3143 = vmatpush1.xpose.msra.mxu0 0.0
    %3144 = vmatprep.subr.mxu0 0.0
    %3145 = vmatpush1.xpose.msra.mxu0 0.0
    %3146 = vmatprep.subr.mxu0 0.0
    %3147 = vmatpush1.xpose.msra.mxu0 0.0
    %3148 = vmatprep.subr.mxu0 0.0
    %3149 = vmatpush1.xpose.msra.mxu0 0.0
    %3150 = vmatprep.subr.mxu0 0.0
    %3151 = vmatpush1.xpose.msra.mxu0 0.0
    %3152 = vmatprep.subr.mxu0 0.0
    %3153 = vmatpush1.xpose.msra.mxu0 0.0
    %3154 = vmatprep.subr.mxu0 0.0
    %3155 = vmatpush1.xpose.msra.mxu0 0.0
    %3156 = vmatprep.subr.mxu0 0.0
    %3157 = vmatpush1.xpose.msra.mxu0 0.0
    %3158 = vmatprep.mubr.f32.mxu0 0.0
    %3159 = vmatmul.mubr.f32.gmra.mrb[0].mxu0 %v3090
    %v3160 = vpop.f32.mrb[0].mxu0
    %v3161 = vadd.f32 0.0, %v3160
    %v3162 = vpop.f32.mrb[0].mxu0
    %3163 = vdwg.mxu0
    %v3164 = vmul.f32 %v3083, 0.35355338
    %v3165 = vmul.f32 %v3161, 0.35355338
    %v3166 = vsel %vm469, %v3164, -inf
    %3167 = vmax.xlane.f32.xlu0 %v3166
    %v3168 = vpop.xlane.xlu0 %3167
    %v3169 = vsel %vm469, %v3165, -inf
    %3170 = vmax.xlane.f32.xlu0 %v3169
    %v3171 = vpop.xlane.xlu0 %3170
    %v3172 = vsub.f32 %v3164, %v3168
    %v3173 = vsub.f32 %v3165, %v3171
    %v3174 = vmul.f32 %v3172, 1.442695
    %v3175 = vpow.pop %v3174
    %v3176 = vmul.f32 %v3173, 1.442695
    %v3177 = vpow.pop %v3176
    %v3178 = vsel %vm469, %v3175, 0.0
    %3179 = vadd.xlane.f32.xlu0 %v3178
    %v3180 = vpop.xlane.xlu0 %3179
    %v3181 = vsel %vm469, %v3177, 0.0
    %3182 = vadd.xlane.f32.xlu0 %v3181
    %v3183 = vpop.xlane.xlu0 %3182
    %v3184 = vrcp.pop %v3180
    %v3185 = vrcp.pop %v3183
    %v3186 = vmul.f32 %v3175, %v3184
    %v3187 = vmul.f32 %v3177, %v3185
    %3189 = vrot.lane.b32.xlu0 %v2673, 120
    %v3190 = vpop.permute.xlu0 %3189
    %v3193 = vsel %vm469, %v3186, 0
    %3195 = vmatprep.subr.mxu0 0.0
    %3196 = vmatpush1.msra.mxu0 %v3190
    %3197 = vmatprep.subr.mxu0 0.0
    %3198 = vmatpush1.msra.mxu0 0.0
    %3199 = vmatprep.subr.mxu0 0.0
    %3200 = vmatpush1.msra.mxu0 0.0
    %3201 = vmatprep.subr.mxu0 0.0
    %3202 = vmatpush1.msra.mxu0 0.0
    %3203 = vmatprep.subr.mxu0 0.0
    %3204 = vmatpush1.msra.mxu0 0.0
    %3205 = vmatprep.subr.mxu0 0.0
    %3206 = vmatpush1.msra.mxu0 0.0
    %3207 = vmatprep.subr.mxu0 0.0
    %3208 = vmatpush1.msra.mxu0 0.0
    %3209 = vmatprep.subr.mxu0 0.0
    %3210 = vmatpush1.msra.mxu0 0.0
    %3211 = vmatprep.subr.mxu0 0.0
    %3212 = vmatpush1.msra.mxu0 0.0
    %3213 = vmatprep.subr.mxu0 0.0
    %3214 = vmatpush1.msra.mxu0 0.0
    %3215 = vmatprep.subr.mxu0 0.0
    %3216 = vmatpush1.msra.mxu0 0.0
    %3217 = vmatprep.subr.mxu0 0.0
    %3218 = vmatpush1.msra.mxu0 0.0
    %3219 = vmatprep.subr.mxu0 0.0
    %3220 = vmatpush1.msra.mxu0 0.0
    %3221 = vmatprep.subr.mxu0 0.0
    %3222 = vmatpush1.msra.mxu0 0.0
    %3223 = vmatprep.subr.mxu0 0.0
    %3224 = vmatpush1.msra.mxu0 0.0
    %3225 = vmatprep.subr.mxu0 0.0
    %3226 = vmatpush1.msra.mxu0 0.0
    %3227 = vmatprep.subr.mxu0 0.0
    %3228 = vmatpush1.msra.mxu0 0.0
    %3229 = vmatprep.subr.mxu0 0.0
    %3230 = vmatpush1.msra.mxu0 0.0
    %3231 = vmatprep.subr.mxu0 0.0
    %3232 = vmatpush1.msra.mxu0 0.0
    %3233 = vmatprep.subr.mxu0 0.0
    %3234 = vmatpush1.msra.mxu0 0.0
    %3235 = vmatprep.subr.mxu0 0.0
    %3236 = vmatpush1.msra.mxu0 0.0
    %3237 = vmatprep.subr.mxu0 0.0
    %3238 = vmatpush1.msra.mxu0 0.0
    %3239 = vmatprep.subr.mxu0 0.0
    %3240 = vmatpush1.msra.mxu0 0.0
    %3241 = vmatprep.subr.mxu0 0.0
    %3242 = vmatpush1.msra.mxu0 0.0
    %3243 = vmatprep.subr.mxu0 0.0
    %3244 = vmatpush1.msra.mxu0 0.0
    %3245 = vmatprep.subr.mxu0 0.0
    %3246 = vmatpush1.msra.mxu0 0.0
    %3247 = vmatprep.subr.mxu0 0.0
    %3248 = vmatpush1.msra.mxu0 0.0
    %3249 = vmatprep.subr.mxu0 0.0
    %3250 = vmatpush1.msra.mxu0 0.0
    %3251 = vmatprep.subr.mxu0 0.0
    %3252 = vmatpush1.msra.mxu0 0.0
    %3253 = vmatprep.subr.mxu0 0.0
    %3254 = vmatpush1.msra.mxu0 0.0
    %3255 = vmatprep.subr.mxu0 0.0
    %3256 = vmatpush1.msra.mxu0 0.0
    %3257 = vmatprep.subr.mxu0 0.0
    %3258 = vmatpush1.msra.mxu0 0.0
    %3259 = vmatprep.mubr.f32.mxu0 0.0
    %3260 = vmatmul.mubr.f32.gmra.mrb[0].mxu0 %v3193
    %v3261 = vpop.f32.mrb[0].mxu0
    %v3262 = vadd.f32 0.0, %v3261
    %v3263 = vpop.f32.mrb[0].mxu0
    %3264 = vdwg.mxu0
    %3266 = vrot.lane.b32.xlu0 %v2678, 120
    %v3267 = vpop.permute.xlu0 %3266
    %v3270 = vsel %vm469, %v3187, 0
    %3272 = vmatprep.subr.mxu0 0.0
    %3273 = vmatpush1.msra.mxu0 %v3267
    %3274 = vmatprep.subr.mxu0 0.0
    %3275 = vmatpush1.msra.mxu0 0.0
    %3276 = vmatprep.subr.mxu0 0.0
    %3277 = vmatpush1.msra.mxu0 0.0
    %3278 = vmatprep.subr.mxu0 0.0
    %3279 = vmatpush1.msra.mxu0 0.0
    %3280 = vmatprep.subr.mxu0 0.0
    %3281 = vmatpush1.msra.mxu0 0.0
    %3282 = vmatprep.subr.mxu0 0.0
    %3283 = vmatpush1.msra.mxu0 0.0
    %3284 = vmatprep.subr.mxu0 0.0
    %3285 = vmatpush1.msra.mxu0 0.0
    %3286 = vmatprep.subr.mxu0 0.0
    %3287 = vmatpush1.msra.mxu0 0.0
    %3288 = vmatprep.subr.mxu0 0.0
    %3289 = vmatpush1.msra.mxu0 0.0
    %3290 = vmatprep.subr.mxu0 0.0
    %3291 = vmatpush1.msra.mxu0 0.0
    %3292 = vmatprep.subr.mxu0 0.0
    %3293 = vmatpush1.msra.mxu0 0.0
    %3294 = vmatprep.subr.mxu0 0.0
    %3295 = vmatpush1.msra.mxu0 0.0
    %3296 = vmatprep.subr.mxu0 0.0
    %3297 = vmatpush1.msra.mxu0 0.0
    %3298 = vmatprep.subr.mxu0 0.0
    %3299 = vmatpush1.msra.mxu0 0.0
    %3300 = vmatprep.subr.mxu0 0.0
    %3301 = vmatpush1.msra.mxu0 0.0
    %3302 = vmatprep.subr.mxu0 0.0
    %3303 = vmatpush1.msra.mxu0 0.0
    %3304 = vmatprep.subr.mxu0 0.0
    %3305 = vmatpush1.msra.mxu0 0.0
    %3306 = vmatprep.subr.mxu0 0.0
    %3307 = vmatpush1.msra.mxu0 0.0
    %3308 = vmatprep.subr.mxu0 0.0
    %3309 = vmatpush1.msra.mxu0 0.0
    %3310 = vmatprep.subr.mxu0 0.0
    %3311 = vmatpush1.msra.mxu0 0.0
    %3312 = vmatprep.subr.mxu0 0.0
    %3313 = vmatpush1.msra.mxu0 0.0
    %3314 = vmatprep.subr.mxu0 0.0
    %3315 = vmatpush1.msra.mxu0 0.0
    %3316 = vmatprep.subr.mxu0 0.0
    %3317 = vmatpush1.msra.mxu0 0.0
    %3318 = vmatprep.subr.mxu0 0.0
    %3319 = vmatpush1.msra.mxu0 0.0
    %3320 = vmatprep.subr.mxu0 0.0
    %3321 = vmatpush1.msra.mxu0 0.0
    %3322 = vmatprep.subr.mxu0 0.0
    %3323 = vmatpush1.msra.mxu0 0.0
    %3324 = vmatprep.subr.mxu0 0.0
    %3325 = vmatpush1.msra.mxu0 0.0
    %3326 = vmatprep.subr.mxu0 0.0
    %3327 = vmatpush1.msra.mxu0 0.0
    %3328 = vmatprep.subr.mxu0 0.0
    %3329 = vmatpush1.msra.mxu0 0.0
    %3330 = vmatprep.subr.mxu0 0.0
    %3331 = vmatpush1.msra.mxu0 0.0
    %3332 = vmatprep.subr.mxu0 0.0
    %3333 = vmatpush1.msra.mxu0 0.0
    %3334 = vmatprep.subr.mxu0 0.0
    %3335 = vmatpush1.msra.mxu0 0.0
    %3336 = vmatprep.mubr.f32.mxu0 0.0
    %3337 = vmatmul.mubr.f32.gmra.mrb[0].mxu0 %v3270
    %v3338 = vpop.f32.mrb[0].mxu0
    %v3339 = vadd.f32 0.0, %v3338
    %v3340 = vpop.f32.mrb[0].mxu0
    %3341 = vdwg.mxu0
    %v3343 = vsel %vm469, %v3262, 0
    %v3346 = vsel %vm469, %v3339, 0
    %3348 = vmatprep.subr.mxu0 0.0
    %3349 = vmatpush1.msra.mxu0 %v2683
    %3350 = vmatprep.subr.mxu0 0.0
    %3351 = vmatpush1.msra.mxu0 0.0
    %3352 = vmatprep.subr.mxu0 0.0
    %3353 = vmatpush1.msra.mxu0 0.0
    %3354 = vmatprep.subr.mxu0 0.0
    %3355 = vmatpush1.msra.mxu0 0.0
    %3356 = vmatprep.subr.mxu0 0.0
    %3357 = vmatpush1.msra.mxu0 0.0
    %3358 = vmatprep.subr.mxu0 0.0
    %3359 = vmatpush1.msra.mxu0 0.0
    %3360 = vmatprep.subr.mxu0 0.0
    %3361 = vmatpush1.msra.mxu0 0.0
    %3362 = vmatprep.subr.mxu0 0.0
    %3363 = vmatpush1.msra.mxu0 0.0
    %3364 = vmatprep.subr.mxu0 0.0
    %3365 = vmatpush1.msra.mxu0 0.0
    %3366 = vmatprep.subr.mxu0 0.0
    %3367 = vmatpush1.msra.mxu0 0.0
    %3368 = vmatprep.subr.mxu0 0.0
    %3369 = vmatpush1.msra.mxu0 0.0
    %3370 = vmatprep.subr.mxu0 0.0
    %3371 = vmatpush1.msra.mxu0 0.0
    %3372 = vmatprep.subr.mxu0 0.0
    %3373 = vmatpush1.msra.mxu0 0.0
    %3374 = vmatprep.subr.mxu0 0.0
    %3375 = vmatpush1.msra.mxu0 0.0
    %3376 = vmatprep.subr.mxu0 0.0
    %3377 = vmatpush1.msra.mxu0 0.0
    %3378 = vmatprep.subr.mxu0 0.0
    %3379 = vmatpush1.msra.mxu0 0.0
    %3380 = vmatprep.subr.mxu0 0.0
    %3381 = vmatpush1.msra.mxu0 0.0
    %3382 = vmatprep.subr.mxu0 0.0
    %3383 = vmatpush1.msra.mxu0 0.0
    %3384 = vmatprep.subr.mxu0 0.0
    %3385 = vmatpush1.msra.mxu0 0.0
    %3386 = vmatprep.subr.mxu0 0.0
    %3387 = vmatpush1.msra.mxu0 0.0
    %3388 = vmatprep.subr.mxu0 0.0
    %3389 = vmatpush1.msra.mxu0 0.0
    %3390 = vmatprep.subr.mxu0 0.0
    %3391 = vmatpush1.msra.mxu0 0.0
    %3392 = vmatprep.subr.mxu0 0.0
    %3393 = vmatpush1.msra.mxu0 0.0
    %3394 = vmatprep.subr.mxu0 0.0
    %3395 = vmatpush1.msra.mxu0 0.0
    %3396 = vmatprep.subr.mxu0 0.0
    %3397 = vmatpush1.msra.mxu0 0.0
    %3398 = vmatprep.subr.mxu0 0.0
    %3399 = vmatpush1.msra.mxu0 0.0
    %3400 = vmatprep.subr.mxu0 0.0
    %3401 = vmatpush1.msra.mxu0 0.0
    %3402 = vmatprep.subr.mxu0 0.0
    %3403 = vmatpush1.msra.mxu0 0.0
    %3404 = vmatprep.subr.mxu0 0.0
    %3405 = vmatpush1.msra.mxu0 0.0
    %3406 = vmatprep.subr.mxu0 0.0
    %3407 = vmatpush1.msra.mxu0 0.0
    %3408 = vmatprep.subr.mxu0 0.0
    %3409 = vmatpush1.msra.mxu0 0.0
    %3410 = vmatprep.subr.mxu0 0.0
    %3411 = vmatpush1.msra.mxu0 0.0
    %3412 = vmatprep.mubr.f32.mxu0 0.0
    %3413 = vmatmul.mubr.f32.gmra.mrb[0].mxu0 %v3343
    %v3414 = vpop.f32.mrb[0].mxu0
    %v3415 = vadd.f32 0.0, %v3414
    %v3416 = vpop.f32.mrb[0].mxu0
    %3417 = vmatprep.mubr.f32.mxu0 0.0
    %3418 = vmatmul.mubr.f32.gmra.mrb[0].mxu0 %v3346
    %v3419 = vpop.f32.mrb[0].mxu0
    %v3420 = vadd.f32 0.0, %v3419
    %v3421 = vpop.f32.mrb[0].mxu0
    %3422 = vdwg.mxu0
    %v3424 = vsel %vm469, %v2932, 0
    %v3427 = vsel %vm469, %v3005, 0
    %3429 = vmatprep.subr.mxu0 0.0
    %3430 = vmatpush1.msra.mxu0 %v2682
    %3431 = vmatprep.subr.mxu0 0.0
    %3432 = vmatpush1.msra.mxu0 0.0
    %3433 = vmatprep.subr.mxu0 0.0
    %3434 = vmatpush1.msra.mxu0 0.0
    %3435 = vmatprep.subr.mxu0 0.0
    %3436 = vmatpush1.msra.mxu0 0.0
    %3437 = vmatprep.subr.mxu0 0.0
    %3438 = vmatpush1.msra.mxu0 0.0
    %3439 = vmatprep.subr.mxu0 0.0
    %3440 = vmatpush1.msra.mxu0 0.0
    %3441 = vmatprep.subr.mxu0 0.0
    %3442 = vmatpush1.msra.mxu0 0.0
    %3443 = vmatprep.subr.mxu0 0.0
    %3444 = vmatpush1.msra.mxu0 0.0
    %3445 = vmatprep.subr.mxu0 0.0
    %3446 = vmatpush1.msra.mxu0 0.0
    %3447 = vmatprep.subr.mxu0 0.0
    %3448 = vmatpush1.msra.mxu0 0.0
    %3449 = vmatprep.subr.mxu0 0.0
    %3450 = vmatpush1.msra.mxu0 0.0
    %3451 = vmatprep.subr.mxu0 0.0
    %3452 = vmatpush1.msra.mxu0 0.0
    %3453 = vmatprep.subr.mxu0 0.0
    %3454 = vmatpush1.msra.mxu0 0.0
    %3455 = vmatprep.subr.mxu0 0.0
    %3456 = vmatpush1.msra.mxu0 0.0
    %3457 = vmatprep.subr.mxu0 0.0
    %3458 = vmatpush1.msra.mxu0 0.0
    %3459 = vmatprep.subr.mxu0 0.0
    %3460 = vmatpush1.msra.mxu0 0.0
    %3461 = vmatprep.subr.mxu0 0.0
    %3462 = vmatpush1.msra.mxu0 0.0
    %3463 = vmatprep.subr.mxu0 0.0
    %3464 = vmatpush1.msra.mxu0 0.0
    %3465 = vmatprep.subr.mxu0 0.0
    %3466 = vmatpush1.msra.mxu0 0.0
    %3467 = vmatprep.subr.mxu0 0.0
    %3468 = vmatpush1.msra.mxu0 0.0
    %3469 = vmatprep.subr.mxu0 0.0
    %3470 = vmatpush1.msra.mxu0 0.0
    %3471 = vmatprep.subr.mxu0 0.0
    %3472 = vmatpush1.msra.mxu0 0.0
    %3473 = vmatprep.subr.mxu0 0.0
    %3474 = vmatpush1.msra.mxu0 0.0
    %3475 = vmatprep.subr.mxu0 0.0
    %3476 = vmatpush1.msra.mxu0 0.0
    %3477 = vmatprep.subr.mxu0 0.0
    %3478 = vmatpush1.msra.mxu0 0.0
    %3479 = vmatprep.subr.mxu0 0.0
    %3480 = vmatpush1.msra.mxu0 0.0
    %3481 = vmatprep.subr.mxu0 0.0
    %3482 = vmatpush1.msra.mxu0 0.0
    %3483 = vmatprep.subr.mxu0 0.0
    %3484 = vmatpush1.msra.mxu0 0.0
    %3485 = vmatprep.subr.mxu0 0.0
    %3486 = vmatpush1.msra.mxu0 0.0
    %3487 = vmatprep.subr.mxu0 0.0
    %3488 = vmatpush1.msra.mxu0 0.0
    %3489 = vmatprep.subr.mxu0 0.0
    %3490 = vmatpush1.msra.mxu0 0.0
    %3491 = vmatprep.subr.mxu0 0.0
    %3492 = vmatpush1.msra.mxu0 0.0
    %3493 = vmatprep.mubr.f32.mxu0 0.0
    %3494 = vmatmul.mubr.f32.gmra.mrb[0].mxu0 %v3424
    %v3495 = vpop.f32.mrb[0].mxu0
    %v3496 = vadd.f32 %v3415, %v3495
    %v3497 = vpop.f32.mrb[0].mxu0
    %3498 = vmatprep.mubr.f32.mxu0 0.0
    %3499 = vmatmul.mubr.f32.gmra.mrb[0].mxu0 %v3427
    %v3500 = vpop.f32.mrb[0].mxu0
    %v3501 = vadd.f32 %v3420, %v3500
    %v3502 = vpop.f32.mrb[0].mxu0
    %3503 = vdwg.mxu0
    %3504 = vrot.lane.b32.xlu0 %v2497, 112
    %v3505 = vpop.permute.xlu0 %3504
    %3506 = vrot.lane.b32.xlu0 %v2585, 112
    %v3507 = vpop.permute.xlu0 %3506
    %v3508 = vsel %vm469, %v3505, 0
    %v3510 = vsel %vm469, %v3507, 0
    %3512 = vmatprep.subr.mxu0 0.0
    %3513 = vmatpush1.xpose.msra.mxu0 %v3510
    %3514 = vmatprep.subr.mxu0 0.0
    %3515 = vmatpush1.xpose.msra.mxu0 0.0
    %3516 = vmatprep.subr.mxu0 0.0
    %3517 = vmatpush1.xpose.msra.mxu0 0.0
    %3518 = vmatprep.subr.mxu0 0.0
    %3519 = vmatpush1.xpose.msra.mxu0 0.0
    %3520 = vmatprep.subr.mxu0 0.0
    %3521 = vmatpush1.xpose.msra.mxu0 0.0
    %3522 = vmatprep.subr.mxu0 0.0
    %3523 = vmatpush1.xpose.msra.mxu0 0.0
    %3524 = vmatprep.subr.mxu0 0.0
    %3525 = vmatpush1.xpose.msra.mxu0 0.0
    %3526 = vmatprep.subr.mxu0 0.0
    %3527 = vmatpush1.xpose.msra.mxu0 0.0
    %3528 = vmatprep.subr.mxu0 0.0
    %3529 = vmatpush1.xpose.msra.mxu0 0.0
    %3530 = vmatprep.subr.mxu0 0.0
    %3531 = vmatpush1.xpose.msra.mxu0 0.0
    %3532 = vmatprep.subr.mxu0 0.0
    %3533 = vmatpush1.xpose.msra.mxu0 0.0
    %3534 = vmatprep.subr.mxu0 0.0
    %3535 = vmatpush1.xpose.msra.mxu0 0.0
    %3536 = vmatprep.subr.mxu0 0.0
    %3537 = vmatpush1.xpose.msra.mxu0 0.0
    %3538 = vmatprep.subr.mxu0 0.0
    %3539 = vmatpush1.xpose.msra.mxu0 0.0
    %3540 = vmatprep.subr.mxu0 0.0
    %3541 = vmatpush1.xpose.msra.mxu0 0.0
    %3542 = vmatprep.subr.mxu0 0.0
    %3543 = vmatpush1.xpose.msra.mxu0 0.0
    %3544 = vmatprep.subr.mxu0 0.0
    %3545 = vmatpush1.xpose.msra.mxu0 0.0
    %3546 = vmatprep.subr.mxu0 0.0
    %3547 = vmatpush1.xpose.msra.mxu0 0.0
    %3548 = vmatprep.subr.mxu0 0.0
    %3549 = vmatpush1.xpose.msra.mxu0 0.0
    %3550 = vmatprep.subr.mxu0 0.0
    %3551 = vmatpush1.xpose.msra.mxu0 0.0
    %3552 = vmatprep.subr.mxu0 0.0
    %3553 = vmatpush1.xpose.msra.mxu0 0.0
    %3554 = vmatprep.subr.mxu0 0.0
    %3555 = vmatpush1.xpose.msra.mxu0 0.0
    %3556 = vmatprep.subr.mxu0 0.0
    %3557 = vmatpush1.xpose.msra.mxu0 0.0
    %3558 = vmatprep.subr.mxu0 0.0
    %3559 = vmatpush1.xpose.msra.mxu0 0.0
    %3560 = vmatprep.subr.mxu0 0.0
    %3561 = vmatpush1.xpose.msra.mxu0 0.0
    %3562 = vmatprep.subr.mxu0 0.0
    %3563 = vmatpush1.xpose.msra.mxu0 0.0
    %3564 = vmatprep.subr.mxu0 0.0
    %3565 = vmatpush1.xpose.msra.mxu0 0.0
    %3566 = vmatprep.subr.mxu0 0.0
    %3567 = vmatpush1.xpose.msra.mxu0 0.0
    %3568 = vmatprep.subr.mxu0 0.0
    %3569 = vmatpush1.xpose.msra.mxu0 0.0
    %3570 = vmatprep.subr.mxu0 0.0
    %3571 = vmatpush1.xpose.msra.mxu0 0.0
    %3572 = vmatprep.subr.mxu0 0.0
    %3573 = vmatpush1.xpose.msra.mxu0 0.0
    %3574 = vmatprep.subr.mxu0 0.0
    %3575 = vmatpush1.xpose.msra.mxu0 0.0
    %3576 = vmatprep.mubr.f32.mxu0 0.0
    %3577 = vmatmul.mubr.f32.gmra.mrb[0].mxu0 %v3508
    %v3578 = vpop.f32.mrb[0].mxu0
    %v3579 = vadd.f32 0.0, %v3578
    %v3580 = vpop.f32.mrb[0].mxu0
    %3581 = vdwg.mxu0
    %3582 = vrot.lane.b32.xlu0 %v2502, 112
    %v3583 = vpop.permute.xlu0 %3582
    %3584 = vrot.lane.b32.xlu0 %v2590, 112
    %v3585 = vpop.permute.xlu0 %3584
    %v3586 = vsel %vm469, %v3583, 0
    %v3588 = vsel %vm469, %v3585, 0
    %3590 = vmatprep.subr.mxu0 0.0
    %3591 = vmatpush1.xpose.msra.mxu0 %v3588
    %3592 = vmatprep.subr.mxu0 0.0
    %3593 = vmatpush1.xpose.msra.mxu0 0.0
    %3594 = vmatprep.subr.mxu0 0.0
    %3595 = vmatpush1.xpose.msra.mxu0 0.0
    %3596 = vmatprep.subr.mxu0 0.0
    %3597 = vmatpush1.xpose.msra.mxu0 0.0
    %3598 = vmatprep.subr.mxu0 0.0
    %3599 = vmatpush1.xpose.msra.mxu0 0.0
    %3600 = vmatprep.subr.mxu0 0.0
    %3601 = vmatpush1.xpose.msra.mxu0 0.0
    %3602 = vmatprep.subr.mxu0 0.0
    %3603 = vmatpush1.xpose.msra.mxu0 0.0
    %3604 = vmatprep.subr.mxu0 0.0
    %3605 = vmatpush1.xpose.msra.mxu0 0.0
    %3606 = vmatprep.subr.mxu0 0.0
    %3607 = vmatpush1.xpose.msra.mxu0 0.0
    %3608 = vmatprep.subr.mxu0 0.0
    %3609 = vmatpush1.xpose.msra.mxu0 0.0
    %3610 = vmatprep.subr.mxu0 0.0
    %3611 = vmatpush1.xpose.msra.mxu0 0.0
    %3612 = vmatprep.subr.mxu0 0.0
    %3613 = vmatpush1.xpose.msra.mxu0 0.0
    %3614 = vmatprep.subr.mxu0 0.0
    %3615 = vmatpush1.xpose.msra.mxu0 0.0
    %3616 = vmatprep.subr.mxu0 0.0
    %3617 = vmatpush1.xpose.msra.mxu0 0.0
    %3618 = vmatprep.subr.mxu0 0.0
    %3619 = vmatpush1.xpose.msra.mxu0 0.0
    %3620 = vmatprep.subr.mxu0 0.0
    %3621 = vmatpush1.xpose.msra.mxu0 0.0
    %3622 = vmatprep.subr.mxu0 0.0
    %3623 = vmatpush1.xpose.msra.mxu0 0.0
    %3624 = vmatprep.subr.mxu0 0.0
    %3625 = vmatpush1.xpose.msra.mxu0 0.0
    %3626 = vmatprep.subr.mxu0 0.0
    %3627 = vmatpush1.xpose.msra.mxu0 0.0
    %3628 = vmatprep.subr.mxu0 0.0
    %3629 = vmatpush1.xpose.msra.mxu0 0.0
    %3630 = vmatprep.subr.mxu0 0.0
    %3631 = vmatpush1.xpose.msra.mxu0 0.0
    %3632 = vmatprep.subr.mxu0 0.0
    %3633 = vmatpush1.xpose.msra.mxu0 0.0
    %3634 = vmatprep.subr.mxu0 0.0
    %3635 = vmatpush1.xpose.msra.mxu0 0.0
    %3636 = vmatprep.subr.mxu0 0.0
    %3637 = vmatpush1.xpose.msra.mxu0 0.0
    %3638 = vmatprep.subr.mxu0 0.0
    %3639 = vmatpush1.xpose.msra.mxu0 0.0
    %3640 = vmatprep.subr.mxu0 0.0
    %3641 = vmatpush1.xpose.msra.mxu0 0.0
    %3642 = vmatprep.subr.mxu0 0.0
    %3643 = vmatpush1.xpose.msra.mxu0 0.0
    %3644 = vmatprep.subr.mxu0 0.0
    %3645 = vmatpush1.xpose.msra.mxu0 0.0
    %3646 = vmatprep.subr.mxu0 0.0
    %3647 = vmatpush1.xpose.msra.mxu0 0.0
    %3648 = vmatprep.subr.mxu0 0.0
    %3649 = vmatpush1.xpose.msra.mxu0 0.0
    %3650 = vmatprep.subr.mxu0 0.0
    %3651 = vmatpush1.xpose.msra.mxu0 0.0
    %3652 = vmatprep.subr.mxu0 0.0
    %3653 = vmatpush1.xpose.msra.mxu0 0.0
    %3654 = vmatprep.mubr.f32.mxu0 0.0
    %3655 = vmatmul.mubr.f32.gmra.mrb[0].mxu0 %v3586
    %v3656 = vpop.f32.mrb[0].mxu0
    %v3657 = vadd.f32 0.0, %v3656
    %v3658 = vpop.f32.mrb[0].mxu0
    %3659 = vdwg.mxu0
    %v3660 = vmul.f32 %v3579, 0.35355338
    %v3661 = vmul.f32 %v3657, 0.35355338
    %v3662 = vsel %vm469, %v3660, -inf
    %3663 = vmax.xlane.f32.xlu0 %v3662
    %v3664 = vpop.xlane.xlu0 %3663
    %v3665 = vsel %vm469, %v3661, -inf
    %3666 = vmax.xlane.f32.xlu0 %v3665
    %v3667 = vpop.xlane.xlu0 %3666
    %v3668 = vsub.f32 %v3660, %v3664
    %v3669 = vsub.f32 %v3661, %v3667
    %v3670 = vmul.f32 %v3668, 1.442695
    %v3671 = vpow.pop %v3670
    %v3672 = vmul.f32 %v3669, 1.442695
    %v3673 = vpow.pop %v3672
    %v3674 = vsel %vm469, %v3671, 0.0
    %3675 = vadd.xlane.f32.xlu0 %v3674
    %v3676 = vpop.xlane.xlu0 %3675
    %v3677 = vsel %vm469, %v3673, 0.0
    %3678 = vadd.xlane.f32.xlu0 %v3677
    %v3679 = vpop.xlane.xlu0 %3678
    %v3680 = vrcp.pop %v3676
    %v3681 = vrcp.pop %v3679
    %v3682 = vmul.f32 %v3671, %v3680
    %v3683 = vmul.f32 %v3673, %v3681
    %3684 = vrot.lane.b32.xlu0 %v2673, 112
    %v3685 = vpop.permute.xlu0 %3684
    %v3688 = vsel %vm469, %v3682, 0
    %3690 = vmatprep.subr.mxu0 0.0
    %3691 = vmatpush1.msra.mxu0 %v3685
    %3692 = vmatprep.subr.mxu0 0.0
    %3693 = vmatpush1.msra.mxu0 0.0
    %3694 = vmatprep.subr.mxu0 0.0
    %3695 = vmatpush1.msra.mxu0 0.0
    %3696 = vmatprep.subr.mxu0 0.0
    %3697 = vmatpush1.msra.mxu0 0.0
    %3698 = vmatprep.subr.mxu0 0.0
    %3699 = vmatpush1.msra.mxu0 0.0
    %3700 = vmatprep.subr.mxu0 0.0
    %3701 = vmatpush1.msra.mxu0 0.0
    %3702 = vmatprep.subr.mxu0 0.0
    %3703 = vmatpush1.msra.mxu0 0.0
    %3704 = vmatprep.subr.mxu0 0.0
    %3705 = vmatpush1.msra.mxu0 0.0
    %3706 = vmatprep.subr.mxu0 0.0
    %3707 = vmatpush1.msra.mxu0 0.0
    %3708 = vmatprep.subr.mxu0 0.0
    %3709 = vmatpush1.msra.mxu0 0.0
    %3710 = vmatprep.subr.mxu0 0.0
    %3711 = vmatpush1.msra.mxu0 0.0
    %3712 = vmatprep.subr.mxu0 0.0
    %3713 = vmatpush1.msra.mxu0 0.0
    %3714 = vmatprep.subr.mxu0 0.0
    %3715 = vmatpush1.msra.mxu0 0.0
    %3716 = vmatprep.subr.mxu0 0.0
    %3717 = vmatpush1.msra.mxu0 0.0
    %3718 = vmatprep.subr.mxu0 0.0
    %3719 = vmatpush1.msra.mxu0 0.0
    %3720 = vmatprep.subr.mxu0 0.0
    %3721 = vmatpush1.msra.mxu0 0.0
    %3722 = vmatprep.subr.mxu0 0.0
    %3723 = vmatpush1.msra.mxu0 0.0
    %3724 = vmatprep.subr.mxu0 0.0
    %3725 = vmatpush1.msra.mxu0 0.0
    %3726 = vmatprep.subr.mxu0 0.0
    %3727 = vmatpush1.msra.mxu0 0.0
    %3728 = vmatprep.subr.mxu0 0.0
    %3729 = vmatpush1.msra.mxu0 0.0
    %3730 = vmatprep.subr.mxu0 0.0
    %3731 = vmatpush1.msra.mxu0 0.0
    %3732 = vmatprep.subr.mxu0 0.0
    %3733 = vmatpush1.msra.mxu0 0.0
    %3734 = vmatprep.subr.mxu0 0.0
    %3735 = vmatpush1.msra.mxu0 0.0
    %3736 = vmatprep.subr.mxu0 0.0
    %3737 = vmatpush1.msra.mxu0 0.0
    %3738 = vmatprep.subr.mxu0 0.0
    %3739 = vmatpush1.msra.mxu0 0.0
    %3740 = vmatprep.subr.mxu0 0.0
    %3741 = vmatpush1.msra.mxu0 0.0
    %3742 = vmatprep.subr.mxu0 0.0
    %3743 = vmatpush1.msra.mxu0 0.0
    %3744 = vmatprep.subr.mxu0 0.0
    %3745 = vmatpush1.msra.mxu0 0.0
    %3746 = vmatprep.subr.mxu0 0.0
    %3747 = vmatpush1.msra.mxu0 0.0
    %3748 = vmatprep.subr.mxu0 0.0
    %3749 = vmatpush1.msra.mxu0 0.0
    %3750 = vmatprep.subr.mxu0 0.0
    %3751 = vmatpush1.msra.mxu0 0.0
    %3752 = vmatprep.subr.mxu0 0.0
    %3753 = vmatpush1.msra.mxu0 0.0
    %3754 = vmatprep.mubr.f32.mxu0 0.0
    %3755 = vmatmul.mubr.f32.gmra.mrb[0].mxu0 %v3688
    %v3756 = vpop.f32.mrb[0].mxu0
    %v3757 = vadd.f32 0.0, %v3756
    %v3758 = vpop.f32.mrb[0].mxu0
    %3759 = vdwg.mxu0
    %3760 = vrot.lane.b32.xlu0 %v2678, 112
    %v3761 = vpop.permute.xlu0 %3760
    %v3764 = vsel %vm469, %v3683, 0
    %3766 = vmatprep.subr.mxu0 0.0
    %3767 = vmatpush1.msra.mxu0 %v3761
    %3768 = vmatprep.subr.mxu0 0.0
    %3769 = vmatpush1.msra.mxu0 0.0
    %3770 = vmatprep.subr.mxu0 0.0
    %3771 = vmatpush1.msra.mxu0 0.0
    %3772 = vmatprep.subr.mxu0 0.0
    %3773 = vmatpush1.msra.mxu0 0.0
    %3774 = vmatprep.subr.mxu0 0.0
    %3775 = vmatpush1.msra.mxu0 0.0
    %3776 = vmatprep.subr.mxu0 0.0
    %3777 = vmatpush1.msra.mxu0 0.0
    %3778 = vmatprep.subr.mxu0 0.0
    %3779 = vmatpush1.msra.mxu0 0.0
    %3780 = vmatprep.subr.mxu0 0.0
    %3781 = vmatpush1.msra.mxu0 0.0
    %3782 = vmatprep.subr.mxu0 0.0
    %3783 = vmatpush1.msra.mxu0 0.0
    %3784 = vmatprep.subr.mxu0 0.0
    %3785 = vmatpush1.msra.mxu0 0.0
    %3786 = vmatprep.subr.mxu0 0.0
    %3787 = vmatpush1.msra.mxu0 0.0
    %3788 = vmatprep.subr.mxu0 0.0
    %3789 = vmatpush1.msra.mxu0 0.0
    %3790 = vmatprep.subr.mxu0 0.0
    %3791 = vmatpush1.msra.mxu0 0.0
    %3792 = vmatprep.subr.mxu0 0.0
    %3793 = vmatpush1.msra.mxu0 0.0
    %3794 = vmatprep.subr.mxu0 0.0
    %3795 = vmatpush1.msra.mxu0 0.0
    %3796 = vmatprep.subr.mxu0 0.0
    %3797 = vmatpush1.msra.mxu0 0.0
    %3798 = vmatprep.subr.mxu0 0.0
    %3799 = vmatpush1.msra.mxu0 0.0
    %3800 = vmatprep.subr.mxu0 0.0
    %3801 = vmatpush1.msra.mxu0 0.0
    %3802 = vmatprep.subr.mxu0 0.0
    %3803 = vmatpush1.msra.mxu0 0.0
    %3804 = vmatprep.subr.mxu0 0.0
    %3805 = vmatpush1.msra.mxu0 0.0
    %3806 = vmatprep.subr.mxu0 0.0
    %3807 = vmatpush1.msra.mxu0 0.0
    %3808 = vmatprep.subr.mxu0 0.0
    %3809 = vmatpush1.msra.mxu0 0.0
    %3810 = vmatprep.subr.mxu0 0.0
    %3811 = vmatpush1.msra.mxu0 0.0
    %3812 = vmatprep.subr.mxu0 0.0
    %3813 = vmatpush1.msra.mxu0 0.0
    %3814 = vmatprep.subr.mxu0 0.0
    %3815 = vmatpush1.msra.mxu0 0.0
    %3816 = vmatprep.subr.mxu0 0.0
    %3817 = vmatpush1.msra.mxu0 0.0
    %3818 = vmatprep.subr.mxu0 0.0
    %3819 = vmatpush1.msra.mxu0 0.0
    %3820 = vmatprep.subr.mxu0 0.0
    %3821 = vmatpush1.msra.mxu0 0.0
    %3822 = vmatprep.subr.mxu0 0.0
    %3823 = vmatpush1.msra.mxu0 0.0
    %3824 = vmatprep.subr.mxu0 0.0
    %3825 = vmatpush1.msra.mxu0 0.0
    %3826 = vmatprep.subr.mxu0 0.0
    %3827 = vmatpush1.msra.mxu0 0.0
    %3828 = vmatprep.subr.mxu0 0.0
    %3829 = vmatpush1.msra.mxu0 0.0
    %3830 = vmatprep.mubr.f32.mxu0 0.0
    %3831 = vmatmul.mubr.f32.gmra.mrb[0].mxu0 %v3764
    %v3832 = vpop.f32.mrb[0].mxu0
    %v3833 = vadd.f32 0.0, %v3832
    %v3834 = vpop.f32.mrb[0].mxu0
    %3835 = vdwg.mxu0
    %v3837 = vsel %vm469, %v3757, 0
    %v3840 = vsel %vm469, %v3833, 0
    %3842 = vmatprep.subr.mxu0 0.0
    %3843 = vmatpush1.msra.mxu0 %v2684
    %3844 = vmatprep.subr.mxu0 0.0
    %3845 = vmatpush1.msra.mxu0 0.0
    %3846 = vmatprep.subr.mxu0 0.0
    %3847 = vmatpush1.msra.mxu0 0.0
    %3848 = vmatprep.subr.mxu0 0.0
    %3849 = vmatpush1.msra.mxu0 0.0
    %3850 = vmatprep.subr.mxu0 0.0
    %3851 = vmatpush1.msra.mxu0 0.0
    %3852 = vmatprep.subr.mxu0 0.0
    %3853 = vmatpush1.msra.mxu0 0.0
    %3854 = vmatprep.subr.mxu0 0.0
    %3855 = vmatpush1.msra.mxu0 0.0
    %3856 = vmatprep.subr.mxu0 0.0
    %3857 = vmatpush1.msra.mxu0 0.0
    %3858 = vmatprep.subr.mxu0 0.0
    %3859 = vmatpush1.msra.mxu0 0.0
    %3860 = vmatprep.subr.mxu0 0.0
    %3861 = vmatpush1.msra.mxu0 0.0
    %3862 = vmatprep.subr.mxu0 0.0
    %3863 = vmatpush1.msra.mxu0 0.0
    %3864 = vmatprep.subr.mxu0 0.0
    %3865 = vmatpush1.msra.mxu0 0.0
    %3866 = vmatprep.subr.mxu0 0.0
    %3867 = vmatpush1.msra.mxu0 0.0
    %3868 = vmatprep.subr.mxu0 0.0
    %3869 = vmatpush1.msra.mxu0 0.0
    %3870 = vmatprep.subr.mxu0 0.0
    %3871 = vmatpush1.msra.mxu0 0.0
    %3872 = vmatprep.subr.mxu0 0.0
    %3873 = vmatpush1.msra.mxu0 0.0
    %3874 = vmatprep.subr.mxu0 0.0
    %3875 = vmatpush1.msra.mxu0 0.0
    %3876 = vmatprep.subr.mxu0 0.0
    %3877 = vmatpush1.msra.mxu0 0.0
    %3878 = vmatprep.subr.mxu0 0.0
    %3879 = vmatpush1.msra.mxu0 0.0
    %3880 = vmatprep.subr.mxu0 0.0
    %3881 = vmatpush1.msra.mxu0 0.0
    %3882 = vmatprep.subr.mxu0 0.0
    %3883 = vmatpush1.msra.mxu0 0.0
    %3884 = vmatprep.subr.mxu0 0.0
    %3885 = vmatpush1.msra.mxu0 0.0
    %3886 = vmatprep.subr.mxu0 0.0
    %3887 = vmatpush1.msra.mxu0 0.0
    %3888 = vmatprep.subr.mxu0 0.0
    %3889 = vmatpush1.msra.mxu0 0.0
    %3890 = vmatprep.subr.mxu0 0.0
    %3891 = vmatpush1.msra.mxu0 0.0
    %3892 = vmatprep.subr.mxu0 0.0
    %3893 = vmatpush1.msra.mxu0 0.0
    %3894 = vmatprep.subr.mxu0 0.0
    %3895 = vmatpush1.msra.mxu0 0.0
    %3896 = vmatprep.subr.mxu0 0.0
    %3897 = vmatpush1.msra.mxu0 0.0
    %3898 = vmatprep.subr.mxu0 0.0
    %3899 = vmatpush1.msra.mxu0 0.0
    %3900 = vmatprep.subr.mxu0 0.0
    %3901 = vmatpush1.msra.mxu0 0.0
    %3902 = vmatprep.subr.mxu0 0.0
    %3903 = vmatpush1.msra.mxu0 0.0
    %3904 = vmatprep.subr.mxu0 0.0
    %3905 = vmatpush1.msra.mxu0 0.0
    %3906 = vmatprep.mubr.f32.mxu0 0.0
    %3907 = vmatmul.mubr.f32.gmra.mrb[0].mxu0 %v3837
    %v3908 = vpop.f32.mrb[0].mxu0
    %v3909 = vadd.f32 0.0, %v3908
    %v3910 = vpop.f32.mrb[0].mxu0
    %3911 = vmatprep.mubr.f32.mxu0 0.0
    %3912 = vmatmul.mubr.f32.gmra.mrb[0].mxu0 %v3840
    %v3913 = vpop.f32.mrb[0].mxu0
    %v3914 = vadd.f32 0.0, %v3913
    %v3915 = vpop.f32.mrb[0].mxu0
    %3916 = vdwg.mxu0
    %v3917 = vadd.f32 %v3496, %v3909
    %v3918 = vadd.f32 %v3501, %v3914
    %3919 = vrot.lane.b32.xlu0 %v2497, 104
    %v3920 = vpop.permute.xlu0 %3919
    %3921 = vrot.lane.b32.xlu0 %v2585, 104
    %v3922 = vpop.permute.xlu0 %3921
    %v3923 = vsel %vm469, %v3920, 0
    %v3925 = vsel %vm469, %v3922, 0
    %3927 = vmatprep.subr.mxu0 0.0
    %3928 = vmatpush1.xpose.msra.mxu0 %v3925
    %3929 = vmatprep.subr.mxu0 0.0
    %3930 = vmatpush1.xpose.msra.mxu0 0.0
    %3931 = vmatprep.subr.mxu0 0.0
    %3932 = vmatpush1.xpose.msra.mxu0 0.0
    %3933 = vmatprep.subr.mxu0 0.0
    %3934 = vmatpush1.xpose.msra.mxu0 0.0
    %3935 = vmatprep.subr.mxu0 0.0
    %3936 = vmatpush1.xpose.msra.mxu0 0.0
    %3937 = vmatprep.subr.mxu0 0.0
    %3938 = vmatpush1.xpose.msra.mxu0 0.0
    %3939 = vmatprep.subr.mxu0 0.0
    %3940 = vmatpush1.xpose.msra.mxu0 0.0
    %3941 = vmatprep.subr.mxu0 0.0
    %3942 = vmatpush1.xpose.msra.mxu0 0.0
    %3943 = vmatprep.subr.mxu0 0.0
    %3944 = vmatpush1.xpose.msra.mxu0 0.0
    %3945 = vmatprep.subr.mxu0 0.0
    %3946 = vmatpush1.xpose.msra.mxu0 0.0
    %3947 = vmatprep.subr.mxu0 0.0
    %3948 = vmatpush1.xpose.msra.mxu0 0.0
    %3949 = vmatprep.subr.mxu0 0.0
    %3950 = vmatpush1.xpose.msra.mxu0 0.0
    %3951 = vmatprep.subr.mxu0 0.0
    %3952 = vmatpush1.xpose.msra.mxu0 0.0
    %3953 = vmatprep.subr.mxu0 0.0
    %3954 = vmatpush1.xpose.msra.mxu0 0.0
    %3955 = vmatprep.subr.mxu0 0.0
    %3956 = vmatpush1.xpose.msra.mxu0 0.0
    %3957 = vmatprep.subr.mxu0 0.0
    %3958 = vmatpush1.xpose.msra.mxu0 0.0
    %3959 = vmatprep.subr.mxu0 0.0
    %3960 = vmatpush1.xpose.msra.mxu0 0.0
    %3961 = vmatprep.subr.mxu0 0.0
    %3962 = vmatpush1.xpose.msra.mxu0 0.0
    %3963 = vmatprep.subr.mxu0 0.0
    %3964 = vmatpush1.xpose.msra.mxu0 0.0
    %3965 = vmatprep.subr.mxu0 0.0
    %3966 = vmatpush1.xpose.msra.mxu0 0.0
    %3967 = vmatprep.subr.mxu0 0.0
    %3968 = vmatpush1.xpose.msra.mxu0 0.0
    %3969 = vmatprep.subr.mxu0 0.0
    %3970 = vmatpush1.xpose.msra.mxu0 0.0
    %3971 = vmatprep.subr.mxu0 0.0
    %3972 = vmatpush1.xpose.msra.mxu0 0.0
    %3973 = vmatprep.subr.mxu0 0.0
    %3974 = vmatpush1.xpose.msra.mxu0 0.0
    %3975 = vmatprep.subr.mxu0 0.0
    %3976 = vmatpush1.xpose.msra.mxu0 0.0
    %3977 = vmatprep.subr.mxu0 0.0
    %3978 = vmatpush1.xpose.msra.mxu0 0.0
    %3979 = vmatprep.subr.mxu0 0.0
    %3980 = vmatpush1.xpose.msra.mxu0 0.0
    %3981 = vmatprep.subr.mxu0 0.0
    %3982 = vmatpush1.xpose.msra.mxu0 0.0
    %3983 = vmatprep.subr.mxu0 0.0
    %3984 = vmatpush1.xpose.msra.mxu0 0.0
    %3985 = vmatprep.subr.mxu0 0.0
    %3986 = vmatpush1.xpose.msra.mxu0 0.0
    %3987 = vmatprep.subr.mxu0 0.0
    %3988 = vmatpush1.xpose.msra.mxu0 0.0
    %3989 = vmatprep.subr.mxu0 0.0
    %3990 = vmatpush1.xpose.msra.mxu0 0.0
    %3991 = vmatprep.mubr.f32.mxu0 0.0
    %3992 = vmatmul.mubr.f32.gmra.mrb[0].mxu0 %v3923
    %v3993 = vpop.f32.mrb[0].mxu0
    %v3994 = vadd.f32 0.0, %v3993
    %v3995 = vpop.f32.mrb[0].mxu0
    %3996 = vdwg.mxu0
    %3997 = vrot.lane.b32.xlu0 %v2502, 104
    %v3998 = vpop.permute.xlu0 %3997
    %3999 = vrot.lane.b32.xlu0 %v2590, 104
    %v4000 = vpop.permute.xlu0 %3999
    %v4001 = vsel %vm469, %v3998, 0
    %v4003 = vsel %vm469, %v4000, 0
    %4005 = vmatprep.subr.mxu0 0.0
    %4006 = vmatpush1.xpose.msra.mxu0 %v4003
    %4007 = vmatprep.subr.mxu0 0.0
    %4008 = vmatpush1.xpose.msra.mxu0 0.0
    %4009 = vmatprep.subr.mxu0 0.0
    %4010 = vmatpush1.xpose.msra.mxu0 0.0
    %4011 = vmatprep.subr.mxu0 0.0
    %4012 = vmatpush1.xpose.msra.mxu0 0.0
    %4013 = vmatprep.subr.mxu0 0.0
    %4014 = vmatpush1.xpose.msra.mxu0 0.0
    %4015 = vmatprep.subr.mxu0 0.0
    %4016 = vmatpush1.xpose.msra.mxu0 0.0
    %4017 = vmatprep.subr.mxu0 0.0
    %4018 = vmatpush1.xpose.msra.mxu0 0.0
    %4019 = vmatprep.subr.mxu0 0.0
    %4020 = vmatpush1.xpose.msra.mxu0 0.0
    %4021 = vmatprep.subr.mxu0 0.0
    %4022 = vmatpush1.xpose.msra.mxu0 0.0
    %4023 = vmatprep.subr.mxu0 0.0
    %4024 = vmatpush1.xpose.msra.mxu0 0.0
    %4025 = vmatprep.subr.mxu0 0.0
    %4026 = vmatpush1.xpose.msra.mxu0 0.0
    %4027 = vmatprep.subr.mxu0 0.0
    %4028 = vmatpush1.xpose.msra.mxu0 0.0
    %4029 = vmatprep.subr.mxu0 0.0
    %4030 = vmatpush1.xpose.msra.mxu0 0.0
    %4031 = vmatprep.subr.mxu0 0.0
    %4032 = vmatpush1.xpose.msra.mxu0 0.0
    %4033 = vmatprep.subr.mxu0 0.0
    %4034 = vmatpush1.xpose.msra.mxu0 0.0
    %4035 = vmatprep.subr.mxu0 0.0
    %4036 = vmatpush1.xpose.msra.mxu0 0.0
    %4037 = vmatprep.subr.mxu0 0.0
    %4038 = vmatpush1.xpose.msra.mxu0 0.0
    %4039 = vmatprep.subr.mxu0 0.0
    %4040 = vmatpush1.xpose.msra.mxu0 0.0
    %4041 = vmatprep.subr.mxu0 0.0
    %4042 = vmatpush1.xpose.msra.mxu0 0.0
    %4043 = vmatprep.subr.mxu0 0.0
    %4044 = vmatpush1.xpose.msra.mxu0 0.0
    %4045 = vmatprep.subr.mxu0 0.0
    %4046 = vmatpush1.xpose.msra.mxu0 0.0
    %4047 = vmatprep.subr.mxu0 0.0
    %4048 = vmatpush1.xpose.msra.mxu0 0.0
    %4049 = vmatprep.subr.mxu0 0.0
    %4050 = vmatpush1.xpose.msra.mxu0 0.0
    %4051 = vmatprep.subr.mxu0 0.0
    %4052 = vmatpush1.xpose.msra.mxu0 0.0
    %4053 = vmatprep.subr.mxu0 0.0
    %4054 = vmatpush1.xpose.msra.mxu0 0.0
    %4055 = vmatprep.subr.mxu0 0.0
    %4056 = vmatpush1.xpose.msra.mxu0 0.0
    %4057 = vmatprep.subr.mxu0 0.0
    %4058 = vmatpush1.xpose.msra.mxu0 0.0
    %4059 = vmatprep.subr.mxu0 0.0
    %4060 = vmatpush1.xpose.msra.mxu0 0.0
    %4061 = vmatprep.subr.mxu0 0.0
    %4062 = vmatpush1.xpose.msra.mxu0 0.0
    %4063 = vmatprep.subr.mxu0 0.0
    %4064 = vmatpush1.xpose.msra.mxu0 0.0
    %4065 = vmatprep.subr.mxu0 0.0
    %4066 = vmatpush1.xpose.msra.mxu0 0.0
    %4067 = vmatprep.subr.mxu0 0.0
    %4068 = vmatpush1.xpose.msra.mxu0 0.0
    %4069 = vmatprep.mubr.f32.mxu0 0.0
    %4070 = vmatmul.mubr.f32.gmra.mrb[0].mxu0 %v4001
    %v4071 = vpop.f32.mrb[0].mxu0
    %v4072 = vadd.f32 0.0, %v4071
    %v4073 = vpop.f32.mrb[0].mxu0
    %4074 = vdwg.mxu0
    %v4075 = vmul.f32 %v3994, 0.35355338
    %v4076 = vmul.f32 %v4072, 0.35355338
    %v4077 = vsel %vm469, %v4075, -inf
    %4078 = vmax.xlane.f32.xlu0 %v4077
    %v4079 = vpop.xlane.xlu0 %4078
    %v4080 = vsel %vm469, %v4076, -inf
    %4081 = vmax.xlane.f32.xlu0 %v4080
    %v4082 = vpop.xlane.xlu0 %4081
    %v4083 = vsub.f32 %v4075, %v4079
    %v4084 = vsub.f32 %v4076, %v4082
    %v4085 = vmul.f32 %v4083, 1.442695
    %v4086 = vpow.pop %v4085
    %v4087 = vmul.f32 %v4084, 1.442695
    %v4088 = vpow.pop %v4087
    %v4089 = vsel %vm469, %v4086, 0.0
    %4090 = vadd.xlane.f32.xlu0 %v4089
    %v4091 = vpop.xlane.xlu0 %4090
    %v4092 = vsel %vm469, %v4088, 0.0
    %4093 = vadd.xlane.f32.xlu0 %v4092
    %v4094 = vpop.xlane.xlu0 %4093
    %v4095 = vrcp.pop %v4091
    %v4096 = vrcp.pop %v4094
    %v4097 = vmul.f32 %v4086, %v4095
    %v4098 = vmul.f32 %v4088, %v4096
    %4099 = vrot.lane.b32.xlu0 %v2673, 104
    %v4100 = vpop.permute.xlu0 %4099
    %v4103 = vsel %vm469, %v4097, 0
    %4105 = vmatprep.subr.mxu0 0.0
    %4106 = vmatpush1.msra.mxu0 %v4100
    %4107 = vmatprep.subr.mxu0 0.0
    %4108 = vmatpush1.msra.mxu0 0.0
    %4109 = vmatprep.subr.mxu0 0.0
    %4110 = vmatpush1.msra.mxu0 0.0
    %4111 = vmatprep.subr.mxu0 0.0
    %4112 = vmatpush1.msra.mxu0 0.0
    %4113 = vmatprep.subr.mxu0 0.0
    %4114 = vmatpush1.msra.mxu0 0.0
    %4115 = vmatprep.subr.mxu0 0.0
    %4116 = vmatpush1.msra.mxu0 0.0
    %4117 = vmatprep.subr.mxu0 0.0
    %4118 = vmatpush1.msra.mxu0 0.0
    %4119 = vmatprep.subr.mxu0 0.0
    %4120 = vmatpush1.msra.mxu0 0.0
    %4121 = vmatprep.subr.mxu0 0.0
    %4122 = vmatpush1.msra.mxu0 0.0
    %4123 = vmatprep.subr.mxu0 0.0
    %4124 = vmatpush1.msra.mxu0 0.0
    %4125 = vmatprep.subr.mxu0 0.0
    %4126 = vmatpush1.msra.mxu0 0.0
    %4127 = vmatprep.subr.mxu0 0.0
    %4128 = vmatpush1.msra.mxu0 0.0
    %4129 = vmatprep.subr.mxu0 0.0
    %4130 = vmatpush1.msra.mxu0 0.0
    %4131 = vmatprep.subr.mxu0 0.0
    %4132 = vmatpush1.msra.mxu0 0.0
    %4133 = vmatprep.subr.mxu0 0.0
    %4134 = vmatpush1.msra.mxu0 0.0
    %4135 = vmatprep.subr.mxu0 0.0
    %4136 = vmatpush1.msra.mxu0 0.0
    %4137 = vmatprep.subr.mxu0 0.0
    %4138 = vmatpush1.msra.mxu0 0.0
    %4139 = vmatprep.subr.mxu0 0.0
    %4140 = vmatpush1.msra.mxu0 0.0
    %4141 = vmatprep.subr.mxu0 0.0
    %4142 = vmatpush1.msra.mxu0 0.0
    %4143 = vmatprep.subr.mxu0 0.0
    %4144 = vmatpush1.msra.mxu0 0.0
    %4145 = vmatprep.subr.mxu0 0.0
    %4146 = vmatpush1.msra.mxu0 0.0
    %4147 = vmatprep.subr.mxu0 0.0
    %4148 = vmatpush1.msra.mxu0 0.0
    %4149 = vmatprep.subr.mxu0 0.0
    %4150 = vmatpush1.msra.mxu0 0.0
    %4151 = vmatprep.subr.mxu0 0.0
    %4152 = vmatpush1.msra.mxu0 0.0
    %4153 = vmatprep.subr.mxu0 0.0
    %4154 = vmatpush1.msra.mxu0 0.0
    %4155 = vmatprep.subr.mxu0 0.0
    %4156 = vmatpush1.msra.mxu0 0.0
    %4157 = vmatprep.subr.mxu0 0.0
    %4158 = vmatpush1.msra.mxu0 0.0
    %4159 = vmatprep.subr.mxu0 0.0
    %4160 = vmatpush1.msra.mxu0 0.0
    %4161 = vmatprep.subr.mxu0 0.0
    %4162 = vmatpush1.msra.mxu0 0.0
    %4163 = vmatprep.subr.mxu0 0.0
    %4164 = vmatpush1.msra.mxu0 0.0
    %4165 = vmatprep.subr.mxu0 0.0
    %4166 = vmatpush1.msra.mxu0 0.0
    %4167 = vmatprep.subr.mxu0 0.0
    %4168 = vmatpush1.msra.mxu0 0.0
    %4169 = vmatprep.mubr.f32.mxu0 0.0
    %4170 = vmatmul.mubr.f32.gmra.mrb[0].mxu0 %v4103
    %v4171 = vpop.f32.mrb[0].mxu0
    %v4172 = vadd.f32 0.0, %v4171
    %v4173 = vpop.f32.mrb[0].mxu0
    %4174 = vdwg.mxu0
    %4175 = vrot.lane.b32.xlu0 %v2678, 104
    %v4176 = vpop.permute.xlu0 %4175
    %v4179 = vsel %vm469, %v4098, 0
    %4181 = vmatprep.subr.mxu0 0.0
    %4182 = vmatpush1.msra.mxu0 %v4176
    %4183 = vmatprep.subr.mxu0 0.0
    %4184 = vmatpush1.msra.mxu0 0.0
    %4185 = vmatprep.subr.mxu0 0.0
    %4186 = vmatpush1.msra.mxu0 0.0
    %4187 = vmatprep.subr.mxu0 0.0
    %4188 = vmatpush1.msra.mxu0 0.0
    %4189 = vmatprep.subr.mxu0 0.0
    %4190 = vmatpush1.msra.mxu0 0.0
    %4191 = vmatprep.subr.mxu0 0.0
    %4192 = vmatpush1.msra.mxu0 0.0
    %4193 = vmatprep.subr.mxu0 0.0
    %4194 = vmatpush1.msra.mxu0 0.0
    %4195 = vmatprep.subr.mxu0 0.0
    %4196 = vmatpush1.msra.mxu0 0.0
    %4197 = vmatprep.subr.mxu0 0.0
    %4198 = vmatpush1.msra.mxu0 0.0
    %4199 = vmatprep.subr.mxu0 0.0
    %4200 = vmatpush1.msra.mxu0 0.0
    %4201 = vmatprep.subr.mxu0 0.0
    %4202 = vmatpush1.msra.mxu0 0.0
    %4203 = vmatprep.subr.mxu0 0.0
    %4204 = vmatpush1.msra.mxu0 0.0
    %4205 = vmatprep.subr.mxu0 0.0
    %4206 = vmatpush1.msra.mxu0 0.0
    %4207 = vmatprep.subr.mxu0 0.0
    %4208 = vmatpush1.msra.mxu0 0.0
    %4209 = vmatprep.subr.mxu0 0.0
    %4210 = vmatpush1.msra.mxu0 0.0
    %4211 = vmatprep.subr.mxu0 0.0
    %4212 = vmatpush1.msra.mxu0 0.0
    %4213 = vmatprep.subr.mxu0 0.0
    %4214 = vmatpush1.msra.mxu0 0.0
    %4215 = vmatprep.subr.mxu0 0.0
    %4216 = vmatpush1.msra.mxu0 0.0
    %4217 = vmatprep.subr.mxu0 0.0
    %4218 = vmatpush1.msra.mxu0 0.0
    %4219 = vmatprep.subr.mxu0 0.0
    %4220 = vmatpush1.msra.mxu0 0.0
    %4221 = vmatprep.subr.mxu0 0.0
    %4222 = vmatpush1.msra.mxu0 0.0
    %4223 = vmatprep.subr.mxu0 0.0
    %4224 = vmatpush1.msra.mxu0 0.0
    %4225 = vmatprep.subr.mxu0 0.0
    %4226 = vmatpush1.msra.mxu0 0.0
    %4227 = vmatprep.subr.mxu0 0.0
    %4228 = vmatpush1.msra.mxu0 0.0
    %4229 = vmatprep.subr.mxu0 0.0
    %4230 = vmatpush1.msra.mxu0 0.0
    %4231 = vmatprep.subr.mxu0 0.0
    %4232 = vmatpush1.msra.mxu0 0.0
    %4233 = vmatprep.subr.mxu0 0.0
    %4234 = vmatpush1.msra.mxu0 0.0
    %4235 = vmatprep.subr.mxu0 0.0
    %4236 = vmatpush1.msra.mxu0 0.0
    %4237 = vmatprep.subr.mxu0 0.0
    %4238 = vmatpush1.msra.mxu0 0.0
    %4239 = vmatprep.subr.mxu0 0.0
    %4240 = vmatpush1.msra.mxu0 0.0
    %4241 = vmatprep.subr.mxu0 0.0
    %4242 = vmatpush1.msra.mxu0 0.0
    %4243 = vmatprep.subr.mxu0 0.0
    %4244 = vmatpush1.msra.mxu0 0.0
    %4245 = vmatprep.mubr.f32.mxu0 0.0
    %4246 = vmatmul.mubr.f32.gmra.mrb[0].mxu0 %v4179
    %v4247 = vpop.f32.mrb[0].mxu0
    %v4248 = vadd.f32 0.0, %v4247
    %v4249 = vpop.f32.mrb[0].mxu0
    %4250 = vdwg.mxu0
    %v4252 = vsel %vm469, %v4172, 0
    %v4255 = vsel %vm469, %v4248, 0
    %4257 = vmatprep.subr.mxu0 0.0
    %4258 = vmatpush1.msra.mxu0 %v2685
    %4259 = vmatprep.subr.mxu0 0.0
    %4260 = vmatpush1.msra.mxu0 0.0
    %4261 = vmatprep.subr.mxu0 0.0
    %4262 = vmatpush1.msra.mxu0 0.0
    %4263 = vmatprep.subr.mxu0 0.0
    %4264 = vmatpush1.msra.mxu0 0.0
    %4265 = vmatprep.subr.mxu0 0.0
    %4266 = vmatpush1.msra.mxu0 0.0
    %4267 = vmatprep.subr.mxu0 0.0
    %4268 = vmatpush1.msra.mxu0 0.0
    %4269 = vmatprep.subr.mxu0 0.0
    %4270 = vmatpush1.msra.mxu0 0.0
    %4271 = vmatprep.subr.mxu0 0.0
    %4272 = vmatpush1.msra.mxu0 0.0
    %4273 = vmatprep.subr.mxu0 0.0
    %4274 = vmatpush1.msra.mxu0 0.0
    %4275 = vmatprep.subr.mxu0 0.0
    %4276 = vmatpush1.msra.mxu0 0.0
    %4277 = vmatprep.subr.mxu0 0.0
    %4278 = vmatpush1.msra.mxu0 0.0
    %4279 = vmatprep.subr.mxu0 0.0
    %4280 = vmatpush1.msra.mxu0 0.0
    %4281 = vmatprep.subr.mxu0 0.0
    %4282 = vmatpush1.msra.mxu0 0.0
    %4283 = vmatprep.subr.mxu0 0.0
    %4284 = vmatpush1.msra.mxu0 0.0
    %4285 = vmatprep.subr.mxu0 0.0
    %4286 = vmatpush1.msra.mxu0 0.0
    %4287 = vmatprep.subr.mxu0 0.0
    %4288 = vmatpush1.msra.mxu0 0.0
    %4289 = vmatprep.subr.mxu0 0.0
    %4290 = vmatpush1.msra.mxu0 0.0
    %4291 = vmatprep.subr.mxu0 0.0
    %4292 = vmatpush1.msra.mxu0 0.0
    %4293 = vmatprep.subr.mxu0 0.0
    %4294 = vmatpush1.msra.mxu0 0.0
    %4295 = vmatprep.subr.mxu0 0.0
    %4296 = vmatpush1.msra.mxu0 0.0
    %4297 = vmatprep.subr.mxu0 0.0
    %4298 = vmatpush1.msra.mxu0 0.0
    %4299 = vmatprep.subr.mxu0 0.0
    %4300 = vmatpush1.msra.mxu0 0.0
    %4301 = vmatprep.subr.mxu0 0.0
    %4302 = vmatpush1.msra.mxu0 0.0
    %4303 = vmatprep.subr.mxu0 0.0
    %4304 = vmatpush1.msra.mxu0 0.0
    %4305 = vmatprep.subr.mxu0 0.0
    %4306 = vmatpush1.msra.mxu0 0.0
    %4307 = vmatprep.subr.mxu0 0.0
    %4308 = vmatpush1.msra.mxu0 0.0
    %4309 = vmatprep.subr.mxu0 0.0
    %4310 = vmatpush1.msra.mxu0 0.0
    %4311 = vmatprep.subr.mxu0 0.0
    %4312 = vmatpush1.msra.mxu0 0.0
    %4313 = vmatprep.subr.mxu0 0.0
    %4314 = vmatpush1.msra.mxu0 0.0
    %4315 = vmatprep.subr.mxu0 0.0
    %4316 = vmatpush1.msra.mxu0 0.0
    %4317 = vmatprep.subr.mxu0 0.0
    %4318 = vmatpush1.msra.mxu0 0.0
    %4319 = vmatprep.subr.mxu0 0.0
    %4320 = vmatpush1.msra.mxu0 0.0
    %4321 = vmatprep.mubr.f32.mxu0 0.0
    %4322 = vmatmul.mubr.f32.gmra.mrb[0].mxu0 %v4252
    %v4323 = vpop.f32.mrb[0].mxu0
    %v4324 = vadd.f32 0.0, %v4323
    %v4325 = vpop.f32.mrb[0].mxu0
    %4326 = vmatprep.mubr.f32.mxu0 0.0
    %4327 = vmatmul.mubr.f32.gmra.mrb[0].mxu0 %v4255
    %v4328 = vpop.f32.mrb[0].mxu0
    %v4329 = vadd.f32 0.0, %v4328
    %v4330 = vpop.f32.mrb[0].mxu0
    %4331 = vdwg.mxu0
    %v4332 = vadd.f32 %v3917, %v4324
    %v4333 = vadd.f32 %v3918, %v4329
    %s4334 = scalar_lea.vmem %s11, 1
    %v4335 = vld [vmem:[%s4334] sm:$0x1]
    %v4337 = vlaneseq
    %v4338 = vshrl.u32 %v4337, 7
    %v4339 = vsub.s32 0, %v4338
    %v4340 = vrot.slane %v4335, %v4339
    %v4342 = vadd.f32 %v4332, %v4340
    %v4343 = vadd.f32 %v4333, %v4340
    %v4344 = vadd.f32 %v2409, %v4342
    %v4345 = vadd.f32 %v2410, %v4343
    %s4346 = scalar_lea.vmem %s12, 1
    %v4347 = vld [vmem:[%s4346] sm:$0x1]
    %s4348 = scalar_lea.vmem %s13, 1
    %v4349 = vld [vmem:[%s4348] sm:$0x1]
    %v4350 = vsel %vm211, %v4344, 0.0
    %4351 = vadd.xlane.f32.xlu0 %v4350
    %v4352 = vpop.xlane.xlu0 %4351
    %v4353 = vsel %vm211, %v4345, 0.0
    %4354 = vadd.xlane.f32.xlu0 %v4353
    %v4355 = vpop.xlane.xlu0 %4354
    %v4356 = vmul.f32 %v4352, %v2137
    %v4357 = vmul.f32 %v4355, %v2137
    %v4358 = vsub.f32 %v4344, %v4356
    %v4359 = vsub.f32 %v4345, %v4357
    %v4360 = vmul.f32 %v4358, %v4358
    %v4361 = vmul.f32 %v4359, %v4359
    %v4362 = vsel %vm211, %v4360, 0.0
    %4363 = vadd.xlane.f32.xlu0 %v4362
    %v4364 = vpop.xlane.xlu0 %4363
    %v4365 = vsel %vm211, %v4361, 0.0
    %4366 = vadd.xlane.f32.xlu0 %v4365
    %v4367 = vpop.xlane.xlu0 %4366
    %v4368 = vmul.f32 %v4364, %v2137
    %v4369 = vmul.f32 %v4367, %v2137
    %v4370 = vadd.f32 %v4368, 1e-05
    %v4371 = vadd.f32 %v4369, 1e-05
    %v4372 = vrsqrt.pop %v4370
    %v4373 = vrsqrt.pop %v4371
    %v4374 = vmul.f32 %v4358, %v4372
    %v4375 = vmul.f32 %v4359, %v4373
    %v4377 = vlaneseq
    %v4378 = vshrl.u32 %v4377, 7
    %v4379 = vsub.s32 0, %v4378
    %v4380 = vrot.slane %v4347, %v4379
    %v4382 = vmul.f32 %v4374, %v4380
    %v4383 = vmul.f32 %v4375, %v4380
    %v4385 = vlaneseq
    %v4386 = vshrl.u32 %v4385, 7
    %v4387 = vsub.s32 0, %v4386
    %v4388 = vrot.slane %v4349, %v4387
    %v4390 = vadd.f32 %v4382, %v4388
    %v4391 = vadd.f32 %v4383, %v4388
    %s4392 = scalar_lea.vmem [#allocation5], 32
    %v4393 = vld [vmem:[%s4392] sm:$0xff]
    %v4394 = vld [vmem:[%s4392 + $0x8] sm:$0xff]
    %v4395 = vld [vmem:[%s4392 + $0x10] sm:$0xff]
    %v4396 = vld [vmem:[%s4392 + $0x18] sm:$0xff]
    %s4397 = scalar_lea.vmem %s15, 1
    %v4398 = vld [vmem:[%s4397] sm:$0x1]
    %v4400 = vlaneseq
    %v4401 = vshrl.u32 %v4400, 7
    %v4402 = vsub.s32 0, %v4401
    %v4403 = vrot.slane %v4398, %v4402
    %v4406 = vsel %vm211, %v4390, 0
    %v4409 = vsel %vm211, %v4391, 0
    %4411 = vmatprep.subr.mxu0 0.0
    %4412 = vmatpush1.msra.mxu0 %v4393
    %4413 = vmatprep.subr.mxu0 0.0
    %4414 = vmatpush1.msra.mxu0 %v4394
    %4415 = vmatprep.subr.mxu0 0.0
    %4416 = vmatpush1.msra.mxu0 %v4395
    %4417 = vmatprep.subr.mxu0 0.0
    %4418 = vmatpush1.msra.mxu0 %v4396
    %4419 = vmatprep.subr.mxu0 0.0
    %4420 = vmatpush1.msra.mxu0 0.0
    %4421 = vmatprep.subr.mxu0 0.0
    %4422 = vmatpush1.msra.mxu0 0.0
    %4423 = vmatprep.subr.mxu0 0.0
    %4424 = vmatpush1.msra.mxu0 0.0
    %4425 = vmatprep.subr.mxu0 0.0
    %4426 = vmatpush1.msra.mxu0 0.0
    %4427 = vmatprep.subr.mxu0 0.0
    %4428 = vmatpush1.msra.mxu0 0.0
    %4429 = vmatprep.subr.mxu0 0.0
    %4430 = vmatpush1.msra.mxu0 0.0
    %4431 = vmatprep.subr.mxu0 0.0
    %4432 = vmatpush1.msra.mxu0 0.0
    %4433 = vmatprep.subr.mxu0 0.0
    %4434 = vmatpush1.msra.mxu0 0.0
    %4435 = vmatprep.subr.mxu0 0.0
    %4436 = vmatpush1.msra.mxu0 0.0
    %4437 = vmatprep.subr.mxu0 0.0
    %4438 = vmatpush1.msra.mxu0 0.0
    %4439 = vmatprep.subr.mxu0 0.0
    %4440 = vmatpush1.msra.mxu0 0.0
    %4441 = vmatprep.subr.mxu0 0.0
    %4442 = vmatpush1.msra.mxu0 0.0
    %4443 = vmatprep.subr.mxu0 0.0
    %4444 = vmatpush1.msra.mxu0 0.0
    %4445 = vmatprep.subr.mxu0 0.0
    %4446 = vmatpush1.msra.mxu0 0.0
    %4447 = vmatprep.subr.mxu0 0.0
    %4448 = vmatpush1.msra.mxu0 0.0
    %4449 = vmatprep.subr.mxu0 0.0
    %4450 = vmatpush1.msra.mxu0 0.0
    %4451 = vmatprep.subr.mxu0 0.0
    %4452 = vmatpush1.msra.mxu0 0.0
    %4453 = vmatprep.subr.mxu0 0.0
    %4454 = vmatpush1.msra.mxu0 0.0
    %4455 = vmatprep.subr.mxu0 0.0
    %4456 = vmatpush1.msra.mxu0 0.0
    %4457 = vmatprep.subr.mxu0 0.0
    %4458 = vmatpush1.msra.mxu0 0.0
    %4459 = vmatprep.subr.mxu0 0.0
    %4460 = vmatpush1.msra.mxu0 0.0
    %4461 = vmatprep.subr.mxu0 0.0
    %4462 = vmatpush1.msra.mxu0 0.0
    %4463 = vmatprep.subr.mxu0 0.0
    %4464 = vmatpush1.msra.mxu0 0.0
    %4465 = vmatprep.subr.mxu0 0.0
    %4466 = vmatpush1.msra.mxu0 0.0
    %4467 = vmatprep.subr.mxu0 0.0
    %4468 = vmatpush1.msra.mxu0 0.0
    %4469 = vmatprep.subr.mxu0 0.0
    %4470 = vmatpush1.msra.mxu0 0.0
    %4471 = vmatprep.subr.mxu0 0.0
    %4472 = vmatpush1.msra.mxu0 0.0
    %4473 = vmatprep.subr.mxu0 0.0
    %4474 = vmatpush1.msra.mxu0 0.0
    %4475 = vmatprep.mubr.f32.mxu0 0.0
    %4476 = vmatmul.mubr.f32.gmra.mrb[0].mxu0 %v4406
    %v4477 = vpop.f32.mrb[0].mxu0
    %v4478 = vadd.f32 %v4403, %v4477
    %v4479 = vpop.f32.mrb[0].mxu0
    %4480 = vmatprep.mubr.f32.mxu0 0.0
    %4481 = vmatmul.mubr.f32.gmra.mrb[0].mxu0 %v4409
    %v4482 = vpop.f32.mrb[0].mxu0
    %v4483 = vadd.f32 %v4403, %v4482
    %v4484 = vpop.f32.mrb[0].mxu0
    %4485 = vdwg.mxu0
    %v4486 = vmax.f32 %v4478, 0.0
    %v4487 = vmax.f32 %v4483, 0.0
    %s4488 = scalar_lea.vmem %s16, 64
    %v4489 = vld [vmem:[%s4488] sm:$0xff]
    %v4490 = vld [vmem:[%s4488 + $0x8] sm:$0xff]
    %v4491 = vld [vmem:[%s4488 + $0x10] sm:$0xff]
    %v4492 = vld [vmem:[%s4488 + $0x18] sm:$0xff]
    %v4493 = vld [vmem:[%s4488 + $0x20] sm:$0xff]
    %v4494 = vld [vmem:[%s4488 + $0x28] sm:$0xff]
    %v4495 = vld [vmem:[%s4488 + $0x30] sm:$0xff]
    %v4496 = vld [vmem:[%s4488 + $0x38] sm:$0xff]
    %s4497 = scalar_lea.vmem %s17, 1
    %v4498 = vld [vmem:[%s4497] sm:$0x1]
    %v4500 = vlaneseq
    %v4501 = vshrl.u32 %v4500, 7
    %v4502 = vsub.s32 0, %v4501
    %v4503 = vrot.slane %v4498, %v4502
    %v4506 = vsel %vm2283, %v4486, 0
    %v4509 = vsel %vm2283, %v4487, 0
    %4511 = vmatprep.subr.mxu0 0.0
    %4512 = vmatpush1.msra.mxu0 %v4489
    %4513 = vmatprep.subr.mxu0 0.0
    %4514 = vmatpush1.msra.mxu0 %v4490
    %4515 = vmatprep.subr.mxu0 0.0
    %4516 = vmatpush1.msra.mxu0 %v4491
    %4517 = vmatprep.subr.mxu0 0.0
    %4518 = vmatpush1.msra.mxu0 %v4492
    %4519 = vmatprep.subr.mxu0 0.0
    %4520 = vmatpush1.msra.mxu0 %v4493
    %4521 = vmatprep.subr.mxu0 0.0
    %4522 = vmatpush1.msra.mxu0 %v4494
    %4523 = vmatprep.subr.mxu0 0.0
    %4524 = vmatpush1.msra.mxu0 %v4495
    %4525 = vmatprep.subr.mxu0 0.0
    %4526 = vmatpush1.msra.mxu0 %v4496
    %4527 = vmatprep.subr.mxu0 0.0
    %4528 = vmatpush1.msra.mxu0 0.0
    %4529 = vmatprep.subr.mxu0 0.0
    %4530 = vmatpush1.msra.mxu0 0.0
    %4531 = vmatprep.subr.mxu0 0.0
    %4532 = vmatpush1.msra.mxu0 0.0
    %4533 = vmatprep.subr.mxu0 0.0
    %4534 = vmatpush1.msra.mxu0 0.0
    %4535 = vmatprep.subr.mxu0 0.0
    %4536 = vmatpush1.msra.mxu0 0.0
    %4537 = vmatprep.subr.mxu0 0.0
    %4538 = vmatpush1.msra.mxu0 0.0
    %4539 = vmatprep.subr.mxu0 0.0
    %4540 = vmatpush1.msra.mxu0 0.0
    %4541 = vmatprep.subr.mxu0 0.0
    %4542 = vmatpush1.msra.mxu0 0.0
    %4543 = vmatprep.subr.mxu0 0.0
    %4544 = vmatpush1.msra.mxu0 0.0
    %4545 = vmatprep.subr.mxu0 0.0
    %4546 = vmatpush1.msra.mxu0 0.0
    %4547 = vmatprep.subr.mxu0 0.0
    %4548 = vmatpush1.msra.mxu0 0.0
    %4549 = vmatprep.subr.mxu0 0.0
    %4550 = vmatpush1.msra.mxu0 0.0
    %4551 = vmatprep.subr.mxu0 0.0
    %4552 = vmatpush1.msra.mxu0 0.0
    %4553 = vmatprep.subr.mxu0 0.0
    %4554 = vmatpush1.msra.mxu0 0.0
    %4555 = vmatprep.subr.mxu0 0.0
    %4556 = vmatpush1.msra.mxu0 0.0
    %4557 = vmatprep.subr.mxu0 0.0
    %4558 = vmatpush1.msra.mxu0 0.0
    %4559 = vmatprep.subr.mxu0 0.0
    %4560 = vmatpush1.msra.mxu0 0.0
    %4561 = vmatprep.subr.mxu0 0.0
    %4562 = vmatpush1.msra.mxu0 0.0
    %4563 = vmatprep.subr.mxu0 0.0
    %4564 = vmatpush1.msra.mxu0 0.0
    %4565 = vmatprep.subr.mxu0 0.0
    %4566 = vmatpush1.msra.mxu0 0.0
    %4567 = vmatprep.subr.mxu0 0.0
    %4568 = vmatpush1.msra.mxu0 0.0
    %4569 = vmatprep.subr.mxu0 0.0
    %4570 = vmatpush1.msra.mxu0 0.0
    %4571 = vmatprep.subr.mxu0 0.0
    %4572 = vmatpush1.msra.mxu0 0.0
    %4573 = vmatprep.subr.mxu0 0.0
    %4574 = vmatpush1.msra.mxu0 0.0
    %4575 = vmatprep.mubr.f32.mxu0 0.0
    %4576 = vmatmul.mubr.f32.gmra.mrb[0].mxu0 %v4506
    %v4577 = vpop.f32.mrb[0].mxu0
    %v4578 = vadd.f32 %v4503, %v4577
    %v4579 = vpop.f32.mrb[0].mxu0
    %4580 = vmatprep.mubr.f32.mxu0 0.0
    %4581 = vmatmul.mubr.f32.gmra.mrb[0].mxu0 %v4509
    %v4582 = vpop.f32.mrb[0].mxu0
    %v4583 = vadd.f32 %v4503, %v4582
    %v4584 = vpop.f32.mrb[0].mxu0
    %4585 = vdwg.mxu0
    %v4586 = vadd.f32 %v4390, %v4578
    %v4587 = vadd.f32 %v4391, %v4583
    %s4588 = scalar_lea.vmem %s18, 1
    %v4589 = vld [vmem:[%s4588] sm:$0x1]
    %s4590 = scalar_lea.vmem %s19, 1
    %v4591 = vld [vmem:[%s4590] sm:$0x1]
    %v4592 = vsel %vm211, %v4586, 0.0
    %4593 = vadd.xlane.f32.xlu0 %v4592
    %v4594 = vpop.xlane.xlu0 %4593
    %v4595 = vsel %vm211, %v4587, 0.0
    %4596 = vadd.xlane.f32.xlu0 %v4595
    %v4597 = vpop.xlane.xlu0 %4596
    %v4598 = vmul.f32 %v4594, %v2137
    %v4599 = vmul.f32 %v4597, %v2137
    %v4600 = vsub.f32 %v4586, %v4598
    %v4601 = vsub.f32 %v4587, %v4599
    %v4602 = vmul.f32 %v4600, %v4600
    %v4603 = vmul.f32 %v4601, %v4601
    %v4604 = vsel %vm211, %v4602, 0.0
    %4605 = vadd.xlane.f32.xlu0 %v4604
    %v4606 = vpop.xlane.xlu0 %4605
    %v4607 = vsel %vm211, %v4603, 0.0
    %4608 = vadd.xlane.f32.xlu0 %v4607
    %v4609 = vpop.xlane.xlu0 %4608
    %v4610 = vmul.f32 %v4606, %v2137
    %v4611 = vmul.f32 %v4609, %v2137
    %v4612 = vadd.f32 %v4610, 1e-05
    %v4613 = vadd.f32 %v4611, 1e-05
    %v4614 = vrsqrt.pop %v4612
    %v4615 = vrsqrt.pop %v4613
    %v4616 = vmul.f32 %v4600, %v4614
    %v4617 = vmul.f32 %v4601, %v4615
    %v4619 = vlaneseq
    %v4620 = vshrl.u32 %v4619, 7
    %v4621 = vsub.s32 0, %v4620
    %v4622 = vrot.slane %v4589, %v4621
    %v4624 = vmul.f32 %v4616, %v4622
    %v4625 = vmul.f32 %v4617, %v4622
    %v4627 = vlaneseq
    %v4628 = vshrl.u32 %v4627, 7
    %v4629 = vsub.s32 0, %v4628
    %v4630 = vrot.slane %v4591, %v4629
    %v4632 = vadd.f32 %v4624, %v4630
    %v4633 = vadd.f32 %v4625, %v4630
    %v4634 = vsel %vm211, %v4632, 0.0
    %v4635 = vrot.slane %v4634, 4
    %v4636 = vadd.f32 %v4634, %v4635
    %v4637 = vrot.slane %v4636, 2
    %v4638 = vadd.f32 %v4636, %v4637
    %v4639 = vrot.slane %v4638, 1
    %v4640 = vadd.f32 %v4638, %v4639
    %v4641 = vsel %vm211, %v4633, 0.0
    %v4642 = vrot.slane %v4641, 4
    %v4643 = vadd.f32 %v4641, %v4642
    %v4644 = vrot.slane %v4643, 2
    %v4645 = vadd.f32 %v4643, %v4644
    %v4646 = vrot.slane %v4645, 1
    %v4647 = vadd.f32 %v4645, %v4646
    %v4648 = vrcp.pop 8.0
    %v4649 = vmul.f32 %v4640, %v4648
    %v4650 = vmul.f32 %v4647, %v4648
    %v4651 = vld [vmem:[%s20] sm:$0xff]
    %v4652 = vld [vmem:[%s20 + $0x8] sm:$0xff]
    %v4653 = vld [vmem:[%s20 + $0x10] sm:$0xff]
    %v4654 = vld [vmem:[%s20 + $0x18] sm:$0xff]
    %v4655 = vld [vmem:[%s21] sm:$0x1]
    %v4657 = vlaneseq
    %v4658 = vshrl.u32 %v4657, 7
    %v4659 = vsub.s32 0, %v4658
    %v4660 = vrot.slane %v4655, %v4659
    %vm4664 = vcmask 1041409
    %v4665 = vsel %vm4664, %v4650, %v4649
    %v4666 = vsel %vm211, %v4665, 0
    %4668 = vmatprep.subr.mxu0 0.0
    %4669 = vmatpush1.msra.mxu0 %v4651
    %4670 = vmatprep.subr.mxu0 0.0
    %4671 = vmatpush1.msra.mxu0 %v4652
    %4672 = vmatprep.subr.mxu0 0.0
    %4673 = vmatpush1.msra.mxu0 %v4653
    %4674 = vmatprep.subr.mxu0 0.0
    %4675 = vmatpush1.msra.mxu0 %v4654
    %4676 = vmatprep.subr.mxu0 0.0
    %4677 = vmatpush1.msra.mxu0 0.0
    %4678 = vmatprep.subr.mxu0 0.0
    %4679 = vmatpush1.msra.mxu0 0.0
    %4680 = vmatprep.subr.mxu0 0.0
    %4681 = vmatpush1.msra.mxu0 0.0
    %4682 = vmatprep.subr.mxu0 0.0
    %4683 = vmatpush1.msra.mxu0 0.0
    %4684 = vmatprep.subr.mxu0 0.0
    %4685 = vmatpush1.msra.mxu0 0.0
    %4686 = vmatprep.subr.mxu0 0.0
    %4687 = vmatpush1.msra.mxu0 0.0
    %4688 = vmatprep.subr.mxu0 0.0
    %4689 = vmatpush1.msra.mxu0 0.0
    %4690 = vmatprep.subr.mxu0 0.0
    %4691 = vmatpush1.msra.mxu0 0.0
    %4692 = vmatprep.subr.mxu0 0.0
    %4693 = vmatpush1.msra.mxu0 0.0
    %4694 = vmatprep.subr.mxu0 0.0
    %4695 = vmatpush1.msra.mxu0 0.0
    %4696 = vmatprep.subr.mxu0 0.0
    %4697 = vmatpush1.msra.mxu0 0.0
    %4698 = vmatprep.subr.mxu0 0.0
    %4699 = vmatpush1.msra.mxu0 0.0
    %4700 = vmatprep.subr.mxu0 0.0
    %4701 = vmatpush1.msra.mxu0 0.0
    %4702 = vmatprep.subr.mxu0 0.0
    %4703 = vmatpush1.msra.mxu0 0.0
    %4704 = vmatprep.subr.mxu0 0.0
    %4705 = vmatpush1.msra.mxu0 0.0
    %4706 = vmatprep.subr.mxu0 0.0
    %4707 = vmatpush1.msra.mxu0 0.0
    %4708 = vmatprep.subr.mxu0 0.0
    %4709 = vmatpush1.msra.mxu0 0.0
    %4710 = vmatprep.subr.mxu0 0.0
    %4711 = vmatpush1.msra.mxu0 0.0
    %4712 = vmatprep.subr.mxu0 0.0
    %4713 = vmatpush1.msra.mxu0 0.0
    %4714 = vmatprep.subr.mxu0 0.0
    %4715 = vmatpush1.msra.mxu0 0.0
    %4716 = vmatprep.subr.mxu0 0.0
    %4717 = vmatpush1.msra.mxu0 0.0
    %4718 = vmatprep.subr.mxu0 0.0
    %4719 = vmatpush1.msra.mxu0 0.0
    %4720 = vmatprep.subr.mxu0 0.0
    %4721 = vmatpush1.msra.mxu0 0.0
    %4722 = vmatprep.subr.mxu0 0.0
    %4723 = vmatpush1.msra.mxu0 0.0
    %4724 = vmatprep.subr.mxu0 0.0
    %4725 = vmatpush1.msra.mxu0 0.0
    %4726 = vmatprep.subr.mxu0 0.0
    %4727 = vmatpush1.msra.mxu0 0.0
    %4728 = vmatprep.subr.mxu0 0.0
    %4729 = vmatpush1.msra.mxu0 0.0
    %4730 = vmatprep.subr.mxu0 0.0
    %4731 = vmatpush1.msra.mxu0 0.0
    %4732 = vmatprep.mubr.f32.mxu0 0.0
    %4733 = vmatmul.mubr.f32.gmra.mrb[0].mxu0 %v4666
    %v4734 = vpop.f32.mrb[0].mxu0
    %v4735 = vadd.f32 %v4660, %v4734
    %v4736 = vpop.f32.mrb[0].mxu0
    %4737 = vdwg.mxu0
    %vm4738 = vcmask 17408
    %4739 = vst.msk [vmem:[#allocation7] sm:$0x3] %vm4738, %v4735
    // Predicated region
    $region98: #{tpu_custom_call.1} parent=1 // pred_check
      _
    $region99: #{tpu_custom_call.1} parent=1 // pred_check_branch
      %4741 = sbr.rel (0) target = $region101
    $region100: #{tpu_custom_call.1} parent=1 // pred_region
      %s4743 = ssub.s32 32, 32
      %4744 = vsyncadd [#allocation4], %s4743
      %s4746 = sshll.u32 [#allocation7], 4
      %s4747 = int_to_ptr.vmem [resolvable:$true] %s4746
      %4749 = dma.vmem_to_hbm [thread:$0]  %s4747, 32, %s22, [#allocation4]
    $region101: #{tpu_custom_call.1} parent=1 // pred_fallthru
      _
    // Predicated region
    $region102: #{tpu_custom_call.1} parent=1 // pred_check
      _
    $region103: #{tpu_custom_call.1} parent=1 // pred_check_branch
      %4751 = sbr.rel (0) target = $region105
    $region104: #{tpu_custom_call.1} parent=1 // pred_region
      %4752 = dma.done [#allocation4], 32
    $region105: #{tpu_custom_call.1} parent=1 // pred_fallthru
      _
    %4753 = vsyncpa [#allocation3], 1
    %4754 = vsyncpa [#allocation6], 1
    %4755 = vsyncpa [#allocation4], 1

</llo_original>
